<compile_context>
chip_gen: v5e
topology: v5e:2x2
jax: 0.10.0
libtpu: 0.0.40
codegen_flags: <defaults>
</compile_context>

<pallas_src>
import jax
import jax.numpy as jnp
from jax.experimental import pallas as pl
from jax.experimental.pallas import tpu as pltpu

EPS = 1e-5  # BatchNorm2d default eps


# ----------------------------------------------------------------------------
# helpers
# ----------------------------------------------------------------------------
def round_up(x, m):
    return ((x + m - 1) // m) * m


def _pick_tile(dim, prefs):
    for t in prefs:
        if t <= dim and dim % t == 0:
            return t
    return dim  # full dim is always a legal block size


def _pad_c(v, c_pad, value=0.0):
    return jnp.pad(v, (0, c_pad - v.shape[0]), constant_values=value)


# ----------------------------------------------------------------------------
# Pallas kernel 1: tiled matmul (bf16 x bf16 -> f32) with bias / tanh epilogue
# ----------------------------------------------------------------------------
def _make_matmul_kernel(post):
    def kernel(a_ref, w_ref, b_ref, o_ref, acc_ref):
        @pl.when(pl.program_id(2) == 0)
        def _():
            acc_ref[...] = jnp.zeros_like(acc_ref)

        acc_ref[...] += jnp.dot(a_ref[...], w_ref[...],
                                preferred_element_type=jnp.float32)

        @pl.when(pl.program_id(2) == pl.num_programs(2) - 1)
        def _():
            y = acc_ref[...] + b_ref[...]
            if post == "tanh":
                y = jnp.tanh(y)
            o_ref[...] = y

    return kernel


def fused_matmul(A, Wm, bias, post):
    """A: (M, Kd) bf16, Wm: (Kd, C_pad) bf16, bias: (1, C_pad) f32 -> (M, C_pad) f32."""
    M, Kd = A.shape
    C_pad = Wm.shape[1]
    TM = _pick_tile(M, (256, 128, 64, 32, 16, 8))
    TN = 256 if C_pad % 256 == 0 else 128
    TK = _pick_tile(Kd, (512, 256, 128))
    grid = (M // TM, C_pad // TN, Kd // TK)

    flops = 2 * M * Kd * C_pad
    bytes_accessed = A.size * 2 + Wm.size * 2 + M * C_pad * 4

    return pl.pallas_call(
        _make_matmul_kernel(post),
        out_shape=jax.ShapeDtypeStruct((M, C_pad), jnp.float32),
        grid_spec=pltpu.PrefetchScalarGridSpec(
            num_scalar_prefetch=0,
            grid=grid,
            in_specs=[
                pl.BlockSpec((TM, TK), lambda i, j, k: (i, k)),
                pl.BlockSpec((TK, TN), lambda i, j, k: (k, j)),
                pl.BlockSpec((1, TN), lambda i, j, k: (0, j)),
            ],
            out_specs=pl.BlockSpec((TM, TN), lambda i, j, k: (i, j)),
            scratch_shapes=[pltpu.VMEM((TM, TN), jnp.float32)],
        ),
        compiler_params=pltpu.CompilerParams(
            dimension_semantics=("parallel", "parallel", "arbitrary")),
        cost_estimate=pl.CostEstimate(
            flops=flops,
            transcendentals=(M * C_pad) if post == "tanh" else 0,
            bytes_accessed=bytes_accessed),
    )(A, Wm, bias)


# ----------------------------------------------------------------------------
# Pallas kernel 2: per-channel sum / sum-of-squares reduction over the M axis
# ----------------------------------------------------------------------------
def _bn_stats_kernel(y_ref, s_ref, s2_ref):
    @pl.when(pl.program_id(0) == 0)
    def _():
        s_ref[...] = jnp.zeros_like(s_ref)
        s2_ref[...] = jnp.zeros_like(s2_ref)

    y = y_ref[...]
    s_ref[...] += jnp.broadcast_to(jnp.sum(y, axis=0, keepdims=True), s_ref.shape)
    s2_ref[...] += jnp.broadcast_to(jnp.sum(y * y, axis=0, keepdims=True), s2_ref.shape)


def bn_stats(Y):
    M, C = Y.shape
    TM = _pick_tile(M, (512, 256, 128, 64, 32, 16, 8))
    return pl.pallas_call(
        _bn_stats_kernel,
        out_shape=(jax.ShapeDtypeStruct((8, C), jnp.float32),
                   jax.ShapeDtypeStruct((8, C), jnp.float32)),
        grid_spec=pltpu.PrefetchScalarGridSpec(
            num_scalar_prefetch=0,
            grid=(M // TM,),
            in_specs=[pl.BlockSpec((TM, C), lambda i: (i, 0))],
            out_specs=[pl.BlockSpec((8, C), lambda i: (0, 0)),
                       pl.BlockSpec((8, C), lambda i: (0, 0))],
        ),
        compiler_params=pltpu.CompilerParams(dimension_semantics=("arbitrary",)),
    )(Y)


def bn_finalize(s, s2, count, gamma_pad, beta_pad):
    mean = s / count
    var = jnp.maximum(s2 / count - mean * mean, 0.0)   # biased (training-mode) variance
    inv = jax.lax.rsqrt(var + EPS)
    scale = gamma_pad * inv
    shift = beta_pad - mean * scale
    return scale.reshape(1, -1), shift.reshape(1, -1)


# ----------------------------------------------------------------------------
# Pallas kernel 3: tiled elementwise y * scale + shift (BN apply)
# ----------------------------------------------------------------------------
def _scale_shift_kernel(y_ref, s_ref, b_ref, o_ref):
    o_ref[...] = y_ref[...] * s_ref[...] + b_ref[...]


def scale_shift(Y, scale, shift):
    M, C = Y.shape
    TM = _pick_tile(M, (512, 256, 128, 64, 32, 16, 8))
    return pl.pallas_call(
        _scale_shift_kernel,
        out_shape=jax.ShapeDtypeStruct((M, C), jnp.float32),
        grid_spec=pltpu.PrefetchScalarGridSpec(
            num_scalar_prefetch=0,
            grid=(M // TM,),
            in_specs=[pl.BlockSpec((TM, C), lambda i: (i, 0)),
                      pl.BlockSpec((1, C), lambda i: (0, 0)),
                      pl.BlockSpec((1, C), lambda i: (0, 0))],
            out_specs=pl.BlockSpec((TM, C), lambda i: (i, 0)),
        ),
        compiler_params=pltpu.CompilerParams(dimension_semantics=("parallel",)),
    )(Y, scale, shift)


# ----------------------------------------------------------------------------
# JAX glue: NHWC patch extraction (data movement only)
# ----------------------------------------------------------------------------
def im2col_down(x):
    """x: (N,H,W,C) -> ((N*OH*OW, 16*C), OH, OW) for Conv2d(k=4, s=2, p=1)."""
    N, H, W, C = x.shape
    OH, OW = H // 2, W // 2
    xp = jnp.pad(x, ((0, 0), (1, 1), (1, 1), (0, 0)))
    cols = [xp[:, kh:kh + 2 * OH:2, kw:kw + 2 * OW:2, :]
            for kh in range(4) for kw in range(4)]
    A = jnp.stack(cols, axis=3).reshape(N * OH * OW, 16 * C)
    return A, OH, OW


def im2col_up_phase(x, p, q):
    """Phase (p,q) of ConvTranspose2d(k=4,s=2,p=1): 2x2-tap patches of x -> (N*H*W, 4*C)."""
    N, H, W, C = x.shape
    xp = jnp.pad(x, ((0, 0), (1 - p, p), (1 - q, q), (0, 0)))
    cols = [xp[:, dh:dh + H, dw:dw + W, :] for dh in (0, 1) for dw in (0, 1)]
    return jnp.stack(cols, axis=3).reshape(N * H * W, 4 * C)


# ----------------------------------------------------------------------------
# layer wrappers (NHWC in / NHWC out)
# ----------------------------------------------------------------------------
def conv_down(x, layer, act_in):
    if act_in == "leaky":                      # applied once per element (not 16x)
        x = jnp.where(x >= 0, x, 0.2 * x)
    N, H, W, _ = x.shape
    A, OH, OW = im2col_down(x)
    Y = fused_matmul(A.astype(jnp.bfloat16), layer["wm"], layer["bias"], layer["post_mm"])
    if layer["bn"]:
        s8, s28 = bn_stats(Y)
        scale, shift = bn_finalize(s8[0], s28[0], N * OH * OW,
                                   layer["gamma"], layer["beta"])
        Y = scale_shift(Y, scale, shift)
    return Y.reshape(N, OH, OW, layer["c_pad"])[..., :layer["cout"]]


def conv_up(x, layer):
    x = jnp.maximum(x, 0.0)                    # ReLU always precedes the upconv
    N, H, W, _ = x.shape
    c_pad, cout = layer["c_pad"], layer["cout"]
    ys = []
    for ph in range(4):
        p, q = divmod(ph, 2)
        A = im2col_up_phase(x, p, q).astype(jnp.bfloat16)
        ys.append(fused_matmul(A, layer["wm"][ph], layer["bias"], layer["post_mm"]))
    if layer["bn"]:
        stats = [bn_stats(Y) for Y in ys]
        s = sum(st[0][0] for st in stats)
        s2 = sum(st[1][0] for st in stats)
        scale, shift = bn_finalize(s, s2, 4 * N * H * W, layer["gamma"], layer["beta"])
        ys = [scale_shift(Y, scale, shift) for Y in ys]
    # interleave the 4 phases: out[:, 2a+p, 2b+q, :] = Y_pq[:, a, b, :]
    ph_t = jnp.stack(ys, axis=0).reshape(2, 2, N, H, W, c_pad)
    out = ph_t.transpose(2, 3, 0, 4, 1, 5).reshape(N, 2 * H, 2 * W, c_pad)
    return out[..., :cout]


# ----------------------------------------------------------------------------
# parameter construction (weight re-layout / padding / bf16 cast hoisted here)
# ----------------------------------------------------------------------------
_TAP = {0: (3, 1), 1: (2, 0)}   # output-phase -> (kernel taps for patch idx 0, 1)


def make_down_layer(key, in_c, out_c, bn):
    kw, kg, kb = jax.random.split(key, 3)
    w = jax.random.normal(kw, (out_c, in_c, 4, 4), jnp.float32) * 0.05   # OIHW
    c_pad = max(128, round_up(out_c, 128))
    wm = w.transpose(2, 3, 1, 0).reshape(16 * in_c, out_c)               # rows: (kh,kw,c)
    wm = jnp.pad(wm, ((0, 0), (0, c_pad - out_c))).astype(jnp.bfloat16)
    layer = {"wm": wm, "cout": out_c, "c_pad": c_pad, "bn": bn, "post_mm": "none",
             "bias": jnp.zeros((1, c_pad), jnp.float32),
             "w_raw": w, "b_raw": None}
    if bn:
        g = 1.0 + 0.1 * jax.random.normal(kg, (out_c,), jnp.float32)
        b = 0.1 * jax.random.normal(kb, (out_c,), jnp.float32)
        layer.update(gamma=_pad_c(g, c_pad, 1.0), beta=_pad_c(b, c_pad, 0.0),
                     gamma_raw=g, beta_raw=b)
    return layer


def make_up_layer(key, in_c, out_c, bn, use_bias, tanh):
    kw, kb, kg, kbt = jax.random.split(key, 4)
    wt = jax.random.normal(kw, (in_c, out_c, 4, 4), jnp.float32) * 0.05  # IOHW (torch)
    c_pad = max(128, round_up(out_c, 128))
    phase_w = []
    for p in (0, 1):
        for q in (0, 1):
            sub = jnp.take(jnp.take(wt, jnp.array(_TAP[p]), axis=2),
                           jnp.array(_TAP[q]), axis=3)                    # (Cin,Cout,2,2)
            wm = sub.transpose(2, 3, 0, 1).reshape(4 * in_c, out_c)       # rows: (dh,dw,c)
            phase_w.append(jnp.pad(wm, ((0, 0), (0, c_pad - out_c))).astype(jnp.bfloat16))
    b_raw = (jax.random.normal(kb, (out_c,), jnp.float32) * 0.05) if use_bias else None
    bias = _pad_c(b_raw, c_pad) if use_bias else jnp.zeros((c_pad,), jnp.float32)
    layer = {"wm": phase_w, "cout": out_c, "c_pad": c_pad, "bn": bn,
             "post_mm": "tanh" if tanh else "none",
             "bias": bias.reshape(1, c_pad),
             "wt_raw": wt, "b_raw": b_raw}
    if bn:
        g = 1.0 + 0.1 * jax.random.normal(kg, (out_c,), jnp.float32)
        b = 0.1 * jax.random.normal(kbt, (out_c,), jnp.float32)
        layer.update(gamma=_pad_c(g, c_pad, 1.0), beta=_pad_c(b, c_pad, 0.0),
                     gamma_raw=g, beta_raw=b)
    return layer


def init_block(key, outer_nc, inner_nc, input_nc=None, sub=None,
               outermost=False, innermost=False):
    if input_nc is None:
        input_nc = outer_nc
    kd, ku = jax.random.split(key)
    down = make_down_layer(kd, input_nc, inner_nc,
                           bn=(not outermost and not innermost))
    up_in = inner_nc if innermost else inner_nc * 2
    up = make_up_layer(ku, up_in, outer_nc, bn=(not outermost),
                       use_bias=outermost, tanh=outermost)
    return {"outermost": outermost, "innermost": innermost,
            "sub": sub, "down": down, "up": up}


def init_unet(key, input_nc, output_nc, num_downs, ngf=64):
    keys = jax.random.split(key, num_downs + 1)
    blk = init_block(keys[0], ngf * 8, ngf * 8, innermost=True)
    ki = 1
    for _ in range(num_downs - 5):
        blk = init_block(keys[ki], ngf * 8, ngf * 8, sub=blk); ki += 1
    blk = init_block(keys[ki], ngf * 4, ngf * 8, sub=blk); ki += 1
    blk = init_block(keys[ki], ngf * 2, ngf * 4, sub=blk); ki += 1
    blk = init_block(keys[ki], ngf, ngf * 2, sub=blk); ki += 1
    blk = init_block(keys[ki], output_nc, ngf, input_nc=input_nc, sub=blk, outermost=True)
    return blk


# ----------------------------------------------------------------------------
# UNet forward (NHWC internally, NCHW at the boundary to match PyTorch)
# ----------------------------------------------------------------------------
def block_forward(p, x):
    y = conv_down(x, p["down"], act_in=None if p["outermost"] else "leaky")
    mid = y if p["innermost"] else block_forward(p["sub"], y)
    z = conv_up(mid, p["up"])
    if p["outermost"]:
        return z
    return jnp.concatenate([x, z], axis=-1)        # skip connection (channels-last)


def unet_forward(params, x_nchw):
    x = jnp.transpose(x_nchw, (0, 2, 3, 1))
    y = block_forward(params, x)
    return jnp.transpose(y, (0, 3, 1, 2))


# ----------------------------------------------------------------------------
# plain-JAX reference (NCHW; inputs/weights rounded to bf16 to mirror MXU input dtype)
# ----------------------------------------------------------------------------
def _bf16(v):
    return v.astype(jnp.bfloat16).astype(jnp.float32)


def ref_conv_down(x, w):
    return jax.lax.conv_general_dilated(
        _bf16(x), _bf16(w), (2, 2), ((1, 1), (1, 1)),
        dimension_numbers=("NCHW", "OIHW", "NCHW"),
        precision=jax.lax.Precision.HIGHEST)


def ref_conv_up(x, wt, b):
    w = jnp.flip(wt, (2, 3)).transpose(1, 0, 2, 3)
    y = jax.lax.conv_general_dilated(
        _bf16(x), _bf16(w), (1, 1), ((2, 2), (2, 2)), lhs_dilation=(2, 2),
        dimension_numbers=("NCHW", "OIHW", "NCHW"),
        precision=jax.lax.Precision.HIGHEST)
    if b is not None:
        y = y + b.reshape(1, -1, 1, 1)
    return y


def ref_bn(y, g, b):
    mean = jnp.mean(y, axis=(0, 2, 3), keepdims=True)
    var = jnp.mean((y - mean) ** 2, axis=(0, 2, 3), keepdims=True)
    return (y - mean) * jax.lax.rsqrt(var + EPS) * g.reshape(1, -1, 1, 1) + b.reshape(1, -1, 1, 1)


def ref_block(p, x):
    d, u = p["down"], p["up"]
    xin = x if p["outermost"] else jnp.where(x >= 0, x, 0.2 * x)
    y = ref_conv_down(xin, d["w_raw"])
    if d["bn"]:
        y = ref_bn(y, d["gamma_raw"], d["beta_raw"])
    mid = y if p["innermost"] else ref_block(p["sub"], y)
    z = ref_conv_up(jnp.maximum(mid, 0.0), u["wt_raw"], u["b_raw"])
    if u["bn"]:
        z = ref_bn(z, u["gamma_raw"], u["beta_raw"])
    else:
        z = jnp.tanh(z)                       # outermost
    if p["outermost"]:
        return z
    return jnp.concatenate([x, z], axis=1)


# ----------------------------------------------------------------------------
if __name__ == "__main__":
    key = jax.random.PRNGKey(0)
    kp, kx = jax.random.split(key)

    # Small config: UnetGenerator(input_nc=4, output_nc=3, num_downs=5, ngf=8)
    input_nc, output_nc, num_downs, ngf = 4, 3, 5, 8
    N, H = 2, 32                                # spatial divisible by 2**num_downs

    params = init_unet(kp, input_nc, output_nc, num_downs, ngf)
    x = jax.random.normal(kx, (N, input_nc, H, H), jnp.float32)

    fwd = jax.jit(lambda inp: unet_forward(params, inp))
    out = jax.block_until_ready(fwd(x))

    assert out.shape == (N, output_nc, H, H), out.shape
    assert bool(jnp.all(jnp.isfinite(out)))
    assert bool(jnp.all(jnp.abs(out) <= 1.0 + 1e-6))   # tanh output range

    # Cross-check against the plain-JAX/XLA reference of the same forward pass.
    ref = jax.block_until_ready(jax.jit(lambda inp: ref_block(params, inp))(x))
    err = float(jnp.max(jnp.abs(out - ref)))
    assert err < 2e-2, f"mismatch vs reference: max abs err = {err}"

    print("KERNEL_OK")
</pallas_src>

<mosaic_0001>
module attributes {stable_mosaic.version = 11 : i64} {
  func.func @kernel(%arg0: i32, %arg1: i32, %arg2: i32, %arg3: memref<256x64xbf16, #tpu.memory_space<vmem>>, %arg4: memref<64x128xbf16, #tpu.memory_space<vmem>>, %arg5: memref<1x128xf32, #tpu.memory_space<vmem>>, %arg6: memref<256x128xf32, #tpu.memory_space<vmem>>, %arg7: memref<256x128xf32, #tpu.memory_space<vmem>>) attributes {dimension_semantics = [#tpu.dimension_semantics<parallel>, #tpu.dimension_semantics<parallel>, #tpu.dimension_semantics<arbitrary>], iteration_bounds = array<i64: 2, 1, 1>, scalar_prefetch = 0 : i64, scratch_operands = 1 : i64, tpu.core_type = #tpu.core_type<tc>, window_params = [{transform_indices = @transform_0, window_bounds = array<i64: 256, 64>}, {transform_indices = @transform_1, window_bounds = array<i64: 64, 128>}, {transform_indices = @transform_2, window_bounds = array<i64: 1, 128>}, {transform_indices = @transform_3, window_bounds = array<i64: 256, 128>}]} {
    %c0_i32 = arith.constant 0 : i32
    %0 = arith.cmpi eq, %arg2, %c0_i32 : i32
    %1 = arith.extui %0 : i1 to i32
    %c0_i32_0 = arith.constant 0 : i32
    %2 = arith.cmpi ne, %1, %c0_i32_0 : i32
    scf.if %2 {
      %cst_10 = arith.constant 0.000000e+00 : f32
      %12 = vector.broadcast %cst_10 : f32 to vector<256x128xf32>
      %c0_11 = arith.constant 0 : index
      %c0_12 = arith.constant 0 : index
      %13 = vector.load %arg7[%c0_11, %c0_12] : memref<256x128xf32, #tpu.memory_space<vmem>>, vector<256x128xf32>
      tpu.vector_store %arg7[%c0_11, %c0_12], %12 {strides = array<i32>} : memref<256x128xf32, #tpu.memory_space<vmem>>, vector<256x128xf32>,
    } else {
    }
    %c0 = arith.constant 0 : index
    %c0_1 = arith.constant 0 : index
    %3 = vector.load %arg7[%c0, %c0_1] : memref<256x128xf32, #tpu.memory_space<vmem>>, vector<256x128xf32>
    %c0_2 = arith.constant 0 : index
    %c0_3 = arith.constant 0 : index
    %4 = vector.load %arg3[%c0_2, %c0_3] : memref<256x64xbf16, #tpu.memory_space<vmem>>, vector<256x64xbf16>
    %c0_4 = arith.constant 0 : index
    %c0_5 = arith.constant 0 : index
    %5 = vector.load %arg4[%c0_4, %c0_5] : memref<64x128xbf16, #tpu.memory_space<vmem>>, vector<64x128xbf16>
    %cst = arith.constant dense<0.000000e+00> : vector<256x128xf32>
    %6 = tpu.matmul %4, %5, %cst {dimension_numbers = #tpu.dot_dimension_numbers<[1], [0], [0], [1], [0, 0, 1, 1], [], []>} : vector<256x64xbf16>, vector<64x128xbf16>, vector<256x128xf32> -> vector<256x128xf32>
    %7 = arith.addf %3, %6 : vector<256x128xf32>
    %c0_6 = arith.constant 0 : index
    %c0_7 = arith.constant 0 : index
    %8 = vector.load %arg7[%c0_6, %c0_7] : memref<256x128xf32, #tpu.memory_space<vmem>>, vector<256x128xf32>
    tpu.vector_store %arg7[%c0_6, %c0_7], %7 {strides = array<i32>} : memref<256x128xf32, #tpu.memory_space<vmem>>, vector<256x128xf32>,
    %c0_i32_8 = arith.constant 0 : i32
    %9 = arith.cmpi eq, %arg2, %c0_i32_8 : i32
    %10 = arith.extui %9 : i1 to i32
    %c0_i32_9 = arith.constant 0 : i32
    %11 = arith.cmpi ne, %10, %c0_i32_9 : i32
    scf.if %11 {
      %c0_10 = arith.constant 0 : index
      %c0_11 = arith.constant 0 : index
      %12 = vector.load %arg7[%c0_10, %c0_11] : memref<256x128xf32, #tpu.memory_space<vmem>>, vector<256x128xf32>
      %c0_12 = arith.constant 0 : index
      %c0_13 = arith.constant 0 : index
      %13 = vector.load %arg5[%c0_12, %c0_13] : memref<1x128xf32, #tpu.memory_space<vmem>>, vector<1x128xf32>
      %14 = vector.broadcast %13 : vector<1x128xf32> to vector<256x128xf32>
      %15 = arith.addf %12, %14 : vector<256x128xf32>
      %c0_14 = arith.constant 0 : index
      %c0_15 = arith.constant 0 : index
      %16 = vector.load %arg6[%c0_14, %c0_15] : memref<256x128xf32, #tpu.memory_space<vmem>>, vector<256x128xf32>
      tpu.vector_store %arg6[%c0_14, %c0_15], %15 {strides = array<i32>} : memref<256x128xf32, #tpu.memory_space<vmem>>, vector<256x128xf32>,
    } else {
    }
    return
  }
  func.func @transform_0(%arg0: i32, %arg1: i32, %arg2: i32) -> (i32, i32) {
    %c0_i32 = arith.constant 0 : i32
    return %arg0, %arg2 : i32, i32
  }
  func.func @transform_1(%arg0: i32, %arg1: i32, %arg2: i32) -> (i32, i32) {
    %c0_i32 = arith.constant 0 : i32
    return %arg2, %arg1 : i32, i32
  }
  func.func @transform_2(%arg0: i32, %arg1: i32, %arg2: i32) -> (i32, i32) {
    %c0_i32 = arith.constant 0 : i32
    %c0_i32_0 = arith.constant 0 : i32
    return %c0_i32, %arg1 : i32, i32
  }
  func.func @transform_3(%arg0: i32, %arg1: i32, %arg2: i32) -> (i32, i32) {
    %c0_i32 = arith.constant 0 : i32
    return %arg0, %arg1 : i32, i32
  }
}

module attributes {stable_mosaic.version = 11 : i64} {
  func.func @kernel(%arg0: i32, %arg1: i32, %arg2: i32, %arg3: memref<128x128xbf16, #tpu.memory_space<vmem>>, %arg4: memref<128x128xbf16, #tpu.memory_space<vmem>>, %arg5: memref<1x128xf32, #tpu.memory_space<vmem>>, %arg6: memref<128x128xf32, #tpu.memory_space<vmem>>, %arg7: memref<128x128xf32, #tpu.memory_space<vmem>>) attributes {dimension_semantics = [#tpu.dimension_semantics<parallel>, #tpu.dimension_semantics<parallel>, #tpu.dimension_semantics<arbitrary>], iteration_bounds = array<i64: 1, 1, 1>, scalar_prefetch = 0 : i64, scratch_operands = 1 : i64, tpu.core_type = #tpu.core_type<tc>, window_params = [{transform_indices = @transform_0, window_bounds = array<i64: 128, 128>}, {transform_indices = @transform_1, window_bounds = array<i64: 128, 128>}, {transform_indices = @transform_2, window_bounds = array<i64: 1, 128>}, {transform_indices = @transform_3, window_bounds = array<i64: 128, 128>}]} {
    %c0_i32 = arith.constant 0 : i32
    %0 = arith.cmpi eq, %arg2, %c0_i32 : i32
    %1 = arith.extui %0 : i1 to i32
    %c0_i32_0 = arith.constant 0 : i32
    %2 = arith.cmpi ne, %1, %c0_i32_0 : i32
    scf.if %2 {
      %cst_10 = arith.constant 0.000000e+00 : f32
      %12 = vector.broadcast %cst_10 : f32 to vector<128x128xf32>
      %c0_11 = arith.constant 0 : index
      %c0_12 = arith.constant 0 : index
      %13 = vector.load %arg7[%c0_11, %c0_12] : memref<128x128xf32, #tpu.memory_space<vmem>>, vector<128x128xf32>
      tpu.vector_store %arg7[%c0_11, %c0_12], %12 {strides = array<i32>} : memref<128x128xf32, #tpu.memory_space<vmem>>, vector<128x128xf32>,
    } else {
    }
    %c0 = arith.constant 0 : index
    %c0_1 = arith.constant 0 : index
    %3 = vector.load %arg7[%c0, %c0_1] : memref<128x128xf32, #tpu.memory_space<vmem>>, vector<128x128xf32>
    %c0_2 = arith.constant 0 : index
    %c0_3 = arith.constant 0 : index
    %4 = vector.load %arg3[%c0_2, %c0_3] : memref<128x128xbf16, #tpu.memory_space<vmem>>, vector<128x128xbf16>
    %c0_4 = arith.constant 0 : index
    %c0_5 = arith.constant 0 : index
    %5 = vector.load %arg4[%c0_4, %c0_5] : memref<128x128xbf16, #tpu.memory_space<vmem>>, vector<128x128xbf16>
    %cst = arith.constant dense<0.000000e+00> : vector<128x128xf32>
    %6 = tpu.matmul %4, %5, %cst {dimension_numbers = #tpu.dot_dimension_numbers<[1], [0], [0], [1], [0, 0, 1, 1], [], []>} : vector<128x128xbf16>, vector<128x128xbf16>, vector<128x128xf32> -> vector<128x128xf32>
    %7 = arith.addf %3, %6 : vector<128x128xf32>
    %c0_6 = arith.constant 0 : index
    %c0_7 = arith.constant 0 : index
    %8 = vector.load %arg7[%c0_6, %c0_7] : memref<128x128xf32, #tpu.memory_space<vmem>>, vector<128x128xf32>
    tpu.vector_store %arg7[%c0_6, %c0_7], %7 {strides = array<i32>} : memref<128x128xf32, #tpu.memory_space<vmem>>, vector<128x128xf32>,
    %c0_i32_8 = arith.constant 0 : i32
    %9 = arith.cmpi eq, %arg2, %c0_i32_8 : i32
    %10 = arith.extui %9 : i1 to i32
    %c0_i32_9 = arith.constant 0 : i32
    %11 = arith.cmpi ne, %10, %c0_i32_9 : i32
    scf.if %11 {
      %c0_10 = arith.constant 0 : index
      %c0_11 = arith.constant 0 : index
      %12 = vector.load %arg7[%c0_10, %c0_11] : memref<128x128xf32, #tpu.memory_space<vmem>>, vector<128x128xf32>
      %c0_12 = arith.constant 0 : index
      %c0_13 = arith.constant 0 : index
      %13 = vector.load %arg5[%c0_12, %c0_13] : memref<1x128xf32, #tpu.memory_space<vmem>>, vector<1x128xf32>
      %14 = vector.broadcast %13 : vector<1x128xf32> to vector<128x128xf32>
      %15 = arith.addf %12, %14 : vector<128x128xf32>
      %c0_14 = arith.constant 0 : index
      %c0_15 = arith.constant 0 : index
      %16 = vector.load %arg6[%c0_14, %c0_15] : memref<128x128xf32, #tpu.memory_space<vmem>>, vector<128x128xf32>
      tpu.vector_store %arg6[%c0_14, %c0_15], %15 {strides = array<i32>} : memref<128x128xf32, #tpu.memory_space<vmem>>, vector<128x128xf32>,
    } else {
    }
    return
  }
  func.func @transform_0(%arg0: i32, %arg1: i32, %arg2: i32) -> (i32, i32) {
    %c0_i32 = arith.constant 0 : i32
    return %arg0, %arg2 : i32, i32
  }
  func.func @transform_1(%arg0: i32, %arg1: i32, %arg2: i32) -> (i32, i32) {
    %c0_i32 = arith.constant 0 : i32
    return %arg2, %arg1 : i32, i32
  }
  func.func @transform_2(%arg0: i32, %arg1: i32, %arg2: i32) -> (i32, i32) {
    %c0_i32 = arith.constant 0 : i32
    %c0_i32_0 = arith.constant 0 : i32
    return %c0_i32, %arg1 : i32, i32
  }
  func.func @transform_3(%arg0: i32, %arg1: i32, %arg2: i32) -> (i32, i32) {
    %c0_i32 = arith.constant 0 : i32
    return %arg0, %arg1 : i32, i32
  }
}

module attributes {stable_mosaic.version = 11 : i64} {
  func.func @_bn_stats_kernel(%arg0: i32, %arg1: memref<128x128xf32, #tpu.memory_space<vmem>>, %arg2: memref<8x128xf32, #tpu.memory_space<vmem>>, %arg3: memref<8x128xf32, #tpu.memory_space<vmem>>) attributes {dimension_semantics = [#tpu.dimension_semantics<arbitrary>], iteration_bounds = array<i64: 1>, scalar_prefetch = 0 : i64, scratch_operands = 0 : i64, tpu.core_type = #tpu.core_type<tc>, window_params = [{transform_indices = @transform_0, window_bounds = array<i64: 128, 128>}, {pipeline_mode = #tpu.pipeline_mode<synchronous>, transform_indices = @transform_1, window_bounds = array<i64: 8, 128>}, {pipeline_mode = #tpu.pipeline_mode<synchronous>, transform_indices = @transform_2, window_bounds = array<i64: 8, 128>}]} {
    %c0_i32 = arith.constant 0 : i32
    %0 = arith.cmpi eq, %arg0, %c0_i32 : i32
    %1 = arith.extui %0 : i1 to i32
    %c0_i32_0 = arith.constant 0 : i32
    %2 = arith.cmpi ne, %1, %c0_i32_0 : i32
    scf.if %2 {
      %cst_11 = arith.constant 0.000000e+00 : f32
      %19 = vector.broadcast %cst_11 : f32 to vector<8x128xf32>
      %c0_12 = arith.constant 0 : index
      %c0_13 = arith.constant 0 : index
      %20 = vector.load %arg2[%c0_12, %c0_13] : memref<8x128xf32, #tpu.memory_space<vmem>>, vector<8x128xf32>
      tpu.vector_store %arg2[%c0_12, %c0_13], %19 {strides = array<i32>} : memref<8x128xf32, #tpu.memory_space<vmem>>, vector<8x128xf32>,
      %cst_14 = arith.constant 0.000000e+00 : f32
      %21 = vector.broadcast %cst_14 : f32 to vector<8x128xf32>
      %c0_15 = arith.constant 0 : index
      %c0_16 = arith.constant 0 : index
      %22 = vector.load %arg3[%c0_15, %c0_16] : memref<8x128xf32, #tpu.memory_space<vmem>>, vector<8x128xf32>
      tpu.vector_store %arg3[%c0_15, %c0_16], %21 {strides = array<i32>} : memref<8x128xf32, #tpu.memory_space<vmem>>, vector<8x128xf32>,
    } else {
    }
    %c0 = arith.constant 0 : index
    %c0_1 = arith.constant 0 : index
    %3 = vector.load %arg1[%c0, %c0_1] : memref<128x128xf32, #tpu.memory_space<vmem>>, vector<128x128xf32>
    %c0_2 = arith.constant 0 : index
    %c0_3 = arith.constant 0 : index
    %4 = vector.load %arg2[%c0_2, %c0_3] : memref<8x128xf32, #tpu.memory_space<vmem>>, vector<8x128xf32>
    %cst = arith.constant dense<0.000000e+00> : vector<128xf32>
    %5 = vector.multi_reduction <add>, %3, %cst [0] : vector<128x128xf32> to vector<128xf32>
    %6 = vector.shape_cast %5 : vector<128xf32> to vector<1x128xf32>
    %7 = vector.shape_cast %6 : vector<1x128xf32> to vector<1x128xf32>
    %8 = vector.broadcast %7 : vector<1x128xf32> to vector<8x128xf32>
    %9 = arith.addf %4, %8 : vector<8x128xf32>
    %c0_4 = arith.constant 0 : index
    %c0_5 = arith.constant 0 : index
    %10 = vector.load %arg2[%c0_4, %c0_5] : memref<8x128xf32, #tpu.memory_space<vmem>>, vector<8x128xf32>
    tpu.vector_store %arg2[%c0_4, %c0_5], %9 {strides = array<i32>} : memref<8x128xf32, #tpu.memory_space<vmem>>, vector<8x128xf32>,
    %c0_6 = arith.constant 0 : index
    %c0_7 = arith.constant 0 : index
    %11 = vector.load %arg3[%c0_6, %c0_7] : memref<8x128xf32, #tpu.memory_space<vmem>>, vector<8x128xf32>
    %12 = arith.mulf %3, %3 : vector<128x128xf32>
    %cst_8 = arith.constant dense<0.000000e+00> : vector<128xf32>
    %13 = vector.multi_reduction <add>, %12, %cst_8 [0] : vector<128x128xf32> to vector<128xf32>
    %14 = vector.shape_cast %13 : vector<128xf32> to vector<1x128xf32>
    %15 = vector.shape_cast %14 : vector<1x128xf32> to vector<1x128xf32>
    %16 = vector.broadcast %15 : vector<1x128xf32> to vector<8x128xf32>
    %17 = arith.addf %11, %16 : vector<8x128xf32>
    %c0_9 = arith.constant 0 : index
    %c0_10 = arith.constant 0 : index
    %18 = vector.load %arg3[%c0_9, %c0_10] : memref<8x128xf32, #tpu.memory_space<vmem>>, vector<8x128xf32>
    tpu.vector_store %arg3[%c0_9, %c0_10], %17 {strides = array<i32>} : memref<8x128xf32, #tpu.memory_space<vmem>>, vector<8x128xf32>,
    return
  }
  func.func @transform_0(%arg0: i32) -> (i32, i32) {
    %c0_i32 = arith.constant 0 : i32
    %c0_i32_0 = arith.constant 0 : i32
    return %arg0, %c0_i32 : i32, i32
  }
  func.func @transform_1(%arg0: i32) -> (i32, i32) {
    %c0_i32 = arith.constant 0 : i32
    %c0_i32_0 = arith.constant 0 : i32
    %c0_i32_1 = arith.constant 0 : i32
    return %c0_i32, %c0_i32_0 : i32, i32
  }
  func.func @transform_2(%arg0: i32) -> (i32, i32) {
    %c0_i32 = arith.constant 0 : i32
    %c0_i32_0 = arith.constant 0 : i32
    %c0_i32_1 = arith.constant 0 : i32
    return %c0_i32, %c0_i32_0 : i32, i32
  }
}

module attributes {stable_mosaic.version = 11 : i64} {
  func.func @_scale_shift_kernel(%arg0: i32, %arg1: memref<128x128xf32, #tpu.memory_space<vmem>>, %arg2: memref<1x128xf32, #tpu.memory_space<vmem>>, %arg3: memref<1x128xf32, #tpu.memory_space<vmem>>, %arg4: memref<128x128xf32, #tpu.memory_space<vmem>>) attributes {dimension_semantics = [#tpu.dimension_semantics<parallel>], iteration_bounds = array<i64: 1>, scalar_prefetch = 0 : i64, scratch_operands = 0 : i64, tpu.core_type = #tpu.core_type<tc>, window_params = [{transform_indices = @transform_0, window_bounds = array<i64: 128, 128>}, {pipeline_mode = #tpu.pipeline_mode<synchronous>, transform_indices = @transform_1, window_bounds = array<i64: 1, 128>}, {pipeline_mode = #tpu.pipeline_mode<synchronous>, transform_indices = @transform_2, window_bounds = array<i64: 1, 128>}, {transform_indices = @transform_3, window_bounds = array<i64: 128, 128>}]} {
    %c0 = arith.constant 0 : index
    %c0_0 = arith.constant 0 : index
    %0 = vector.load %arg1[%c0, %c0_0] : memref<128x128xf32, #tpu.memory_space<vmem>>, vector<128x128xf32>
    %c0_1 = arith.constant 0 : index
    %c0_2 = arith.constant 0 : index
    %1 = vector.load %arg2[%c0_1, %c0_2] : memref<1x128xf32, #tpu.memory_space<vmem>>, vector<1x128xf32>
    %2 = vector.broadcast %1 : vector<1x128xf32> to vector<128x128xf32>
    %3 = arith.mulf %0, %2 : vector<128x128xf32>
    %c0_3 = arith.constant 0 : index
    %c0_4 = arith.constant 0 : index
    %4 = vector.load %arg3[%c0_3, %c0_4] : memref<1x128xf32, #tpu.memory_space<vmem>>, vector<1x128xf32>
    %5 = vector.broadcast %4 : vector<1x128xf32> to vector<128x128xf32>
    %6 = arith.addf %3, %5 : vector<128x128xf32>
    %c0_5 = arith.constant 0 : index
    %c0_6 = arith.constant 0 : index
    %7 = vector.load %arg4[%c0_5, %c0_6] : memref<128x128xf32, #tpu.memory_space<vmem>>, vector<128x128xf32>
    tpu.vector_store %arg4[%c0_5, %c0_6], %6 {strides = array<i32>} : memref<128x128xf32, #tpu.memory_space<vmem>>, vector<128x128xf32>,
    return
  }
  func.func @transform_0(%arg0: i32) -> (i32, i32) {
    %c0_i32 = arith.constant 0 : i32
    %c0_i32_0 = arith.constant 0 : i32
    return %arg0, %c0_i32 : i32, i32
  }
  func.func @transform_1(%arg0: i32) -> (i32, i32) {
    %c0_i32 = arith.constant 0 : i32
    %c0_i32_0 = arith.constant 0 : i32
    %c0_i32_1 = arith.constant 0 : i32
    return %c0_i32, %c0_i32_0 : i32, i32
  }
  func.func @transform_2(%arg0: i32) -> (i32, i32) {
    %c0_i32 = arith.constant 0 : i32
    %c0_i32_0 = arith.constant 0 : i32
    %c0_i32_1 = arith.constant 0 : i32
    return %c0_i32, %c0_i32_0 : i32, i32
  }
  func.func @transform_3(%arg0: i32) -> (i32, i32) {
    %c0_i32 = arith.constant 0 : i32
    %c0_i32_0 = arith.constant 0 : i32
    return %arg0, %c0_i32 : i32, i32
  }
}

module attributes {stable_mosaic.version = 11 : i64} {
  func.func @_bn_stats_kernel(%arg0: i32, %arg1: memref<32x128xf32, #tpu.memory_space<vmem>>, %arg2: memref<8x128xf32, #tpu.memory_space<vmem>>, %arg3: memref<8x128xf32, #tpu.memory_space<vmem>>) attributes {dimension_semantics = [#tpu.dimension_semantics<arbitrary>], iteration_bounds = array<i64: 1>, scalar_prefetch = 0 : i64, scratch_operands = 0 : i64, tpu.core_type = #tpu.core_type<tc>, window_params = [{transform_indices = @transform_0, window_bounds = array<i64: 32, 128>}, {pipeline_mode = #tpu.pipeline_mode<synchronous>, transform_indices = @transform_1, window_bounds = array<i64: 8, 128>}, {pipeline_mode = #tpu.pipeline_mode<synchronous>, transform_indices = @transform_2, window_bounds = array<i64: 8, 128>}]} {
    %c0_i32 = arith.constant 0 : i32
    %0 = arith.cmpi eq, %arg0, %c0_i32 : i32
    %1 = arith.extui %0 : i1 to i32
    %c0_i32_0 = arith.constant 0 : i32
    %2 = arith.cmpi ne, %1, %c0_i32_0 : i32
    scf.if %2 {
      %cst_11 = arith.constant 0.000000e+00 : f32
      %19 = vector.broadcast %cst_11 : f32 to vector<8x128xf32>
      %c0_12 = arith.constant 0 : index
      %c0_13 = arith.constant 0 : index
      %20 = vector.load %arg2[%c0_12, %c0_13] : memref<8x128xf32, #tpu.memory_space<vmem>>, vector<8x128xf32>
      tpu.vector_store %arg2[%c0_12, %c0_13], %19 {strides = array<i32>} : memref<8x128xf32, #tpu.memory_space<vmem>>, vector<8x128xf32>,
      %cst_14 = arith.constant 0.000000e+00 : f32
      %21 = vector.broadcast %cst_14 : f32 to vector<8x128xf32>
      %c0_15 = arith.constant 0 : index
      %c0_16 = arith.constant 0 : index
      %22 = vector.load %arg3[%c0_15, %c0_16] : memref<8x128xf32, #tpu.memory_space<vmem>>, vector<8x128xf32>
      tpu.vector_store %arg3[%c0_15, %c0_16], %21 {strides = array<i32>} : memref<8x128xf32, #tpu.memory_space<vmem>>, vector<8x128xf32>,
    } else {
    }
    %c0 = arith.constant 0 : index
    %c0_1 = arith.constant 0 : index
    %3 = vector.load %arg1[%c0, %c0_1] : memref<32x128xf32, #tpu.memory_space<vmem>>, vector<32x128xf32>
    %c0_2 = arith.constant 0 : index
    %c0_3 = arith.constant 0 : index
    %4 = vector.load %arg2[%c0_2, %c0_3] : memref<8x128xf32, #tpu.memory_space<vmem>>, vector<8x128xf32>
    %cst = arith.constant dense<0.000000e+00> : vector<128xf32>
    %5 = vector.multi_reduction <add>, %3, %cst [0] : vector<32x128xf32> to vector<128xf32>
    %6 = vector.shape_cast %5 : vector<128xf32> to vector<1x128xf32>
    %7 = vector.shape_cast %6 : vector<1x128xf32> to vector<1x128xf32>
    %8 = vector.broadcast %7 : vector<1x128xf32> to vector<8x128xf32>
    %9 = arith.addf %4, %8 : vector<8x128xf32>
    %c0_4 = arith.constant 0 : index
    %c0_5 = arith.constant 0 : index
    %10 = vector.load %arg2[%c0_4, %c0_5] : memref<8x128xf32, #tpu.memory_space<vmem>>, vector<8x128xf32>
    tpu.vector_store %arg2[%c0_4, %c0_5], %9 {strides = array<i32>} : memref<8x128xf32, #tpu.memory_space<vmem>>, vector<8x128xf32>,
    %c0_6 = arith.constant 0 : index
    %c0_7 = arith.constant 0 : index
    %11 = vector.load %arg3[%c0_6, %c0_7] : memref<8x128xf32, #tpu.memory_space<vmem>>, vector<8x128xf32>
    %12 = arith.mulf %3, %3 : vector<32x128xf32>
    %cst_8 = arith.constant dense<0.000000e+00> : vector<128xf32>
    %13 = vector.multi_reduction <add>, %12, %cst_8 [0] : vector<32x128xf32> to vector<128xf32>
    %14 = vector.shape_cast %13 : vector<128xf32> to vector<1x128xf32>
    %15 = vector.shape_cast %14 : vector<1x128xf32> to vector<1x128xf32>
    %16 = vector.broadcast %15 : vector<1x128xf32> to vector<8x128xf32>
    %17 = arith.addf %11, %16 : vector<8x128xf32>
    %c0_9 = arith.constant 0 : index
    %c0_10 = arith.constant 0 : index
    %18 = vector.load %arg3[%c0_9, %c0_10] : memref<8x128xf32, #tpu.memory_space<vmem>>, vector<8x128xf32>
    tpu.vector_store %arg3[%c0_9, %c0_10], %17 {strides = array<i32>} : memref<8x128xf32, #tpu.memory_space<vmem>>, vector<8x128xf32>,
    return
  }
  func.func @transform_0(%arg0: i32) -> (i32, i32) {
    %c0_i32 = arith.constant 0 : i32
    %c0_i32_0 = arith.constant 0 : i32
    return %arg0, %c0_i32 : i32, i32
  }
  func.func @transform_1(%arg0: i32) -> (i32, i32) {
    %c0_i32 = arith.constant 0 : i32
    %c0_i32_0 = arith.constant 0 : i32
    %c0_i32_1 = arith.constant 0 : i32
    return %c0_i32, %c0_i32_0 : i32, i32
  }
  func.func @transform_2(%arg0: i32) -> (i32, i32) {
    %c0_i32 = arith.constant 0 : i32
    %c0_i32_0 = arith.constant 0 : i32
    %c0_i32_1 = arith.constant 0 : i32
    return %c0_i32, %c0_i32_0 : i32, i32
  }
}

module attributes {stable_mosaic.version = 11 : i64} {
  func.func @kernel(%arg0: i32, %arg1: i32, %arg2: i32, %arg3: memref<32x256xbf16, #tpu.memory_space<vmem>>, %arg4: memref<256x128xbf16, #tpu.memory_space<vmem>>, %arg5: memref<1x128xf32, #tpu.memory_space<vmem>>, %arg6: memref<32x128xf32, #tpu.memory_space<vmem>>, %arg7: memref<32x128xf32, #tpu.memory_space<vmem>>) attributes {dimension_semantics = [#tpu.dimension_semantics<parallel>, #tpu.dimension_semantics<parallel>, #tpu.dimension_semantics<arbitrary>], iteration_bounds = array<i64: 1, 1, 1>, scalar_prefetch = 0 : i64, scratch_operands = 1 : i64, tpu.core_type = #tpu.core_type<tc>, window_params = [{transform_indices = @transform_0, window_bounds = array<i64: 32, 256>}, {transform_indices = @transform_1, window_bounds = array<i64: 256, 128>}, {transform_indices = @transform_2, window_bounds = array<i64: 1, 128>}, {transform_indices = @transform_3, window_bounds = array<i64: 32, 128>}]} {
    %c0_i32 = arith.constant 0 : i32
    %0 = arith.cmpi eq, %arg2, %c0_i32 : i32
    %1 = arith.extui %0 : i1 to i32
    %c0_i32_0 = arith.constant 0 : i32
    %2 = arith.cmpi ne, %1, %c0_i32_0 : i32
    scf.if %2 {
      %cst_10 = arith.constant 0.000000e+00 : f32
      %12 = vector.broadcast %cst_10 : f32 to vector<32x128xf32>
      %c0_11 = arith.constant 0 : index
      %c0_12 = arith.constant 0 : index
      %13 = vector.load %arg7[%c0_11, %c0_12] : memref<32x128xf32, #tpu.memory_space<vmem>>, vector<32x128xf32>
      tpu.vector_store %arg7[%c0_11, %c0_12], %12 {strides = array<i32>} : memref<32x128xf32, #tpu.memory_space<vmem>>, vector<32x128xf32>,
    } else {
    }
    %c0 = arith.constant 0 : index
    %c0_1 = arith.constant 0 : index
    %3 = vector.load %arg7[%c0, %c0_1] : memref<32x128xf32, #tpu.memory_space<vmem>>, vector<32x128xf32>
    %c0_2 = arith.constant 0 : index
    %c0_3 = arith.constant 0 : index
    %4 = vector.load %arg3[%c0_2, %c0_3] : memref<32x256xbf16, #tpu.memory_space<vmem>>, vector<32x256xbf16>
    %c0_4 = arith.constant 0 : index
    %c0_5 = arith.constant 0 : index
    %5 = vector.load %arg4[%c0_4, %c0_5] : memref<256x128xbf16, #tpu.memory_space<vmem>>, vector<256x128xbf16>
    %cst = arith.constant dense<0.000000e+00> : vector<32x128xf32>
    %6 = tpu.matmul %4, %5, %cst {dimension_numbers = #tpu.dot_dimension_numbers<[1], [0], [0], [1], [0, 0, 1, 1], [], []>} : vector<32x256xbf16>, vector<256x128xbf16>, vector<32x128xf32> -> vector<32x128xf32>
    %7 = arith.addf %3, %6 : vector<32x128xf32>
    %c0_6 = arith.constant 0 : index
    %c0_7 = arith.constant 0 : index
    %8 = vector.load %arg7[%c0_6, %c0_7] : memref<32x128xf32, #tpu.memory_space<vmem>>, vector<32x128xf32>
    tpu.vector_store %arg7[%c0_6, %c0_7], %7 {strides = array<i32>} : memref<32x128xf32, #tpu.memory_space<vmem>>, vector<32x128xf32>,
    %c0_i32_8 = arith.constant 0 : i32
    %9 = arith.cmpi eq, %arg2, %c0_i32_8 : i32
    %10 = arith.extui %9 : i1 to i32
    %c0_i32_9 = arith.constant 0 : i32
    %11 = arith.cmpi ne, %10, %c0_i32_9 : i32
    scf.if %11 {
      %c0_10 = arith.constant 0 : index
      %c0_11 = arith.constant 0 : index
      %12 = vector.load %arg7[%c0_10, %c0_11] : memref<32x128xf32, #tpu.memory_space<vmem>>, vector<32x128xf32>
      %c0_12 = arith.constant 0 : index
      %c0_13 = arith.constant 0 : index
      %13 = vector.load %arg5[%c0_12, %c0_13] : memref<1x128xf32, #tpu.memory_space<vmem>>, vector<1x128xf32>
      %14 = vector.broadcast %13 : vector<1x128xf32> to vector<32x128xf32>
      %15 = arith.addf %12, %14 : vector<32x128xf32>
      %c0_14 = arith.constant 0 : index
      %c0_15 = arith.constant 0 : index
      %16 = vector.load %arg6[%c0_14, %c0_15] : memref<32x128xf32, #tpu.memory_space<vmem>>, vector<32x128xf32>
      tpu.vector_store %arg6[%c0_14, %c0_15], %15 {strides = array<i32>} : memref<32x128xf32, #tpu.memory_space<vmem>>, vector<32x128xf32>,
    } else {
    }
    return
  }
  func.func @transform_0(%arg0: i32, %arg1: i32, %arg2: i32) -> (i32, i32) {
    %c0_i32 = arith.constant 0 : i32
    return %arg0, %arg2 : i32, i32
  }
  func.func @transform_1(%arg0: i32, %arg1: i32, %arg2: i32) -> (i32, i32) {
    %c0_i32 = arith.constant 0 : i32
    return %arg2, %arg1 : i32, i32
  }
  func.func @transform_2(%arg0: i32, %arg1: i32, %arg2: i32) -> (i32, i32) {
    %c0_i32 = arith.constant 0 : i32
    %c0_i32_0 = arith.constant 0 : i32
    return %c0_i32, %arg1 : i32, i32
  }
  func.func @transform_3(%arg0: i32, %arg1: i32, %arg2: i32) -> (i32, i32) {
    %c0_i32 = arith.constant 0 : i32
    return %arg0, %arg1 : i32, i32
  }
}

module attributes {stable_mosaic.version = 11 : i64} {
  func.func @_scale_shift_kernel(%arg0: i32, %arg1: memref<32x128xf32, #tpu.memory_space<vmem>>, %arg2: memref<1x128xf32, #tpu.memory_space<vmem>>, %arg3: memref<1x128xf32, #tpu.memory_space<vmem>>, %arg4: memref<32x128xf32, #tpu.memory_space<vmem>>) attributes {dimension_semantics = [#tpu.dimension_semantics<parallel>], iteration_bounds = array<i64: 1>, scalar_prefetch = 0 : i64, scratch_operands = 0 : i64, tpu.core_type = #tpu.core_type<tc>, window_params = [{transform_indices = @transform_0, window_bounds = array<i64: 32, 128>}, {pipeline_mode = #tpu.pipeline_mode<synchronous>, transform_indices = @transform_1, window_bounds = array<i64: 1, 128>}, {pipeline_mode = #tpu.pipeline_mode<synchronous>, transform_indices = @transform_2, window_bounds = array<i64: 1, 128>}, {transform_indices = @transform_3, window_bounds = array<i64: 32, 128>}]} {
    %c0 = arith.constant 0 : index
    %c0_0 = arith.constant 0 : index
    %0 = vector.load %arg1[%c0, %c0_0] : memref<32x128xf32, #tpu.memory_space<vmem>>, vector<32x128xf32>
    %c0_1 = arith.constant 0 : index
    %c0_2 = arith.constant 0 : index
    %1 = vector.load %arg2[%c0_1, %c0_2] : memref<1x128xf32, #tpu.memory_space<vmem>>, vector<1x128xf32>
    %2 = vector.broadcast %1 : vector<1x128xf32> to vector<32x128xf32>
    %3 = arith.mulf %0, %2 : vector<32x128xf32>
    %c0_3 = arith.constant 0 : index
    %c0_4 = arith.constant 0 : index
    %4 = vector.load %arg3[%c0_3, %c0_4] : memref<1x128xf32, #tpu.memory_space<vmem>>, vector<1x128xf32>
    %5 = vector.broadcast %4 : vector<1x128xf32> to vector<32x128xf32>
    %6 = arith.addf %3, %5 : vector<32x128xf32>
    %c0_5 = arith.constant 0 : index
    %c0_6 = arith.constant 0 : index
    %7 = vector.load %arg4[%c0_5, %c0_6] : memref<32x128xf32, #tpu.memory_space<vmem>>, vector<32x128xf32>
    tpu.vector_store %arg4[%c0_5, %c0_6], %6 {strides = array<i32>} : memref<32x128xf32, #tpu.memory_space<vmem>>, vector<32x128xf32>,
    return
  }
  func.func @transform_0(%arg0: i32) -> (i32, i32) {
    %c0_i32 = arith.constant 0 : i32
    %c0_i32_0 = arith.constant 0 : i32
    return %arg0, %c0_i32 : i32, i32
  }
  func.func @transform_1(%arg0: i32) -> (i32, i32) {
    %c0_i32 = arith.constant 0 : i32
    %c0_i32_0 = arith.constant 0 : i32
    %c0_i32_1 = arith.constant 0 : i32
    return %c0_i32, %c0_i32_0 : i32, i32
  }
  func.func @transform_2(%arg0: i32) -> (i32, i32) {
    %c0_i32 = arith.constant 0 : i32
    %c0_i32_0 = arith.constant 0 : i32
    %c0_i32_1 = arith.constant 0 : i32
    return %c0_i32, %c0_i32_0 : i32, i32
  }
  func.func @transform_3(%arg0: i32) -> (i32, i32) {
    %c0_i32 = arith.constant 0 : i32
    %c0_i32_0 = arith.constant 0 : i32
    return %arg0, %c0_i32 : i32, i32
  }
}

module attributes {stable_mosaic.version = 11 : i64} {
  func.func @kernel(%arg0: i32, %arg1: i32, %arg2: i32, %arg3: memref<8x512xbf16, #tpu.memory_space<vmem>>, %arg4: memref<512x128xbf16, #tpu.memory_space<vmem>>, %arg5: memref<1x128xf32, #tpu.memory_space<vmem>>, %arg6: memref<8x128xf32, #tpu.memory_space<vmem>>, %arg7: memref<8x128xf32, #tpu.memory_space<vmem>>) attributes {dimension_semantics = [#tpu.dimension_semantics<parallel>, #tpu.dimension_semantics<parallel>, #tpu.dimension_semantics<arbitrary>], iteration_bounds = array<i64: 1, 1, 1>, scalar_prefetch = 0 : i64, scratch_operands = 1 : i64, tpu.core_type = #tpu.core_type<tc>, window_params = [{transform_indices = @transform_0, window_bounds = array<i64: 8, 512>}, {transform_indices = @transform_1, window_bounds = array<i64: 512, 128>}, {transform_indices = @transform_2, window_bounds = array<i64: 1, 128>}, {transform_indices = @transform_3, window_bounds = array<i64: 8, 128>}]} {
    %c0_i32 = arith.constant 0 : i32
    %0 = arith.cmpi eq, %arg2, %c0_i32 : i32
    %1 = arith.extui %0 : i1 to i32
    %c0_i32_0 = arith.constant 0 : i32
    %2 = arith.cmpi ne, %1, %c0_i32_0 : i32
    scf.if %2 {
      %cst_10 = arith.constant 0.000000e+00 : f32
      %12 = vector.broadcast %cst_10 : f32 to vector<8x128xf32>
      %c0_11 = arith.constant 0 : index
      %c0_12 = arith.constant 0 : index
      %13 = vector.load %arg7[%c0_11, %c0_12] : memref<8x128xf32, #tpu.memory_space<vmem>>, vector<8x128xf32>
      tpu.vector_store %arg7[%c0_11, %c0_12], %12 {strides = array<i32>} : memref<8x128xf32, #tpu.memory_space<vmem>>, vector<8x128xf32>,
    } else {
    }
    %c0 = arith.constant 0 : index
    %c0_1 = arith.constant 0 : index
    %3 = vector.load %arg7[%c0, %c0_1] : memref<8x128xf32, #tpu.memory_space<vmem>>, vector<8x128xf32>
    %c0_2 = arith.constant 0 : index
    %c0_3 = arith.constant 0 : index
    %4 = vector.load %arg3[%c0_2, %c0_3] : memref<8x512xbf16, #tpu.memory_space<vmem>>, vector<8x512xbf16>
    %c0_4 = arith.constant 0 : index
    %c0_5 = arith.constant 0 : index
    %5 = vector.load %arg4[%c0_4, %c0_5] : memref<512x128xbf16, #tpu.memory_space<vmem>>, vector<512x128xbf16>
    %cst = arith.constant dense<0.000000e+00> : vector<8x128xf32>
    %6 = tpu.matmul %4, %5, %cst {dimension_numbers = #tpu.dot_dimension_numbers<[1], [0], [0], [1], [0, 0, 1, 1], [], []>} : vector<8x512xbf16>, vector<512x128xbf16>, vector<8x128xf32> -> vector<8x128xf32>
    %7 = arith.addf %3, %6 : vector<8x128xf32>
    %c0_6 = arith.constant 0 : index
    %c0_7 = arith.constant 0 : index
    %8 = vector.load %arg7[%c0_6, %c0_7] : memref<8x128xf32, #tpu.memory_space<vmem>>, vector<8x128xf32>
    tpu.vector_store %arg7[%c0_6, %c0_7], %7 {strides = array<i32>} : memref<8x128xf32, #tpu.memory_space<vmem>>, vector<8x128xf32>,
    %c0_i32_8 = arith.constant 0 : i32
    %9 = arith.cmpi eq, %arg2, %c0_i32_8 : i32
    %10 = arith.extui %9 : i1 to i32
    %c0_i32_9 = arith.constant 0 : i32
    %11 = arith.cmpi ne, %10, %c0_i32_9 : i32
    scf.if %11 {
      %c0_10 = arith.constant 0 : index
      %c0_11 = arith.constant 0 : index
      %12 = vector.load %arg7[%c0_10, %c0_11] : memref<8x128xf32, #tpu.memory_space<vmem>>, vector<8x128xf32>
      %c0_12 = arith.constant 0 : index
      %c0_13 = arith.constant 0 : index
      %13 = vector.load %arg5[%c0_12, %c0_13] : memref<1x128xf32, #tpu.memory_space<vmem>>, vector<1x128xf32>
      %14 = vector.broadcast %13 : vector<1x128xf32> to vector<8x128xf32>
      %15 = arith.addf %12, %14 : vector<8x128xf32>
      %c0_14 = arith.constant 0 : index
      %c0_15 = arith.constant 0 : index
      %16 = vector.load %arg6[%c0_14, %c0_15] : memref<8x128xf32, #tpu.memory_space<vmem>>, vector<8x128xf32>
      tpu.vector_store %arg6[%c0_14, %c0_15], %15 {strides = array<i32>} : memref<8x128xf32, #tpu.memory_space<vmem>>, vector<8x128xf32>,
    } else {
    }
    return
  }
  func.func @transform_0(%arg0: i32, %arg1: i32, %arg2: i32) -> (i32, i32) {
    %c0_i32 = arith.constant 0 : i32
    return %arg0, %arg2 : i32, i32
  }
  func.func @transform_1(%arg0: i32, %arg1: i32, %arg2: i32) -> (i32, i32) {
    %c0_i32 = arith.constant 0 : i32
    return %arg2, %arg1 : i32, i32
  }
  func.func @transform_2(%arg0: i32, %arg1: i32, %arg2: i32) -> (i32, i32) {
    %c0_i32 = arith.constant 0 : i32
    %c0_i32_0 = arith.constant 0 : i32
    return %c0_i32, %arg1 : i32, i32
  }
  func.func @transform_3(%arg0: i32, %arg1: i32, %arg2: i32) -> (i32, i32) {
    %c0_i32 = arith.constant 0 : i32
    return %arg0, %arg1 : i32, i32
  }
}

module attributes {stable_mosaic.version = 11 : i64} {
  func.func @_bn_stats_kernel(%arg0: i32, %arg1: memref<8x128xf32, #tpu.memory_space<vmem>>, %arg2: memref<8x128xf32, #tpu.memory_space<vmem>>, %arg3: memref<8x128xf32, #tpu.memory_space<vmem>>) attributes {dimension_semantics = [#tpu.dimension_semantics<arbitrary>], iteration_bounds = array<i64: 1>, scalar_prefetch = 0 : i64, scratch_operands = 0 : i64, tpu.core_type = #tpu.core_type<tc>, window_params = [{transform_indices = @transform_0, window_bounds = array<i64: 8, 128>}, {pipeline_mode = #tpu.pipeline_mode<synchronous>, transform_indices = @transform_1, window_bounds = array<i64: 8, 128>}, {pipeline_mode = #tpu.pipeline_mode<synchronous>, transform_indices = @transform_2, window_bounds = array<i64: 8, 128>}]} {
    %c0_i32 = arith.constant 0 : i32
    %0 = arith.cmpi eq, %arg0, %c0_i32 : i32
    %1 = arith.extui %0 : i1 to i32
    %c0_i32_0 = arith.constant 0 : i32
    %2 = arith.cmpi ne, %1, %c0_i32_0 : i32
    scf.if %2 {
      %cst_11 = arith.constant 0.000000e+00 : f32
      %19 = vector.broadcast %cst_11 : f32 to vector<8x128xf32>
      %c0_12 = arith.constant 0 : index
      %c0_13 = arith.constant 0 : index
      %20 = vector.load %arg2[%c0_12, %c0_13] : memref<8x128xf32, #tpu.memory_space<vmem>>, vector<8x128xf32>
      tpu.vector_store %arg2[%c0_12, %c0_13], %19 {strides = array<i32>} : memref<8x128xf32, #tpu.memory_space<vmem>>, vector<8x128xf32>,
      %cst_14 = arith.constant 0.000000e+00 : f32
      %21 = vector.broadcast %cst_14 : f32 to vector<8x128xf32>
      %c0_15 = arith.constant 0 : index
      %c0_16 = arith.constant 0 : index
      %22 = vector.load %arg3[%c0_15, %c0_16] : memref<8x128xf32, #tpu.memory_space<vmem>>, vector<8x128xf32>
      tpu.vector_store %arg3[%c0_15, %c0_16], %21 {strides = array<i32>} : memref<8x128xf32, #tpu.memory_space<vmem>>, vector<8x128xf32>,
    } else {
    }
    %c0 = arith.constant 0 : index
    %c0_1 = arith.constant 0 : index
    %3 = vector.load %arg1[%c0, %c0_1] : memref<8x128xf32, #tpu.memory_space<vmem>>, vector<8x128xf32>
    %c0_2 = arith.constant 0 : index
    %c0_3 = arith.constant 0 : index
    %4 = vector.load %arg2[%c0_2, %c0_3] : memref<8x128xf32, #tpu.memory_space<vmem>>, vector<8x128xf32>
    %cst = arith.constant dense<0.000000e+00> : vector<128xf32>
    %5 = vector.multi_reduction <add>, %3, %cst [0] : vector<8x128xf32> to vector<128xf32>
    %6 = vector.shape_cast %5 : vector<128xf32> to vector<1x128xf32>
    %7 = vector.shape_cast %6 : vector<1x128xf32> to vector<1x128xf32>
    %8 = vector.broadcast %7 : vector<1x128xf32> to vector<8x128xf32>
    %9 = arith.addf %4, %8 : vector<8x128xf32>
    %c0_4 = arith.constant 0 : index
    %c0_5 = arith.constant 0 : index
    %10 = vector.load %arg2[%c0_4, %c0_5] : memref<8x128xf32, #tpu.memory_space<vmem>>, vector<8x128xf32>
    tpu.vector_store %arg2[%c0_4, %c0_5], %9 {strides = array<i32>} : memref<8x128xf32, #tpu.memory_space<vmem>>, vector<8x128xf32>,
    %c0_6 = arith.constant 0 : index
    %c0_7 = arith.constant 0 : index
    %11 = vector.load %arg3[%c0_6, %c0_7] : memref<8x128xf32, #tpu.memory_space<vmem>>, vector<8x128xf32>
    %12 = arith.mulf %3, %3 : vector<8x128xf32>
    %cst_8 = arith.constant dense<0.000000e+00> : vector<128xf32>
    %13 = vector.multi_reduction <add>, %12, %cst_8 [0] : vector<8x128xf32> to vector<128xf32>
    %14 = vector.shape_cast %13 : vector<128xf32> to vector<1x128xf32>
    %15 = vector.shape_cast %14 : vector<1x128xf32> to vector<1x128xf32>
    %16 = vector.broadcast %15 : vector<1x128xf32> to vector<8x128xf32>
    %17 = arith.addf %11, %16 : vector<8x128xf32>
    %c0_9 = arith.constant 0 : index
    %c0_10 = arith.constant 0 : index
    %18 = vector.load %arg3[%c0_9, %c0_10] : memref<8x128xf32, #tpu.memory_space<vmem>>, vector<8x128xf32>
    tpu.vector_store %arg3[%c0_9, %c0_10], %17 {strides = array<i32>} : memref<8x128xf32, #tpu.memory_space<vmem>>, vector<8x128xf32>,
    return
  }
  func.func @transform_0(%arg0: i32) -> (i32, i32) {
    %c0_i32 = arith.constant 0 : i32
    %c0_i32_0 = arith.constant 0 : i32
    return %arg0, %c0_i32 : i32, i32
  }
  func.func @transform_1(%arg0: i32) -> (i32, i32) {
    %c0_i32 = arith.constant 0 : i32
    %c0_i32_0 = arith.constant 0 : i32
    %c0_i32_1 = arith.constant 0 : i32
    return %c0_i32, %c0_i32_0 : i32, i32
  }
  func.func @transform_2(%arg0: i32) -> (i32, i32) {
    %c0_i32 = arith.constant 0 : i32
    %c0_i32_0 = arith.constant 0 : i32
    %c0_i32_1 = arith.constant 0 : i32
    return %c0_i32, %c0_i32_0 : i32, i32
  }
}

module attributes {stable_mosaic.version = 11 : i64} {
  func.func @_scale_shift_kernel(%arg0: i32, %arg1: memref<8x128xf32, #tpu.memory_space<vmem>>, %arg2: memref<1x128xf32, #tpu.memory_space<vmem>>, %arg3: memref<1x128xf32, #tpu.memory_space<vmem>>, %arg4: memref<8x128xf32, #tpu.memory_space<vmem>>) attributes {dimension_semantics = [#tpu.dimension_semantics<parallel>], iteration_bounds = array<i64: 1>, scalar_prefetch = 0 : i64, scratch_operands = 0 : i64, tpu.core_type = #tpu.core_type<tc>, window_params = [{transform_indices = @transform_0, window_bounds = array<i64: 8, 128>}, {pipeline_mode = #tpu.pipeline_mode<synchronous>, transform_indices = @transform_1, window_bounds = array<i64: 1, 128>}, {pipeline_mode = #tpu.pipeline_mode<synchronous>, transform_indices = @transform_2, window_bounds = array<i64: 1, 128>}, {transform_indices = @transform_3, window_bounds = array<i64: 8, 128>}]} {
    %c0 = arith.constant 0 : index
    %c0_0 = arith.constant 0 : index
    %0 = vector.load %arg1[%c0, %c0_0] : memref<8x128xf32, #tpu.memory_space<vmem>>, vector<8x128xf32>
    %c0_1 = arith.constant 0 : index
    %c0_2 = arith.constant 0 : index
    %1 = vector.load %arg2[%c0_1, %c0_2] : memref<1x128xf32, #tpu.memory_space<vmem>>, vector<1x128xf32>
    %2 = vector.broadcast %1 : vector<1x128xf32> to vector<8x128xf32>
    %3 = arith.mulf %0, %2 : vector<8x128xf32>
    %c0_3 = arith.constant 0 : index
    %c0_4 = arith.constant 0 : index
    %4 = vector.load %arg3[%c0_3, %c0_4] : memref<1x128xf32, #tpu.memory_space<vmem>>, vector<1x128xf32>
    %5 = vector.broadcast %4 : vector<1x128xf32> to vector<8x128xf32>
    %6 = arith.addf %3, %5 : vector<8x128xf32>
    %c0_5 = arith.constant 0 : index
    %c0_6 = arith.constant 0 : index
    %7 = vector.load %arg4[%c0_5, %c0_6] : memref<8x128xf32, #tpu.memory_space<vmem>>, vector<8x128xf32>
    tpu.vector_store %arg4[%c0_5, %c0_6], %6 {strides = array<i32>} : memref<8x128xf32, #tpu.memory_space<vmem>>, vector<8x128xf32>,
    return
  }
  func.func @transform_0(%arg0: i32) -> (i32, i32) {
    %c0_i32 = arith.constant 0 : i32
    %c0_i32_0 = arith.constant 0 : i32
    return %arg0, %c0_i32 : i32, i32
  }
  func.func @transform_1(%arg0: i32) -> (i32, i32) {
    %c0_i32 = arith.constant 0 : i32
    %c0_i32_0 = arith.constant 0 : i32
    %c0_i32_1 = arith.constant 0 : i32
    return %c0_i32, %c0_i32_0 : i32, i32
  }
  func.func @transform_2(%arg0: i32) -> (i32, i32) {
    %c0_i32 = arith.constant 0 : i32
    %c0_i32_0 = arith.constant 0 : i32
    %c0_i32_1 = arith.constant 0 : i32
    return %c0_i32, %c0_i32_0 : i32, i32
  }
  func.func @transform_3(%arg0: i32) -> (i32, i32) {
    %c0_i32 = arith.constant 0 : i32
    %c0_i32_0 = arith.constant 0 : i32
    return %arg0, %c0_i32 : i32, i32
  }
}

module attributes {stable_mosaic.version = 11 : i64} {
  func.func @kernel(%arg0: i32, %arg1: i32, %arg2: i32, %arg3: memref<2x512xbf16, #tpu.memory_space<vmem>>, %arg4: memref<512x128xbf16, #tpu.memory_space<vmem>>, %arg5: memref<1x128xf32, #tpu.memory_space<vmem>>, %arg6: memref<2x128xf32, #tpu.memory_space<vmem>>, %arg7: memref<2x128xf32, #tpu.memory_space<vmem>>) attributes {dimension_semantics = [#tpu.dimension_semantics<parallel>, #tpu.dimension_semantics<parallel>, #tpu.dimension_semantics<arbitrary>], iteration_bounds = array<i64: 1, 1, 2>, scalar_prefetch = 0 : i64, scratch_operands = 1 : i64, tpu.core_type = #tpu.core_type<tc>, window_params = [{transform_indices = @transform_0, window_bounds = array<i64: 2, 512>}, {transform_indices = @transform_1, window_bounds = array<i64: 512, 128>}, {transform_indices = @transform_2, window_bounds = array<i64: 1, 128>}, {transform_indices = @transform_3, window_bounds = array<i64: 2, 128>}]} {
    %c0_i32 = arith.constant 0 : i32
    %0 = arith.cmpi eq, %arg2, %c0_i32 : i32
    %1 = arith.extui %0 : i1 to i32
    %c0_i32_0 = arith.constant 0 : i32
    %2 = arith.cmpi ne, %1, %c0_i32_0 : i32
    scf.if %2 {
      %cst_9 = arith.constant 0.000000e+00 : f32
      %12 = vector.broadcast %cst_9 : f32 to vector<2x128xf32>
      %c0_10 = arith.constant 0 : index
      %c0_11 = arith.constant 0 : index
      %13 = vector.load %arg7[%c0_10, %c0_11] : memref<2x128xf32, #tpu.memory_space<vmem>>, vector<2x128xf32>
      tpu.vector_store %arg7[%c0_10, %c0_11], %12 {strides = array<i32>} : memref<2x128xf32, #tpu.memory_space<vmem>>, vector<2x128xf32>,
    } else {
    }
    %c0 = arith.constant 0 : index
    %c0_1 = arith.constant 0 : index
    %3 = vector.load %arg7[%c0, %c0_1] : memref<2x128xf32, #tpu.memory_space<vmem>>, vector<2x128xf32>
    %c0_2 = arith.constant 0 : index
    %c0_3 = arith.constant 0 : index
    %4 = vector.load %arg3[%c0_2, %c0_3] : memref<2x512xbf16, #tpu.memory_space<vmem>>, vector<2x512xbf16>
    %c0_4 = arith.constant 0 : index
    %c0_5 = arith.constant 0 : index
    %5 = vector.load %arg4[%c0_4, %c0_5] : memref<512x128xbf16, #tpu.memory_space<vmem>>, vector<512x128xbf16>
    %cst = arith.constant dense<0.000000e+00> : vector<2x128xf32>
    %6 = tpu.matmul %4, %5, %cst {dimension_numbers = #tpu.dot_dimension_numbers<[1], [0], [0], [1], [0, 0, 1, 1], [], []>} : vector<2x512xbf16>, vector<512x128xbf16>, vector<2x128xf32> -> vector<2x128xf32>
    %7 = arith.addf %3, %6 : vector<2x128xf32>
    %c0_6 = arith.constant 0 : index
    %c0_7 = arith.constant 0 : index
    %8 = vector.load %arg7[%c0_6, %c0_7] : memref<2x128xf32, #tpu.memory_space<vmem>>, vector<2x128xf32>
    tpu.vector_store %arg7[%c0_6, %c0_7], %7 {strides = array<i32>} : memref<2x128xf32, #tpu.memory_space<vmem>>, vector<2x128xf32>,
    %c1_i32 = arith.constant 1 : i32
    %9 = arith.cmpi eq, %arg2, %c1_i32 : i32
    %10 = arith.extui %9 : i1 to i32
    %c0_i32_8 = arith.constant 0 : i32
    %11 = arith.cmpi ne, %10, %c0_i32_8 : i32
    scf.if %11 {
      %c0_9 = arith.constant 0 : index
      %c0_10 = arith.constant 0 : index
      %12 = vector.load %arg7[%c0_9, %c0_10] : memref<2x128xf32, #tpu.memory_space<vmem>>, vector<2x128xf32>
      %c0_11 = arith.constant 0 : index
      %c0_12 = arith.constant 0 : index
      %13 = vector.load %arg5[%c0_11, %c0_12] : memref<1x128xf32, #tpu.memory_space<vmem>>, vector<1x128xf32>
      %14 = vector.broadcast %13 : vector<1x128xf32> to vector<2x128xf32>
      %15 = arith.addf %12, %14 : vector<2x128xf32>
      %c0_13 = arith.constant 0 : index
      %c0_14 = arith.constant 0 : index
      %16 = vector.load %arg6[%c0_13, %c0_14] : memref<2x128xf32, #tpu.memory_space<vmem>>, vector<2x128xf32>
      tpu.vector_store %arg6[%c0_13, %c0_14], %15 {strides = array<i32>} : memref<2x128xf32, #tpu.memory_space<vmem>>, vector<2x128xf32>,
    } else {
    }
    return
  }
  func.func @transform_0(%arg0: i32, %arg1: i32, %arg2: i32) -> (i32, i32) {
    %c0_i32 = arith.constant 0 : i32
    return %arg0, %arg2 : i32, i32
  }
  func.func @transform_1(%arg0: i32, %arg1: i32, %arg2: i32) -> (i32, i32) {
    %c0_i32 = arith.constant 0 : i32
    return %arg2, %arg1 : i32, i32
  }
  func.func @transform_2(%arg0: i32, %arg1: i32, %arg2: i32) -> (i32, i32) {
    %c0_i32 = arith.constant 0 : i32
    %c0_i32_0 = arith.constant 0 : i32
    return %c0_i32, %arg1 : i32, i32
  }
  func.func @transform_3(%arg0: i32, %arg1: i32, %arg2: i32) -> (i32, i32) {
    %c0_i32 = arith.constant 0 : i32
    return %arg0, %arg1 : i32, i32
  }
}

module attributes {stable_mosaic.version = 11 : i64} {
  func.func @kernel(%arg0: i32, %arg1: i32, %arg2: i32, %arg3: memref<2x256xbf16, #tpu.memory_space<vmem>>, %arg4: memref<256x128xbf16, #tpu.memory_space<vmem>>, %arg5: memref<1x128xf32, #tpu.memory_space<vmem>>, %arg6: memref<2x128xf32, #tpu.memory_space<vmem>>, %arg7: memref<2x128xf32, #tpu.memory_space<vmem>>) attributes {dimension_semantics = [#tpu.dimension_semantics<parallel>, #tpu.dimension_semantics<parallel>, #tpu.dimension_semantics<arbitrary>], iteration_bounds = array<i64: 1, 1, 1>, scalar_prefetch = 0 : i64, scratch_operands = 1 : i64, tpu.core_type = #tpu.core_type<tc>, window_params = [{transform_indices = @transform_0, window_bounds = array<i64: 2, 256>}, {transform_indices = @transform_1, window_bounds = array<i64: 256, 128>}, {transform_indices = @transform_2, window_bounds = array<i64: 1, 128>}, {transform_indices = @transform_3, window_bounds = array<i64: 2, 128>}]} {
    %c0_i32 = arith.constant 0 : i32
    %0 = arith.cmpi eq, %arg2, %c0_i32 : i32
    %1 = arith.extui %0 : i1 to i32
    %c0_i32_0 = arith.constant 0 : i32
    %2 = arith.cmpi ne, %1, %c0_i32_0 : i32
    scf.if %2 {
      %cst_10 = arith.constant 0.000000e+00 : f32
      %12 = vector.broadcast %cst_10 : f32 to vector<2x128xf32>
      %c0_11 = arith.constant 0 : index
      %c0_12 = arith.constant 0 : index
      %13 = vector.load %arg7[%c0_11, %c0_12] : memref<2x128xf32, #tpu.memory_space<vmem>>, vector<2x128xf32>
      tpu.vector_store %arg7[%c0_11, %c0_12], %12 {strides = array<i32>} : memref<2x128xf32, #tpu.memory_space<vmem>>, vector<2x128xf32>,
    } else {
    }
    %c0 = arith.constant 0 : index
    %c0_1 = arith.constant 0 : index
    %3 = vector.load %arg7[%c0, %c0_1] : memref<2x128xf32, #tpu.memory_space<vmem>>, vector<2x128xf32>
    %c0_2 = arith.constant 0 : index
    %c0_3 = arith.constant 0 : index
    %4 = vector.load %arg3[%c0_2, %c0_3] : memref<2x256xbf16, #tpu.memory_space<vmem>>, vector<2x256xbf16>
    %c0_4 = arith.constant 0 : index
    %c0_5 = arith.constant 0 : index
    %5 = vector.load %arg4[%c0_4, %c0_5] : memref<256x128xbf16, #tpu.memory_space<vmem>>, vector<256x128xbf16>
    %cst = arith.constant dense<0.000000e+00> : vector<2x128xf32>
    %6 = tpu.matmul %4, %5, %cst {dimension_numbers = #tpu.dot_dimension_numbers<[1], [0], [0], [1], [0, 0, 1, 1], [], []>} : vector<2x256xbf16>, vector<256x128xbf16>, vector<2x128xf32> -> vector<2x128xf32>
    %7 = arith.addf %3, %6 : vector<2x128xf32>
    %c0_6 = arith.constant 0 : index
    %c0_7 = arith.constant 0 : index
    %8 = vector.load %arg7[%c0_6, %c0_7] : memref<2x128xf32, #tpu.memory_space<vmem>>, vector<2x128xf32>
    tpu.vector_store %arg7[%c0_6, %c0_7], %7 {strides = array<i32>} : memref<2x128xf32, #tpu.memory_space<vmem>>, vector<2x128xf32>,
    %c0_i32_8 = arith.constant 0 : i32
    %9 = arith.cmpi eq, %arg2, %c0_i32_8 : i32
    %10 = arith.extui %9 : i1 to i32
    %c0_i32_9 = arith.constant 0 : i32
    %11 = arith.cmpi ne, %10, %c0_i32_9 : i32
    scf.if %11 {
      %c0_10 = arith.constant 0 : index
      %c0_11 = arith.constant 0 : index
      %12 = vector.load %arg7[%c0_10, %c0_11] : memref<2x128xf32, #tpu.memory_space<vmem>>, vector<2x128xf32>
      %c0_12 = arith.constant 0 : index
      %c0_13 = arith.constant 0 : index
      %13 = vector.load %arg5[%c0_12, %c0_13] : memref<1x128xf32, #tpu.memory_space<vmem>>, vector<1x128xf32>
      %14 = vector.broadcast %13 : vector<1x128xf32> to vector<2x128xf32>
      %15 = arith.addf %12, %14 : vector<2x128xf32>
      %c0_14 = arith.constant 0 : index
      %c0_15 = arith.constant 0 : index
      %16 = vector.load %arg6[%c0_14, %c0_15] : memref<2x128xf32, #tpu.memory_space<vmem>>, vector<2x128xf32>
      tpu.vector_store %arg6[%c0_14, %c0_15], %15 {strides = array<i32>} : memref<2x128xf32, #tpu.memory_space<vmem>>, vector<2x128xf32>,
    } else {
    }
    return
  }
  func.func @transform_0(%arg0: i32, %arg1: i32, %arg2: i32) -> (i32, i32) {
    %c0_i32 = arith.constant 0 : i32
    return %arg0, %arg2 : i32, i32
  }
  func.func @transform_1(%arg0: i32, %arg1: i32, %arg2: i32) -> (i32, i32) {
    %c0_i32 = arith.constant 0 : i32
    return %arg2, %arg1 : i32, i32
  }
  func.func @transform_2(%arg0: i32, %arg1: i32, %arg2: i32) -> (i32, i32) {
    %c0_i32 = arith.constant 0 : i32
    %c0_i32_0 = arith.constant 0 : i32
    return %c0_i32, %arg1 : i32, i32
  }
  func.func @transform_3(%arg0: i32, %arg1: i32, %arg2: i32) -> (i32, i32) {
    %c0_i32 = arith.constant 0 : i32
    return %arg0, %arg1 : i32, i32
  }
}

module attributes {stable_mosaic.version = 11 : i64} {
  func.func @_scale_shift_kernel(%arg0: i32, %arg1: memref<2x128xf32, #tpu.memory_space<vmem>>, %arg2: memref<1x128xf32, #tpu.memory_space<vmem>>, %arg3: memref<1x128xf32, #tpu.memory_space<vmem>>, %arg4: memref<2x128xf32, #tpu.memory_space<vmem>>) attributes {dimension_semantics = [#tpu.dimension_semantics<parallel>], iteration_bounds = array<i64: 1>, scalar_prefetch = 0 : i64, scratch_operands = 0 : i64, tpu.core_type = #tpu.core_type<tc>, window_params = [{transform_indices = @transform_0, window_bounds = array<i64: 2, 128>}, {pipeline_mode = #tpu.pipeline_mode<synchronous>, transform_indices = @transform_1, window_bounds = array<i64: 1, 128>}, {pipeline_mode = #tpu.pipeline_mode<synchronous>, transform_indices = @transform_2, window_bounds = array<i64: 1, 128>}, {transform_indices = @transform_3, window_bounds = array<i64: 2, 128>}]} {
    %c0 = arith.constant 0 : index
    %c0_0 = arith.constant 0 : index
    %0 = vector.load %arg1[%c0, %c0_0] : memref<2x128xf32, #tpu.memory_space<vmem>>, vector<2x128xf32>
    %c0_1 = arith.constant 0 : index
    %c0_2 = arith.constant 0 : index
    %1 = vector.load %arg2[%c0_1, %c0_2] : memref<1x128xf32, #tpu.memory_space<vmem>>, vector<1x128xf32>
    %2 = vector.broadcast %1 : vector<1x128xf32> to vector<2x128xf32>
    %3 = arith.mulf %0, %2 : vector<2x128xf32>
    %c0_3 = arith.constant 0 : index
    %c0_4 = arith.constant 0 : index
    %4 = vector.load %arg3[%c0_3, %c0_4] : memref<1x128xf32, #tpu.memory_space<vmem>>, vector<1x128xf32>
    %5 = vector.broadcast %4 : vector<1x128xf32> to vector<2x128xf32>
    %6 = arith.addf %3, %5 : vector<2x128xf32>
    %c0_5 = arith.constant 0 : index
    %c0_6 = arith.constant 0 : index
    %7 = vector.load %arg4[%c0_5, %c0_6] : memref<2x128xf32, #tpu.memory_space<vmem>>, vector<2x128xf32>
    tpu.vector_store %arg4[%c0_5, %c0_6], %6 {strides = array<i32>} : memref<2x128xf32, #tpu.memory_space<vmem>>, vector<2x128xf32>,
    return
  }
  func.func @transform_0(%arg0: i32) -> (i32, i32) {
    %c0_i32 = arith.constant 0 : i32
    %c0_i32_0 = arith.constant 0 : i32
    return %arg0, %c0_i32 : i32, i32
  }
  func.func @transform_1(%arg0: i32) -> (i32, i32) {
    %c0_i32 = arith.constant 0 : i32
    %c0_i32_0 = arith.constant 0 : i32
    %c0_i32_1 = arith.constant 0 : i32
    return %c0_i32, %c0_i32_0 : i32, i32
  }
  func.func @transform_2(%arg0: i32) -> (i32, i32) {
    %c0_i32 = arith.constant 0 : i32
    %c0_i32_0 = arith.constant 0 : i32
    %c0_i32_1 = arith.constant 0 : i32
    return %c0_i32, %c0_i32_0 : i32, i32
  }
  func.func @transform_3(%arg0: i32) -> (i32, i32) {
    %c0_i32 = arith.constant 0 : i32
    %c0_i32_0 = arith.constant 0 : i32
    return %arg0, %c0_i32 : i32, i32
  }
}

module attributes {stable_mosaic.version = 11 : i64} {
  func.func @_bn_stats_kernel(%arg0: i32, %arg1: memref<2x128xf32, #tpu.memory_space<vmem>>, %arg2: memref<8x128xf32, #tpu.memory_space<vmem>>, %arg3: memref<8x128xf32, #tpu.memory_space<vmem>>) attributes {dimension_semantics = [#tpu.dimension_semantics<arbitrary>], iteration_bounds = array<i64: 1>, scalar_prefetch = 0 : i64, scratch_operands = 0 : i64, tpu.core_type = #tpu.core_type<tc>, window_params = [{transform_indices = @transform_0, window_bounds = array<i64: 2, 128>}, {pipeline_mode = #tpu.pipeline_mode<synchronous>, transform_indices = @transform_1, window_bounds = array<i64: 8, 128>}, {pipeline_mode = #tpu.pipeline_mode<synchronous>, transform_indices = @transform_2, window_bounds = array<i64: 8, 128>}]} {
    %c0_i32 = arith.constant 0 : i32
    %0 = arith.cmpi eq, %arg0, %c0_i32 : i32
    %1 = arith.extui %0 : i1 to i32
    %c0_i32_0 = arith.constant 0 : i32
    %2 = arith.cmpi ne, %1, %c0_i32_0 : i32
    scf.if %2 {
      %cst_11 = arith.constant 0.000000e+00 : f32
      %19 = vector.broadcast %cst_11 : f32 to vector<8x128xf32>
      %c0_12 = arith.constant 0 : index
      %c0_13 = arith.constant 0 : index
      %20 = vector.load %arg2[%c0_12, %c0_13] : memref<8x128xf32, #tpu.memory_space<vmem>>, vector<8x128xf32>
      tpu.vector_store %arg2[%c0_12, %c0_13], %19 {strides = array<i32>} : memref<8x128xf32, #tpu.memory_space<vmem>>, vector<8x128xf32>,
      %cst_14 = arith.constant 0.000000e+00 : f32
      %21 = vector.broadcast %cst_14 : f32 to vector<8x128xf32>
      %c0_15 = arith.constant 0 : index
      %c0_16 = arith.constant 0 : index
      %22 = vector.load %arg3[%c0_15, %c0_16] : memref<8x128xf32, #tpu.memory_space<vmem>>, vector<8x128xf32>
      tpu.vector_store %arg3[%c0_15, %c0_16], %21 {strides = array<i32>} : memref<8x128xf32, #tpu.memory_space<vmem>>, vector<8x128xf32>,
    } else {
    }
    %c0 = arith.constant 0 : index
    %c0_1 = arith.constant 0 : index
    %3 = vector.load %arg1[%c0, %c0_1] : memref<2x128xf32, #tpu.memory_space<vmem>>, vector<2x128xf32>
    %c0_2 = arith.constant 0 : index
    %c0_3 = arith.constant 0 : index
    %4 = vector.load %arg2[%c0_2, %c0_3] : memref<8x128xf32, #tpu.memory_space<vmem>>, vector<8x128xf32>
    %cst = arith.constant dense<0.000000e+00> : vector<128xf32>
    %5 = vector.multi_reduction <add>, %3, %cst [0] : vector<2x128xf32> to vector<128xf32>
    %6 = vector.shape_cast %5 : vector<128xf32> to vector<1x128xf32>
    %7 = vector.shape_cast %6 : vector<1x128xf32> to vector<1x128xf32>
    %8 = vector.broadcast %7 : vector<1x128xf32> to vector<8x128xf32>
    %9 = arith.addf %4, %8 : vector<8x128xf32>
    %c0_4 = arith.constant 0 : index
    %c0_5 = arith.constant 0 : index
    %10 = vector.load %arg2[%c0_4, %c0_5] : memref<8x128xf32, #tpu.memory_space<vmem>>, vector<8x128xf32>
    tpu.vector_store %arg2[%c0_4, %c0_5], %9 {strides = array<i32>} : memref<8x128xf32, #tpu.memory_space<vmem>>, vector<8x128xf32>,
    %c0_6 = arith.constant 0 : index
    %c0_7 = arith.constant 0 : index
    %11 = vector.load %arg3[%c0_6, %c0_7] : memref<8x128xf32, #tpu.memory_space<vmem>>, vector<8x128xf32>
    %12 = arith.mulf %3, %3 : vector<2x128xf32>
    %cst_8 = arith.constant dense<0.000000e+00> : vector<128xf32>
    %13 = vector.multi_reduction <add>, %12, %cst_8 [0] : vector<2x128xf32> to vector<128xf32>
    %14 = vector.shape_cast %13 : vector<128xf32> to vector<1x128xf32>
    %15 = vector.shape_cast %14 : vector<1x128xf32> to vector<1x128xf32>
    %16 = vector.broadcast %15 : vector<1x128xf32> to vector<8x128xf32>
    %17 = arith.addf %11, %16 : vector<8x128xf32>
    %c0_9 = arith.constant 0 : index
    %c0_10 = arith.constant 0 : index
    %18 = vector.load %arg3[%c0_9, %c0_10] : memref<8x128xf32, #tpu.memory_space<vmem>>, vector<8x128xf32>
    tpu.vector_store %arg3[%c0_9, %c0_10], %17 {strides = array<i32>} : memref<8x128xf32, #tpu.memory_space<vmem>>, vector<8x128xf32>,
    return
  }
  func.func @transform_0(%arg0: i32) -> (i32, i32) {
    %c0_i32 = arith.constant 0 : i32
    %c0_i32_0 = arith.constant 0 : i32
    return %arg0, %c0_i32 : i32, i32
  }
  func.func @transform_1(%arg0: i32) -> (i32, i32) {
    %c0_i32 = arith.constant 0 : i32
    %c0_i32_0 = arith.constant 0 : i32
    %c0_i32_1 = arith.constant 0 : i32
    return %c0_i32, %c0_i32_0 : i32, i32
  }
  func.func @transform_2(%arg0: i32) -> (i32, i32) {
    %c0_i32 = arith.constant 0 : i32
    %c0_i32_0 = arith.constant 0 : i32
    %c0_i32_1 = arith.constant 0 : i32
    return %c0_i32, %c0_i32_0 : i32, i32
  }
}

module attributes {stable_mosaic.version = 11 : i64} {
  func.func @kernel(%arg0: i32, %arg1: i32, %arg2: i32, %arg3: memref<256x64xbf16, #tpu.memory_space<vmem>>, %arg4: memref<64x128xbf16, #tpu.memory_space<vmem>>, %arg5: memref<1x128xf32, #tpu.memory_space<vmem>>, %arg6: memref<256x128xf32, #tpu.memory_space<vmem>>, %arg7: memref<256x128xf32, #tpu.memory_space<vmem>>) attributes {dimension_semantics = [#tpu.dimension_semantics<parallel>, #tpu.dimension_semantics<parallel>, #tpu.dimension_semantics<arbitrary>], iteration_bounds = array<i64: 2, 1, 1>, scalar_prefetch = 0 : i64, scratch_operands = 1 : i64, tpu.core_type = #tpu.core_type<tc>, window_params = [{transform_indices = @transform_0, window_bounds = array<i64: 256, 64>}, {transform_indices = @transform_1, window_bounds = array<i64: 64, 128>}, {transform_indices = @transform_2, window_bounds = array<i64: 1, 128>}, {transform_indices = @transform_3, window_bounds = array<i64: 256, 128>}]} {
    %c0_i32 = arith.constant 0 : i32
    %0 = arith.cmpi eq, %arg2, %c0_i32 : i32
    %1 = arith.extui %0 : i1 to i32
    %c0_i32_0 = arith.constant 0 : i32
    %2 = arith.cmpi ne, %1, %c0_i32_0 : i32
    scf.if %2 {
      %cst_10 = arith.constant 0.000000e+00 : f32
      %12 = vector.broadcast %cst_10 : f32 to vector<256x128xf32>
      %c0_11 = arith.constant 0 : index
      %c0_12 = arith.constant 0 : index
      %13 = vector.load %arg7[%c0_11, %c0_12] : memref<256x128xf32, #tpu.memory_space<vmem>>, vector<256x128xf32>
      tpu.vector_store %arg7[%c0_11, %c0_12], %12 {strides = array<i32>} : memref<256x128xf32, #tpu.memory_space<vmem>>, vector<256x128xf32>,
    } else {
    }
    %c0 = arith.constant 0 : index
    %c0_1 = arith.constant 0 : index
    %3 = vector.load %arg7[%c0, %c0_1] : memref<256x128xf32, #tpu.memory_space<vmem>>, vector<256x128xf32>
    %c0_2 = arith.constant 0 : index
    %c0_3 = arith.constant 0 : index
    %4 = vector.load %arg3[%c0_2, %c0_3] : memref<256x64xbf16, #tpu.memory_space<vmem>>, vector<256x64xbf16>
    %c0_4 = arith.constant 0 : index
    %c0_5 = arith.constant 0 : index
    %5 = vector.load %arg4[%c0_4, %c0_5] : memref<64x128xbf16, #tpu.memory_space<vmem>>, vector<64x128xbf16>
    %cst = arith.constant dense<0.000000e+00> : vector<256x128xf32>
    %6 = tpu.matmul %4, %5, %cst {dimension_numbers = #tpu.dot_dimension_numbers<[1], [0], [0], [1], [0, 0, 1, 1], [], []>} : vector<256x64xbf16>, vector<64x128xbf16>, vector<256x128xf32> -> vector<256x128xf32>
    %7 = arith.addf %3, %6 : vector<256x128xf32>
    %c0_6 = arith.constant 0 : index
    %c0_7 = arith.constant 0 : index
    %8 = vector.load %arg7[%c0_6, %c0_7] : memref<256x128xf32, #tpu.memory_space<vmem>>, vector<256x128xf32>
    tpu.vector_store %arg7[%c0_6, %c0_7], %7 {strides = array<i32>} : memref<256x128xf32, #tpu.memory_space<vmem>>, vector<256x128xf32>,
    %c0_i32_8 = arith.constant 0 : i32
    %9 = arith.cmpi eq, %arg2, %c0_i32_8 : i32
    %10 = arith.extui %9 : i1 to i32
    %c0_i32_9 = arith.constant 0 : i32
    %11 = arith.cmpi ne, %10, %c0_i32_9 : i32
    scf.if %11 {
      %c0_10 = arith.constant 0 : index
      %c0_11 = arith.constant 0 : index
      %12 = vector.load %arg7[%c0_10, %c0_11] : memref<256x128xf32, #tpu.memory_space<vmem>>, vector<256x128xf32>
      %c0_12 = arith.constant 0 : index
      %c0_13 = arith.constant 0 : index
      %13 = vector.load %arg5[%c0_12, %c0_13] : memref<1x128xf32, #tpu.memory_space<vmem>>, vector<1x128xf32>
      %14 = vector.broadcast %13 : vector<1x128xf32> to vector<256x128xf32>
      %15 = arith.addf %12, %14 : vector<256x128xf32>
      %16 = math.tanh %15 : vector<256x128xf32>
      %c0_14 = arith.constant 0 : index
      %c0_15 = arith.constant 0 : index
      %17 = vector.load %arg6[%c0_14, %c0_15] : memref<256x128xf32, #tpu.memory_space<vmem>>, vector<256x128xf32>
      tpu.vector_store %arg6[%c0_14, %c0_15], %16 {strides = array<i32>} : memref<256x128xf32, #tpu.memory_space<vmem>>, vector<256x128xf32>,
    } else {
    }
    return
  }
  func.func @transform_0(%arg0: i32, %arg1: i32, %arg2: i32) -> (i32, i32) {
    %c0_i32 = arith.constant 0 : i32
    return %arg0, %arg2 : i32, i32
  }
  func.func @transform_1(%arg0: i32, %arg1: i32, %arg2: i32) -> (i32, i32) {
    %c0_i32 = arith.constant 0 : i32
    return %arg2, %arg1 : i32, i32
  }
  func.func @transform_2(%arg0: i32, %arg1: i32, %arg2: i32) -> (i32, i32) {
    %c0_i32 = arith.constant 0 : i32
    %c0_i32_0 = arith.constant 0 : i32
    return %c0_i32, %arg1 : i32, i32
  }
  func.func @transform_3(%arg0: i32, %arg1: i32, %arg2: i32) -> (i32, i32) {
    %c0_i32 = arith.constant 0 : i32
    return %arg0, %arg1 : i32, i32
  }
}

</mosaic_0001>

<llo_original>
// kernel: _lambda_.63
$region0: #{_lambda_.63}
  #allocation0 [shape = 'u32[]', space=smem, size = 0x4, offset = 0x4, fixed_abs, tag = 'smem constant byte address 0x4 - core index']
  #allocation1 [shape = 'u32[72,128]{1,0:T(1,128)}', space=vmem, size = 0x9000, scoped, tag = 'internal scratch']
  #allocation2 [shape = 'f32[256,128]{1,0:T(8,128)}', space=vmem, size = 0x20000, scoped, tag = 'scratch operand']
  %s0 = inlined_call_operand.vmem [shape: bf16[512,64], index: 0, kind: input, shape index: {}]
  %s1 = inlined_call_operand.vmem [shape: bf16[64,128], index: 1, kind: input, shape index: {}]
  %s2 = inlined_call_operand.vmem [shape: f32[1,128], index: 2, kind: input, shape index: {}]
  %s3 = inlined_call_operand.vmem [shape: f32[512,128], index: 3, kind: output, shape index: {}]
  %s4 = sld [smem:[#allocation0]]
  $region53: #{_lambda_.63} parent=0
    _
  %s6 = ssub.s32 1, %s4
  %s7 = scalar_select 0, %s6, %s4
  loop: start=0, step=1, limit=4
  $region2: #{_lambda_.63} parent=0 // loop_pre_header
    _
  $region3: #{_lambda_.63} parent=0 // loop_header
    %s9 = sphi 0, %s13
    %p10 = scmp.ge.s32.totalorder %s9, 4
    %s16 = sphi 0, %s35
    %s17 = sphi 0, %s31
    %s18 = sphi 0, %s27
    %s19 = sphi 0, %s16
    %s20 = sphi 0, %s17
    %s21 = sphi 0, %s18
    %s22 = sphi 0, %s19
    %s23 = sphi 0, %s20
    %s24 = sphi 0, %s21
    %s40 = sphi 0, %s42
    %s43 = sphi 0, %s40
    %s44 = sphi 0, %s43
    %s60 = sphi 0, %s44
    %s68 = sphi 0, %s70
    %s71 = sphi 0, %s68
    %s72 = sphi 0, %s71
    %s88 = sphi 0, %s72
    %s94 = sphi 0, %s96
    %s97 = sphi 0, %s94
    %s98 = sphi 0, %s97
    %s114 = sphi 0, %s98
    %s122 = sphi 0, %s124
    %s125 = sphi 0, %s122
    %s126 = sphi 0, %s125
    %s142 = sphi 0, %s126
  $region4: #{_lambda_.63} parent=0 // loop_header_branch
    %12 = sbr.rel (%p10) target = $region8
  $region5: #{_lambda_.63} parent=0 // loop_body
    %s14 = ssub.s32 %s9, 1
    %s15 = ssub.s32 %s9, 2
    %s25 = sadd.s32 1, %s18
    %p26 = scmp.ge.s32.totalorder %s25, 1
    %s27 = scalar_select %p26, 0, %s25
    %s28 = sadd.s32 1, %s17
    %s29 = scalar_select %p26, %s28, %s17
    %p30 = scmp.ge.s32.totalorder %s29, 1
    %s31 = scalar_select %p30, 0, %s29
    %s32 = sadd.s32 1, %s16
    %s33 = scalar_select %p30, %s32, %s16
    %p34 = scmp.ge.s32.totalorder %s33, 2
    %s35 = scalar_select %p34, 0, %s33
    %s36 = ssub.s32 %s16, %s35
    %s37 = ssub.s32 %s18, %s27
    %s38 = sor.u32 %s36, %s37
    %p39 = scmp.eq.s32.totalorder %s38, 0
    %s41 = sadd.s32 %s40, 1
    %s42 = scalar_select %p39, %s40, %s41
    %p45 = pneg %p39
    %p46 = scmp.eq.s32.totalorder %s9, 1
    %p47 = por %p45, %p46
    %p48 = scmp.ne.s32.totalorder %s40, %s43
    %p49 = scmp.eq.s32.totalorder %s9, 0
    %p50 = por %p48, %p49
    %p51 = scmp.ne.s32.totalorder %s40, %s43
    %p52 = scmp.eq.s32.totalorder %s14, 1
    %p53 = por %p51, %p52
    %p54 = scmp.ne.s32.totalorder %s43, %s44
    %p55 = scmp.eq.s32.totalorder %s14, 0
    %p56 = por %p54, %p55
    %p57 = scmp.ne.s32.totalorder %s43, %s44
    %p58 = scmp.eq.s32.totalorder %s15, 1
    %p59 = por %p57, %p58
    %p61 = scmp.ne.s32.totalorder %s44, %s60
    %p62 = scmp.eq.s32.totalorder %s15, 0
    %p63 = por %p61, %p62
    %s64 = ssub.s32 %s18, %s27
    %s65 = ssub.s32 %s17, %s31
    %s66 = sor.u32 %s64, %s65
    %p67 = scmp.eq.s32.totalorder %s66, 0
    %s69 = sadd.s32 %s68, 1
    %s70 = scalar_select %p67, %s68, %s69
    %p73 = pneg %p67
    %p74 = scmp.eq.s32.totalorder %s9, 1
    %p75 = por %p73, %p74
    %p76 = scmp.ne.s32.totalorder %s68, %s71
    %p77 = scmp.eq.s32.totalorder %s9, 0
    %p78 = por %p76, %p77
    %p79 = scmp.ne.s32.totalorder %s68, %s71
    %p80 = scmp.eq.s32.totalorder %s14, 1
    %p81 = por %p79, %p80
    %p82 = scmp.ne.s32.totalorder %s71, %s72
    %p83 = scmp.eq.s32.totalorder %s14, 0
    %p84 = por %p82, %p83
    %p85 = scmp.ne.s32.totalorder %s71, %s72
    %p86 = scmp.eq.s32.totalorder %s15, 1
    %p87 = por %p85, %p86
    %p89 = scmp.ne.s32.totalorder %s72, %s88
    %p90 = scmp.eq.s32.totalorder %s15, 0
    %p91 = por %p89, %p90
    %s92 = ssub.s32 %s17, %s31
    %p93 = scmp.eq.s32.totalorder %s92, 0
    %s95 = sadd.s32 %s94, 1
    %s96 = scalar_select %p93, %s94, %s95
    %p99 = pneg %p93
    %p100 = scmp.eq.s32.totalorder %s9, 1
    %p101 = por %p99, %p100
    %p102 = scmp.ne.s32.totalorder %s94, %s97
    %p103 = scmp.eq.s32.totalorder %s9, 0
    %p104 = por %p102, %p103
    %p105 = scmp.ne.s32.totalorder %s94, %s97
    %p106 = scmp.eq.s32.totalorder %s14, 1
    %p107 = por %p105, %p106
    %p108 = scmp.ne.s32.totalorder %s97, %s98
    %p109 = scmp.eq.s32.totalorder %s14, 0
    %p110 = por %p108, %p109
    %p111 = scmp.ne.s32.totalorder %s97, %s98
    %p112 = scmp.eq.s32.totalorder %s15, 1
    %p113 = por %p111, %p112
    %p115 = scmp.ne.s32.totalorder %s98, %s114
    %p116 = scmp.eq.s32.totalorder %s15, 0
    %p117 = por %p115, %p116
    %s118 = ssub.s32 %s16, %s35
    %s119 = ssub.s32 %s17, %s31
    %s120 = sor.u32 %s118, %s119
    %p121 = scmp.eq.s32.totalorder %s120, 0
    %s123 = sadd.s32 %s122, 1
    %s124 = scalar_select %p121, %s122, %s123
    %p127 = pneg %p121
    %p128 = scmp.eq.s32.totalorder %s9, 1
    %p129 = por %p127, %p128
    %p130 = scmp.ne.s32.totalorder %s122, %s125
    %p131 = scmp.eq.s32.totalorder %s9, 0
    %p132 = por %p130, %p131
    %p133 = scmp.ne.s32.totalorder %s122, %s125
    %p134 = scmp.eq.s32.totalorder %s14, 1
    %p135 = por %p133, %p134
    %p136 = scmp.ne.s32.totalorder %s125, %s126
    %p137 = scmp.eq.s32.totalorder %s14, 0
    %p138 = por %p136, %p137
    %p139 = scmp.ne.s32.totalorder %s125, %s126
    %p140 = scmp.eq.s32.totalorder %s15, 1
    %p141 = por %p139, %p140
    %p143 = scmp.ne.s32.totalorder %s126, %s142
    %p144 = scmp.eq.s32.totalorder %s15, 0
    %p145 = por %p143, %p144
    %p146 = scmp.le.s32.totalorder 1, %s9
    %p147 = scmp.lt.s32.totalorder %s9, 3
    %p148 = pnand %p146, %p147
    %p149 = pneg %p148
    // Predicated region
    $region9: #{_lambda_.63} parent=5 // pred_check
      _
    $region10: #{_lambda_.63} parent=5 // pred_check_branch
      %151 = sbr.rel (%p148) target = $region12
    $region11: #{_lambda_.63} parent=5 // pred_region
      %s152 = ssub.s32 %s9, 1
      // Predicated region
      $region13: #{_lambda_.63} parent=11 // pred_check
        %p153 = pneg %p84
      $region14: #{_lambda_.63} parent=11 // pred_check_branch
        %155 = sbr.rel (%p153) target = $region16
      $region15: #{_lambda_.63} parent=11 // pred_region
        %s156 = smul.u32 8, %s21
        %p157 = scmp.lt.s32.totalorder %s156, 7
        %s158 = scalar_select %p157, %s156, 7
        %p159 = scmp.lt.s32.totalorder %s20, 0
        %s160 = scalar_select %p159, %s20, 0
        %s161 = sadd.s32 %s160, %s158
        %s162 = smul.addr %s161, 4
        %s163 = scalar_lea.vmem %s1, %s162
        %s164 = smul.u32 8, %s21
      $region16: #{_lambda_.63} parent=11 // pred_fallthru
        _
      // Predicated region
      $region17: #{_lambda_.63} parent=11 // pred_check
        %p165 = pneg %p110
      $region18: #{_lambda_.63} parent=11 // pred_check_branch
        %167 = sbr.rel (%p165) target = $region20
      $region19: #{_lambda_.63} parent=11 // pred_region
        %p168 = scmp.lt.s32.totalorder %s20, 0
        %s169 = scalar_select %p168, %s20, 0
        %s170 = scalar_lea.vmem %s2, %s169
      $region20: #{_lambda_.63} parent=11 // pred_fallthru
        _
    $region12: #{_lambda_.63} parent=5 // pred_fallthru
      _
    %p171 = scmp.lt.s32.totalorder %s9, 2
    // Predicated region
    $region21: #{_lambda_.63} parent=5 // pred_check
      %p172 = pneg %p171
    $region22: #{_lambda_.63} parent=5 // pred_check_branch
      %174 = sbr.rel (%p172) target = $region24
    $region23: #{_lambda_.63} parent=5 // pred_region
      // Predicated region
      $region25: #{_lambda_.63} parent=23 // pred_check
        %p175 = pneg %p50
      $region26: #{_lambda_.63} parent=23 // pred_check_branch
        %177 = sbr.rel (%p175) target = $region28
      $region27: #{_lambda_.63} parent=23 // pred_region
        %s178 = smul.u32 32, %s16
        %p179 = scmp.lt.s32.totalorder %s178, 63
        %s180 = scalar_select %p179, %s178, 63
        %p181 = scmp.lt.s32.totalorder %s18, 0
        %s182 = scalar_select %p181, %s18, 0
        %s183 = sadd.s32 %s182, %s180
        %s184 = smul.addr %s183, 4
        %s185 = scalar_lea.vmem %s0, %s184
        %s186 = smul.u32 32, %s16
      $region28: #{_lambda_.63} parent=23 // pred_fallthru
        _
    $region24: #{_lambda_.63} parent=5 // pred_fallthru
      _
    %p187 = scmp.le.s32.totalorder 1, %s9
    %p188 = scmp.lt.s32.totalorder %s9, 3
    %p189 = pnand %p187, %p188
    %p190 = pneg %p189
    // Predicated region
    $region29: #{_lambda_.63} parent=5 // pred_check
      _
    $region30: #{_lambda_.63} parent=5 // pred_check_branch
      %192 = sbr.rel (%p189) target = $region32
    $region31: #{_lambda_.63} parent=5 // pred_region
      %s193 = ssub.s32 %s9, 1
      %s194 = smul.u32 32, %s19
      %p195 = scmp.lt.s32.totalorder %s194, 63
      %s196 = scalar_select %p195, %s194, 63
      %p197 = scmp.lt.s32.totalorder %s21, 0
      %s198 = scalar_select %p197, %s21, 0
      %s199 = sadd.s32 %s198, %s196
      %s200 = smul.addr %s199, 4
      %s201 = scalar_lea.vmem %s0, %s200
      %p202 = pneg %p56
      %p203 = pneg %p53
      %s204 = smul.u32 8, %s21
      %p205 = scmp.lt.s32.totalorder %s204, 7
      %s206 = scalar_select %p205, %s204, 7
      %p207 = scmp.lt.s32.totalorder %s20, 0
      %s208 = scalar_select %p207, %s20, 0
      %s209 = sadd.s32 %s208, %s206
      %s210 = smul.addr %s209, 4
      %s211 = scalar_lea.vmem %s1, %s210
      %p212 = pneg %p84
      %p213 = pneg %p81
      %p214 = scmp.lt.s32.totalorder %s20, 0
      %s215 = scalar_select %p214, %s20, 0
      %s216 = scalar_lea.vmem %s2, %s215
      %p217 = pneg %p110
      %p218 = pneg %p107
      %p219 = pneg %p138
      %p220 = pneg %p135
      %s221 = smul.u32 32, %s19
      %p222 = scmp.lt.s32.totalorder %s221, 63
      %s223 = scalar_select %p222, %s221, 63
      %p224 = scmp.lt.s32.totalorder %s20, 0
      %s225 = scalar_select %p224, %s20, 0
      %s226 = sadd.s32 %s225, %s223
      %s227 = smul.addr %s226, 8
      %s228 = scalar_lea.vmem %s3, %s227
      %s229 = smul.u32 32, %s19
      %p230 = scmp.lt.s32.totalorder %s229, 63
      %s231 = scalar_select %p230, %s229, 63
      %p232 = scmp.lt.s32.totalorder %s21, 0
      %s233 = scalar_select %p232, %s21, 0
      %s234 = sadd.s32 %s233, %s231
      %s235 = smul.addr %s234, 4
      %s236 = scalar_lea.vmem %s0, %s235
      %s237 = smul.u32 32, %s19
      %s238 = smul.u32 8, %s21
      %p239 = scmp.lt.s32.totalorder %s238, 7
      %s240 = scalar_select %p239, %s238, 7
      %p241 = scmp.lt.s32.totalorder %s20, 0
      %s242 = scalar_select %p241, %s20, 0
      %s243 = sadd.s32 %s242, %s240
      %s244 = smul.addr %s243, 4
      %s245 = scalar_lea.vmem %s1, %s244
      %s246 = smul.u32 8, %s21
      %p247 = scmp.lt.s32.totalorder %s20, 0
      %s248 = scalar_select %p247, %s20, 0
      %s249 = scalar_lea.vmem %s2, %s248
      %s250 = smul.u32 32, %s19
      %p251 = scmp.lt.s32.totalorder %s250, 63
      %s252 = scalar_select %p251, %s250, 63
      %p253 = scmp.lt.s32.totalorder %s20, 0
      %s254 = scalar_select %p253, %s20, 0
      %s255 = sadd.s32 %s254, %s252
      %s256 = smul.addr %s255, 8
      %s257 = scalar_lea.vmem %s3, %s256
      %s258 = smul.u32 32, %s19
      %p260 = scmp.eq.s32.totalorder %s21, 0
      // Predicated region
      $region33: #{_lambda_.63} parent=31 // pred_check
        %p261 = pneg %p260
      $region34: #{_lambda_.63} parent=31 // pred_check_branch
        %263 = sbr.rel (%p261) target = $region36
      $region35: #{_lambda_.63} parent=31 // pred_region
        %264 = vst [vmem:[#allocation2] sm:$0xff] 0.0
        %265 = vst [vmem:[#allocation2 + $0x8] sm:$0xff] 0.0
        %266 = vst [vmem:[#allocation2 + $0x10] sm:$0xff] 0.0
        %267 = vst [vmem:[#allocation2 + $0x18] sm:$0xff] 0.0
        %268 = vst [vmem:[#allocation2 + $0x20] sm:$0xff] 0.0
        %269 = vst [vmem:[#allocation2 + $0x28] sm:$0xff] 0.0
        %270 = vst [vmem:[#allocation2 + $0x30] sm:$0xff] 0.0
        %271 = vst [vmem:[#allocation2 + $0x38] sm:$0xff] 0.0
        %272 = vst [vmem:[#allocation2 + $0x40] sm:$0xff] 0.0
        %273 = vst [vmem:[#allocation2 + $0x48] sm:$0xff] 0.0
        %274 = vst [vmem:[#allocation2 + $0x50] sm:$0xff] 0.0
        %275 = vst [vmem:[#allocation2 + $0x58] sm:$0xff] 0.0
        %276 = vst [vmem:[#allocation2 + $0x60] sm:$0xff] 0.0
        %277 = vst [vmem:[#allocation2 + $0x68] sm:$0xff] 0.0
        %278 = vst [vmem:[#allocation2 + $0x70] sm:$0xff] 0.0
        %279 = vst [vmem:[#allocation2 + $0x78] sm:$0xff] 0.0
        %280 = vst [vmem:[#allocation2 + $0x80] sm:$0xff] 0.0
        %281 = vst [vmem:[#allocation2 + $0x88] sm:$0xff] 0.0
        %282 = vst [vmem:[#allocation2 + $0x90] sm:$0xff] 0.0
        %283 = vst [vmem:[#allocation2 + $0x98] sm:$0xff] 0.0
        %284 = vst [vmem:[#allocation2 + $0xa0] sm:$0xff] 0.0
        %285 = vst [vmem:[#allocation2 + $0xa8] sm:$0xff] 0.0
        %286 = vst [vmem:[#allocation2 + $0xb0] sm:$0xff] 0.0
        %287 = vst [vmem:[#allocation2 + $0xb8] sm:$0xff] 0.0
        %288 = vst [vmem:[#allocation2 + $0xc0] sm:$0xff] 0.0
        %289 = vst [vmem:[#allocation2 + $0xc8] sm:$0xff] 0.0
        %290 = vst [vmem:[#allocation2 + $0xd0] sm:$0xff] 0.0
        %291 = vst [vmem:[#allocation2 + $0xd8] sm:$0xff] 0.0
        %292 = vst [vmem:[#allocation2 + $0xe0] sm:$0xff] 0.0
        %293 = vst [vmem:[#allocation2 + $0xe8] sm:$0xff] 0.0
        %294 = vst [vmem:[#allocation2 + $0xf0] sm:$0xff] 0.0
        %295 = vst [vmem:[#allocation2 + $0xf8] sm:$0xff] 0.0
      $region36: #{_lambda_.63} parent=31 // pred_fallthru
        _
      %v296 = vld [vmem:[#allocation2] sm:$0xff]
      %v297 = vld [vmem:[#allocation2 + $0x8] sm:$0xff]
      %v298 = vld [vmem:[#allocation2 + $0x10] sm:$0xff]
      %v299 = vld [vmem:[#allocation2 + $0x18] sm:$0xff]
      %v300 = vld [vmem:[#allocation2 + $0x20] sm:$0xff]
      %v301 = vld [vmem:[#allocation2 + $0x28] sm:$0xff]
      %v302 = vld [vmem:[#allocation2 + $0x30] sm:$0xff]
      %v303 = vld [vmem:[#allocation2 + $0x38] sm:$0xff]
      %v304 = vld [vmem:[#allocation2 + $0x40] sm:$0xff]
      %v305 = vld [vmem:[#allocation2 + $0x48] sm:$0xff]
      %v306 = vld [vmem:[#allocation2 + $0x50] sm:$0xff]
      %v307 = vld [vmem:[#allocation2 + $0x58] sm:$0xff]
      %v308 = vld [vmem:[#allocation2 + $0x60] sm:$0xff]
      %v309 = vld [vmem:[#allocation2 + $0x68] sm:$0xff]
      %v310 = vld [vmem:[#allocation2 + $0x70] sm:$0xff]
      %v311 = vld [vmem:[#allocation2 + $0x78] sm:$0xff]
      %v312 = vld [vmem:[#allocation2 + $0x80] sm:$0xff]
      %v313 = vld [vmem:[#allocation2 + $0x88] sm:$0xff]
      %v314 = vld [vmem:[#allocation2 + $0x90] sm:$0xff]
      %v315 = vld [vmem:[#allocation2 + $0x98] sm:$0xff]
      %v316 = vld [vmem:[#allocation2 + $0xa0] sm:$0xff]
      %v317 = vld [vmem:[#allocation2 + $0xa8] sm:$0xff]
      %v318 = vld [vmem:[#allocation2 + $0xb0] sm:$0xff]
      %v319 = vld [vmem:[#allocation2 + $0xb8] sm:$0xff]
      %v320 = vld [vmem:[#allocation2 + $0xc0] sm:$0xff]
      %v321 = vld [vmem:[#allocation2 + $0xc8] sm:$0xff]
      %v322 = vld [vmem:[#allocation2 + $0xd0] sm:$0xff]
      %v323 = vld [vmem:[#allocation2 + $0xd8] sm:$0xff]
      %v324 = vld [vmem:[#allocation2 + $0xe0] sm:$0xff]
      %v325 = vld [vmem:[#allocation2 + $0xe8] sm:$0xff]
      %v326 = vld [vmem:[#allocation2 + $0xf0] sm:$0xff]
      %v327 = vld [vmem:[#allocation2 + $0xf8] sm:$0xff]
      %v328 = vld [vmem:[%s236] sm:$0xf]
      %v329 = vld [vmem:[%s236 + $0x4] sm:$0xf]
      %v330 = vld [vmem:[%s236 + $0x8] sm:$0xf]
      %v331 = vld [vmem:[%s236 + $0xc] sm:$0xf]
      %v332 = vld [vmem:[%s236 + $0x10] sm:$0xf]
      %v333 = vld [vmem:[%s236 + $0x14] sm:$0xf]
      %v334 = vld [vmem:[%s236 + $0x18] sm:$0xf]
      %v335 = vld [vmem:[%s236 + $0x1c] sm:$0xf]
      %v336 = vld [vmem:[%s236 + $0x20] sm:$0xf]
      %v337 = vld [vmem:[%s236 + $0x24] sm:$0xf]
      %v338 = vld [vmem:[%s236 + $0x28] sm:$0xf]
      %v339 = vld [vmem:[%s236 + $0x2c] sm:$0xf]
      %v340 = vld [vmem:[%s236 + $0x30] sm:$0xf]
      %v341 = vld [vmem:[%s236 + $0x34] sm:$0xf]
      %v342 = vld [vmem:[%s236 + $0x38] sm:$0xf]
      %v343 = vld [vmem:[%s236 + $0x3c] sm:$0xf]
      %v344 = vld [vmem:[%s236 + $0x40] sm:$0xf]
      %v345 = vld [vmem:[%s236 + $0x44] sm:$0xf]
      %v346 = vld [vmem:[%s236 + $0x48] sm:$0xf]
      %v347 = vld [vmem:[%s236 + $0x4c] sm:$0xf]
      %v348 = vld [vmem:[%s236 + $0x50] sm:$0xf]
      %v349 = vld [vmem:[%s236 + $0x54] sm:$0xf]
      %v350 = vld [vmem:[%s236 + $0x58] sm:$0xf]
      %v351 = vld [vmem:[%s236 + $0x5c] sm:$0xf]
      %v352 = vld [vmem:[%s236 + $0x60] sm:$0xf]
      %v353 = vld [vmem:[%s236 + $0x64] sm:$0xf]
      %v354 = vld [vmem:[%s236 + $0x68] sm:$0xf]
      %v355 = vld [vmem:[%s236 + $0x6c] sm:$0xf]
      %v356 = vld [vmem:[%s236 + $0x70] sm:$0xf]
      %v357 = vld [vmem:[%s236 + $0x74] sm:$0xf]
      %v358 = vld [vmem:[%s236 + $0x78] sm:$0xf]
      %v359 = vld [vmem:[%s236 + $0x7c] sm:$0xf]
      %v360 = vld [vmem:[%s245] sm:$0xf]
      %v361 = vld [vmem:[%s245 + $0x4] sm:$0xf]
      %v362 = vld [vmem:[%s245 + $0x8] sm:$0xf]
      %v363 = vld [vmem:[%s245 + $0xc] sm:$0xf]
      %v364 = vld [vmem:[%s245 + $0x10] sm:$0xf]
      %v365 = vld [vmem:[%s245 + $0x14] sm:$0xf]
      %v366 = vld [vmem:[%s245 + $0x18] sm:$0xf]
      %v367 = vld [vmem:[%s245 + $0x1c] sm:$0xf]
      %v400 = vunpack.c.l.b16 %v328
      %v401 = vunpack.c.l.b16 %v329
      %v402 = vunpack.c.l.b16 %v330
      %v403 = vunpack.c.l.b16 %v331
      %v404 = vunpack.c.l.b16 %v332
      %v405 = vunpack.c.l.b16 %v333
      %v406 = vunpack.c.l.b16 %v334
      %v407 = vunpack.c.l.b16 %v335
      %v408 = vunpack.c.l.b16 %v336
      %v409 = vunpack.c.l.b16 %v337
      %v410 = vunpack.c.l.b16 %v338
      %v411 = vunpack.c.l.b16 %v339
      %v412 = vunpack.c.l.b16 %v340
      %v413 = vunpack.c.l.b16 %v341
      %v414 = vunpack.c.l.b16 %v342
      %v415 = vunpack.c.l.b16 %v343
      %v416 = vunpack.c.l.b16 %v344
      %v417 = vunpack.c.l.b16 %v345
      %v418 = vunpack.c.l.b16 %v346
      %v419 = vunpack.c.l.b16 %v347
      %v420 = vunpack.c.l.b16 %v348
      %v421 = vunpack.c.l.b16 %v349
      %v422 = vunpack.c.l.b16 %v350
      %v423 = vunpack.c.l.b16 %v351
      %v424 = vunpack.c.l.b16 %v352
      %v425 = vunpack.c.l.b16 %v353
      %v426 = vunpack.c.l.b16 %v354
      %v427 = vunpack.c.l.b16 %v355
      %v428 = vunpack.c.l.b16 %v356
      %v429 = vunpack.c.l.b16 %v357
      %v430 = vunpack.c.l.b16 %v358
      %v431 = vunpack.c.l.b16 %v359
      %v432 = vpack.c.b16 %v401, %v400
      %v433 = vpack.c.b16 %v403, %v402
      %v434 = vpack.c.b16 %v405, %v404
      %v435 = vpack.c.b16 %v407, %v406
      %v436 = vpack.c.b16 %v409, %v408
      %v437 = vpack.c.b16 %v411, %v410
      %v438 = vpack.c.b16 %v413, %v412
      %v439 = vpack.c.b16 %v415, %v414
      %v440 = vpack.c.b16 %v417, %v416
      %v441 = vpack.c.b16 %v419, %v418
      %v442 = vpack.c.b16 %v421, %v420
      %v443 = vpack.c.b16 %v423, %v422
      %v444 = vpack.c.b16 %v425, %v424
      %v445 = vpack.c.b16 %v427, %v426
      %v446 = vpack.c.b16 %v429, %v428
      %v447 = vpack.c.b16 %v431, %v430
      %v456 = vunpack.c.l.b16 %v360
      %v457 = vunpack.c.l.b16 %v361
      %v458 = vunpack.c.l.b16 %v362
      %v459 = vunpack.c.l.b16 %v363
      %v460 = vunpack.c.l.b16 %v364
      %v461 = vunpack.c.l.b16 %v365
      %v462 = vunpack.c.l.b16 %v366
      %v463 = vunpack.c.l.b16 %v367
      %v464 = vpack.c.b16 %v457, %v456
      %v465 = vpack.c.b16 %v459, %v458
      %v466 = vpack.c.b16 %v461, %v460
      %v467 = vpack.c.b16 %v463, %v462
      %vm472 = vcmask 523264
      %v474 = vsel %vm472, %v432, 0
      %v477 = vsel %vm472, %v433, 0
      %v480 = vsel %vm472, %v434, 0
      %v483 = vsel %vm472, %v435, 0
      %v486 = vsel %vm472, %v436, 0
      %v489 = vsel %vm472, %v437, 0
      %v492 = vsel %vm472, %v438, 0
      %v495 = vsel %vm472, %v439, 0
      %v498 = vsel %vm472, %v440, 0
      %v501 = vsel %vm472, %v441, 0
      %v504 = vsel %vm472, %v442, 0
      %v507 = vsel %vm472, %v443, 0
      %v510 = vsel %vm472, %v444, 0
      %v513 = vsel %vm472, %v445, 0
      %v516 = vsel %vm472, %v446, 0
      %v519 = vsel %vm472, %v447, 0
      %521 = vmatpush.bf16.msra.mxu0 0
      %522 = vmatpush.bf16.msra.mxu0 0
      %523 = vmatpush.bf16.msra.mxu0 0
      %524 = vmatpush.bf16.msra.mxu0 0
      %525 = vmatpush.bf16.msra.mxu0 %v467
      %526 = vmatpush.bf16.msra.mxu0 %v466
      %527 = vmatpush.bf16.msra.mxu0 %v465
      %528 = vmatpush.bf16.msra.mxu0 %v464
      %529 = vmatmul.bf16.gmra.mxu0 %v474
      %v530 = vpop.f32.mrf.mxu0
      %v531 = vadd.f32 0.0, %v530
      %v532 = vpop.f32.mrf.mxu0
      %v533 = vadd.f32 0.0, %v532
      %534 = vmatmul.bf16.gmra.mxu0 %v477
      %v535 = vpop.f32.mrf.mxu0
      %v536 = vadd.f32 0.0, %v535
      %v537 = vpop.f32.mrf.mxu0
      %v538 = vadd.f32 0.0, %v537
      %539 = vmatmul.bf16.gmra.mxu0 %v480
      %v540 = vpop.f32.mrf.mxu0
      %v541 = vadd.f32 0.0, %v540
      %v542 = vpop.f32.mrf.mxu0
      %v543 = vadd.f32 0.0, %v542
      %544 = vmatmul.bf16.gmra.mxu0 %v483
      %v545 = vpop.f32.mrf.mxu0
      %v546 = vadd.f32 0.0, %v545
      %v547 = vpop.f32.mrf.mxu0
      %v548 = vadd.f32 0.0, %v547
      %549 = vmatmul.bf16.gmra.mxu0 %v486
      %v550 = vpop.f32.mrf.mxu0
      %v551 = vadd.f32 0.0, %v550
      %v552 = vpop.f32.mrf.mxu0
      %v553 = vadd.f32 0.0, %v552
      %554 = vmatmul.bf16.gmra.mxu0 %v489
      %v555 = vpop.f32.mrf.mxu0
      %v556 = vadd.f32 0.0, %v555
      %v557 = vpop.f32.mrf.mxu0
      %v558 = vadd.f32 0.0, %v557
      %559 = vmatmul.bf16.gmra.mxu0 %v492
      %v560 = vpop.f32.mrf.mxu0
      %v561 = vadd.f32 0.0, %v560
      %v562 = vpop.f32.mrf.mxu0
      %v563 = vadd.f32 0.0, %v562
      %564 = vmatmul.bf16.gmra.mxu0 %v495
      %v565 = vpop.f32.mrf.mxu0
      %v566 = vadd.f32 0.0, %v565
      %v567 = vpop.f32.mrf.mxu0
      %v568 = vadd.f32 0.0, %v567
      %569 = vmatmul.bf16.gmra.mxu0 %v498
      %v570 = vpop.f32.mrf.mxu0
      %v571 = vadd.f32 0.0, %v570
      %v572 = vpop.f32.mrf.mxu0
      %v573 = vadd.f32 0.0, %v572
      %574 = vmatmul.bf16.gmra.mxu0 %v501
      %v575 = vpop.f32.mrf.mxu0
      %v576 = vadd.f32 0.0, %v575
      %v577 = vpop.f32.mrf.mxu0
      %v578 = vadd.f32 0.0, %v577
      %579 = vmatmul.bf16.gmra.mxu0 %v504
      %v580 = vpop.f32.mrf.mxu0
      %v581 = vadd.f32 0.0, %v580
      %v582 = vpop.f32.mrf.mxu0
      %v583 = vadd.f32 0.0, %v582
      %584 = vmatmul.bf16.gmra.mxu0 %v507
      %v585 = vpop.f32.mrf.mxu0
      %v586 = vadd.f32 0.0, %v585
      %v587 = vpop.f32.mrf.mxu0
      %v588 = vadd.f32 0.0, %v587
      %589 = vmatmul.bf16.gmra.mxu0 %v510
      %v590 = vpop.f32.mrf.mxu0
      %v591 = vadd.f32 0.0, %v590
      %v592 = vpop.f32.mrf.mxu0
      %v593 = vadd.f32 0.0, %v592
      %594 = vmatmul.bf16.gmra.mxu0 %v513
      %v595 = vpop.f32.mrf.mxu0
      %v596 = vadd.f32 0.0, %v595
      %v597 = vpop.f32.mrf.mxu0
      %v598 = vadd.f32 0.0, %v597
      %599 = vmatmul.bf16.gmra.mxu0 %v516
      %v600 = vpop.f32.mrf.mxu0
      %v601 = vadd.f32 0.0, %v600
      %v602 = vpop.f32.mrf.mxu0
      %v603 = vadd.f32 0.0, %v602
      %604 = vmatmul.bf16.gmra.mxu0 %v519
      %v605 = vpop.f32.mrf.mxu0
      %v606 = vadd.f32 0.0, %v605
      %v607 = vpop.f32.mrf.mxu0
      %v608 = vadd.f32 0.0, %v607
      %609 = vdwg.mxu0
      %v610 = vadd.f32 %v296, %v531
      %v611 = vadd.f32 %v297, %v533
      %v612 = vadd.f32 %v298, %v536
      %v613 = vadd.f32 %v299, %v538
      %v614 = vadd.f32 %v300, %v541
      %v615 = vadd.f32 %v301, %v543
      %v616 = vadd.f32 %v302, %v546
      %v617 = vadd.f32 %v303, %v548
      %v618 = vadd.f32 %v304, %v551
      %v619 = vadd.f32 %v305, %v553
      %v620 = vadd.f32 %v306, %v556
      %v621 = vadd.f32 %v307, %v558
      %v622 = vadd.f32 %v308, %v561
      %v623 = vadd.f32 %v309, %v563
      %v624 = vadd.f32 %v310, %v566
      %v625 = vadd.f32 %v311, %v568
      %v626 = vadd.f32 %v312, %v571
      %v627 = vadd.f32 %v313, %v573
      %v628 = vadd.f32 %v314, %v576
      %v629 = vadd.f32 %v315, %v578
      %v630 = vadd.f32 %v316, %v581
      %v631 = vadd.f32 %v317, %v583
      %v632 = vadd.f32 %v318, %v586
      %v633 = vadd.f32 %v319, %v588
      %v634 = vadd.f32 %v320, %v591
      %v635 = vadd.f32 %v321, %v593
      %v636 = vadd.f32 %v322, %v596
      %v637 = vadd.f32 %v323, %v598
      %v638 = vadd.f32 %v324, %v601
      %v639 = vadd.f32 %v325, %v603
      %v640 = vadd.f32 %v326, %v606
      %v641 = vadd.f32 %v327, %v608
      %642 = vst [vmem:[#allocation2] sm:$0xff] %v610
      %643 = vst [vmem:[#allocation2 + $0x8] sm:$0xff] %v611
      %644 = vst [vmem:[#allocation2 + $0x10] sm:$0xff] %v612
      %645 = vst [vmem:[#allocation2 + $0x18] sm:$0xff] %v613
      %646 = vst [vmem:[#allocation2 + $0x20] sm:$0xff] %v614
      %647 = vst [vmem:[#allocation2 + $0x28] sm:$0xff] %v615
      %648 = vst [vmem:[#allocation2 + $0x30] sm:$0xff] %v616
      %649 = vst [vmem:[#allocation2 + $0x38] sm:$0xff] %v617
      %650 = vst [vmem:[#allocation2 + $0x40] sm:$0xff] %v618
      %651 = vst [vmem:[#allocation2 + $0x48] sm:$0xff] %v619
      %652 = vst [vmem:[#allocation2 + $0x50] sm:$0xff] %v620
      %653 = vst [vmem:[#allocation2 + $0x58] sm:$0xff] %v621
      %654 = vst [vmem:[#allocation2 + $0x60] sm:$0xff] %v622
      %655 = vst [vmem:[#allocation2 + $0x68] sm:$0xff] %v623
      %656 = vst [vmem:[#allocation2 + $0x70] sm:$0xff] %v624
      %657 = vst [vmem:[#allocation2 + $0x78] sm:$0xff] %v625
      %658 = vst [vmem:[#allocation2 + $0x80] sm:$0xff] %v626
      %659 = vst [vmem:[#allocation2 + $0x88] sm:$0xff] %v627
      %660 = vst [vmem:[#allocation2 + $0x90] sm:$0xff] %v628
      %661 = vst [vmem:[#allocation2 + $0x98] sm:$0xff] %v629
      %662 = vst [vmem:[#allocation2 + $0xa0] sm:$0xff] %v630
      %663 = vst [vmem:[#allocation2 + $0xa8] sm:$0xff] %v631
      %664 = vst [vmem:[#allocation2 + $0xb0] sm:$0xff] %v632
      %665 = vst [vmem:[#allocation2 + $0xb8] sm:$0xff] %v633
      %666 = vst [vmem:[#allocation2 + $0xc0] sm:$0xff] %v634
      %667 = vst [vmem:[#allocation2 + $0xc8] sm:$0xff] %v635
      %668 = vst [vmem:[#allocation2 + $0xd0] sm:$0xff] %v636
      %669 = vst [vmem:[#allocation2 + $0xd8] sm:$0xff] %v637
      %670 = vst [vmem:[#allocation2 + $0xe0] sm:$0xff] %v638
      %671 = vst [vmem:[#allocation2 + $0xe8] sm:$0xff] %v639
      %672 = vst [vmem:[#allocation2 + $0xf0] sm:$0xff] %v640
      %673 = vst [vmem:[#allocation2 + $0xf8] sm:$0xff] %v641
      // Predicated region
      $region37: #{_lambda_.63} parent=31 // pred_check
        %p674 = pneg %p260
      $region38: #{_lambda_.63} parent=31 // pred_check_branch
        %676 = sbr.rel (%p674) target = $region40
      $region39: #{_lambda_.63} parent=31 // pred_region
        %v677 = vld [vmem:[#allocation2] sm:$0xff]
        %v678 = vld [vmem:[#allocation2 + $0x8] sm:$0xff]
        %v679 = vld [vmem:[#allocation2 + $0x10] sm:$0xff]
        %v680 = vld [vmem:[#allocation2 + $0x18] sm:$0xff]
        %v681 = vld [vmem:[#allocation2 + $0x20] sm:$0xff]
        %v682 = vld [vmem:[#allocation2 + $0x28] sm:$0xff]
        %v683 = vld [vmem:[#allocation2 + $0x30] sm:$0xff]
        %v684 = vld [vmem:[#allocation2 + $0x38] sm:$0xff]
        %v685 = vld [vmem:[#allocation2 + $0x40] sm:$0xff]
        %v686 = vld [vmem:[#allocation2 + $0x48] sm:$0xff]
        %v687 = vld [vmem:[#allocation2 + $0x50] sm:$0xff]
        %v688 = vld [vmem:[#allocation2 + $0x58] sm:$0xff]
        %v689 = vld [vmem:[#allocation2 + $0x60] sm:$0xff]
        %v690 = vld [vmem:[#allocation2 + $0x68] sm:$0xff]
        %v691 = vld [vmem:[#allocation2 + $0x70] sm:$0xff]
        %v692 = vld [vmem:[#allocation2 + $0x78] sm:$0xff]
        %v693 = vld [vmem:[#allocation2 + $0x80] sm:$0xff]
        %v694 = vld [vmem:[#allocation2 + $0x88] sm:$0xff]
        %v695 = vld [vmem:[#allocation2 + $0x90] sm:$0xff]
        %v696 = vld [vmem:[#allocation2 + $0x98] sm:$0xff]
        %v697 = vld [vmem:[#allocation2 + $0xa0] sm:$0xff]
        %v698 = vld [vmem:[#allocation2 + $0xa8] sm:$0xff]
        %v699 = vld [vmem:[#allocation2 + $0xb0] sm:$0xff]
        %v700 = vld [vmem:[#allocation2 + $0xb8] sm:$0xff]
        %v701 = vld [vmem:[#allocation2 + $0xc0] sm:$0xff]
        %v702 = vld [vmem:[#allocation2 + $0xc8] sm:$0xff]
        %v703 = vld [vmem:[#allocation2 + $0xd0] sm:$0xff]
        %v704 = vld [vmem:[#allocation2 + $0xd8] sm:$0xff]
        %v705 = vld [vmem:[#allocation2 + $0xe0] sm:$0xff]
        %v706 = vld [vmem:[#allocation2 + $0xe8] sm:$0xff]
        %v707 = vld [vmem:[#allocation2 + $0xf0] sm:$0xff]
        %v708 = vld [vmem:[#allocation2 + $0xf8] sm:$0xff]
        %v709 = vld [vmem:[%s249] sm:$0x1]
        %v711 = vperm.slane %v709, 0
        %v713 = vadd.f32 %v677, %v711
        %v714 = vadd.f32 %v678, %v711
        %v715 = vadd.f32 %v679, %v711
        %v716 = vadd.f32 %v680, %v711
        %v717 = vadd.f32 %v681, %v711
        %v718 = vadd.f32 %v682, %v711
        %v719 = vadd.f32 %v683, %v711
        %v720 = vadd.f32 %v684, %v711
        %v721 = vadd.f32 %v685, %v711
        %v722 = vadd.f32 %v686, %v711
        %v723 = vadd.f32 %v687, %v711
        %v724 = vadd.f32 %v688, %v711
        %v725 = vadd.f32 %v689, %v711
        %v726 = vadd.f32 %v690, %v711
        %v727 = vadd.f32 %v691, %v711
        %v728 = vadd.f32 %v692, %v711
        %v729 = vadd.f32 %v693, %v711
        %v730 = vadd.f32 %v694, %v711
        %v731 = vadd.f32 %v695, %v711
        %v732 = vadd.f32 %v696, %v711
        %v733 = vadd.f32 %v697, %v711
        %v734 = vadd.f32 %v698, %v711
        %v735 = vadd.f32 %v699, %v711
        %v736 = vadd.f32 %v700, %v711
        %v737 = vadd.f32 %v701, %v711
        %v738 = vadd.f32 %v702, %v711
        %v739 = vadd.f32 %v703, %v711
        %v740 = vadd.f32 %v704, %v711
        %v741 = vadd.f32 %v705, %v711
        %v742 = vadd.f32 %v706, %v711
        %v743 = vadd.f32 %v707, %v711
        %v744 = vadd.f32 %v708, %v711
        %745 = vst [vmem:[%s257] sm:$0xff] %v713
        %746 = vst [vmem:[%s257 + $0x8] sm:$0xff] %v714
        %747 = vst [vmem:[%s257 + $0x10] sm:$0xff] %v715
        %748 = vst [vmem:[%s257 + $0x18] sm:$0xff] %v716
        %749 = vst [vmem:[%s257 + $0x20] sm:$0xff] %v717
        %750 = vst [vmem:[%s257 + $0x28] sm:$0xff] %v718
        %751 = vst [vmem:[%s257 + $0x30] sm:$0xff] %v719
        %752 = vst [vmem:[%s257 + $0x38] sm:$0xff] %v720
        %753 = vst [vmem:[%s257 + $0x40] sm:$0xff] %v721
        %754 = vst [vmem:[%s257 + $0x48] sm:$0xff] %v722
        %755 = vst [vmem:[%s257 + $0x50] sm:$0xff] %v723
        %756 = vst [vmem:[%s257 + $0x58] sm:$0xff] %v724
        %757 = vst [vmem:[%s257 + $0x60] sm:$0xff] %v725
        %758 = vst [vmem:[%s257 + $0x68] sm:$0xff] %v726
        %759 = vst [vmem:[%s257 + $0x70] sm:$0xff] %v727
        %760 = vst [vmem:[%s257 + $0x78] sm:$0xff] %v728
        %761 = vst [vmem:[%s257 + $0x80] sm:$0xff] %v729
        %762 = vst [vmem:[%s257 + $0x88] sm:$0xff] %v730
        %763 = vst [vmem:[%s257 + $0x90] sm:$0xff] %v731
        %764 = vst [vmem:[%s257 + $0x98] sm:$0xff] %v732
        %765 = vst [vmem:[%s257 + $0xa0] sm:$0xff] %v733
        %766 = vst [vmem:[%s257 + $0xa8] sm:$0xff] %v734
        %767 = vst [vmem:[%s257 + $0xb0] sm:$0xff] %v735
        %768 = vst [vmem:[%s257 + $0xb8] sm:$0xff] %v736
        %769 = vst [vmem:[%s257 + $0xc0] sm:$0xff] %v737
        %770 = vst [vmem:[%s257 + $0xc8] sm:$0xff] %v738
        %771 = vst [vmem:[%s257 + $0xd0] sm:$0xff] %v739
        %772 = vst [vmem:[%s257 + $0xd8] sm:$0xff] %v740
        %773 = vst [vmem:[%s257 + $0xe0] sm:$0xff] %v741
        %774 = vst [vmem:[%s257 + $0xe8] sm:$0xff] %v742
        %775 = vst [vmem:[%s257 + $0xf0] sm:$0xff] %v743
        %776 = vst [vmem:[%s257 + $0xf8] sm:$0xff] %v744
      $region40: #{_lambda_.63} parent=31 // pred_fallthru
        _
      %s777 = smul.u32 32, %s19
      %p778 = scmp.lt.s32.totalorder %s777, 63
      %s779 = scalar_select %p778, %s777, 63
      %p780 = scmp.lt.s32.totalorder %s20, 0
      %s781 = scalar_select %p780, %s20, 0
      %s782 = sadd.s32 %s781, %s779
      %s783 = smul.addr %s782, 8
      %s784 = scalar_lea.vmem %s3, %s783
      // Predicated region
      $region41: #{_lambda_.63} parent=31 // pred_check
        %p785 = pneg %p135
      $region42: #{_lambda_.63} parent=31 // pred_check_branch
        %787 = sbr.rel (%p785) target = $region44
      $region43: #{_lambda_.63} parent=31 // pred_region
        %s788 = smul.u32 32, %s19
      $region44: #{_lambda_.63} parent=31 // pred_fallthru
        _
    $region32: #{_lambda_.63} parent=5 // pred_fallthru
      _
    %p789 = scmp.le.s32.totalorder 2, %s9
    // Predicated region
    $region45: #{_lambda_.63} parent=5 // pred_check
      %p790 = pneg %p789
    $region46: #{_lambda_.63} parent=5 // pred_check_branch
      %792 = sbr.rel (%p790) target = $region48
    $region47: #{_lambda_.63} parent=5 // pred_region
      %s793 = ssub.s32 %s9, 2
      // Predicated region
      $region49: #{_lambda_.63} parent=47 // pred_check
        %p794 = pneg %p141
      $region50: #{_lambda_.63} parent=47 // pred_check_branch
        %796 = sbr.rel (%p794) target = $region52
      $region51: #{_lambda_.63} parent=47 // pred_region
        %s797 = smul.u32 32, %s22
        %p798 = scmp.lt.s32.totalorder %s797, 63
        %s799 = scalar_select %p798, %s797, 63
        %p800 = scmp.lt.s32.totalorder %s23, 0
        %s801 = scalar_select %p800, %s23, 0
        %s802 = sadd.s32 %s801, %s799
        %s803 = smul.addr %s802, 8
        %s804 = scalar_lea.vmem %s3, %s803
      $region52: #{_lambda_.63} parent=47 // pred_fallthru
        _
    $region48: #{_lambda_.63} parent=5 // pred_fallthru
      _
  $region6: #{_lambda_.63} parent=0 // loop_footer
    %s13 = sadd.s32 1, %s9
  $region7: #{_lambda_.63} parent=0 // loop_footer_branch
    %8 = sbr.rel target = $region3
  $region8: #{_lambda_.63} parent=0 // loop_exit
    _

// kernel: _lambda_.64
$region0: #{_lambda_.64}
  #allocation0 [shape = 'u32[]', space=smem, size = 0x4, offset = 0x4, fixed_abs, tag = 'smem constant byte address 0x4 - core index']
  #allocation1 [shape = 'u32[72,128]{1,0:T(1,128)}', space=vmem, size = 0x9000, scoped, tag = 'internal scratch']
  #allocation2 [shape = 'f32[128,128]{1,0:T(8,128)}', space=vmem, size = 0x10000, scoped, tag = 'scratch operand']
  %s0 = inlined_call_operand.vmem [shape: bf16[128,128], index: 0, kind: input, shape index: {}]
  %s1 = inlined_call_operand.vmem [shape: bf16[128,128], index: 1, kind: input, shape index: {}]
  %s2 = inlined_call_operand.vmem [shape: f32[1,128], index: 2, kind: input, shape index: {}]
  %s3 = inlined_call_operand.vmem [shape: f32[128,128], index: 3, kind: output, shape index: {}]
  %s4 = sld [smem:[#allocation0]]
  $region30: #{_lambda_.64} parent=0
    _
  %s6 = ssub.s32 1, %s4
  %s7 = scalar_select 0, %s6, %s4
  // Predicated region
  $region2: #{_lambda_.64} parent=0 // pred_check
    _
  $region3: #{_lambda_.64} parent=0 // pred_check_branch
    %9 = sbr.rel (0) target = $region5
  $region4: #{_lambda_.64} parent=0 // pred_region
    _
  $region5: #{_lambda_.64} parent=0 // pred_fallthru
    _
  // Predicated region
  $region6: #{_lambda_.64} parent=0 // pred_check
    _
  $region7: #{_lambda_.64} parent=0 // pred_check_branch
    %11 = sbr.rel (0) target = $region9
  $region8: #{_lambda_.64} parent=0 // pred_region
    _
  $region9: #{_lambda_.64} parent=0 // pred_fallthru
    _
  // Predicated region
  $region10: #{_lambda_.64} parent=0 // pred_check
    _
  $region11: #{_lambda_.64} parent=0 // pred_check_branch
    %13 = sbr.rel (0) target = $region13
  $region12: #{_lambda_.64} parent=0 // pred_region
    _
  $region13: #{_lambda_.64} parent=0 // pred_fallthru
    _
  %p14 = scmp.eq.s32.totalorder 0, 0
  // Predicated region
  $region14: #{_lambda_.64} parent=0 // pred_check
    %p15 = pneg %p14
  $region15: #{_lambda_.64} parent=0 // pred_check_branch
    %17 = sbr.rel (%p15) target = $region17
  $region16: #{_lambda_.64} parent=0 // pred_region
    %18 = vst [vmem:[#allocation2] sm:$0xff] 0.0
    %19 = vst [vmem:[#allocation2 + $0x8] sm:$0xff] 0.0
    %20 = vst [vmem:[#allocation2 + $0x10] sm:$0xff] 0.0
    %21 = vst [vmem:[#allocation2 + $0x18] sm:$0xff] 0.0
    %22 = vst [vmem:[#allocation2 + $0x20] sm:$0xff] 0.0
    %23 = vst [vmem:[#allocation2 + $0x28] sm:$0xff] 0.0
    %24 = vst [vmem:[#allocation2 + $0x30] sm:$0xff] 0.0
    %25 = vst [vmem:[#allocation2 + $0x38] sm:$0xff] 0.0
    %26 = vst [vmem:[#allocation2 + $0x40] sm:$0xff] 0.0
    %27 = vst [vmem:[#allocation2 + $0x48] sm:$0xff] 0.0
    %28 = vst [vmem:[#allocation2 + $0x50] sm:$0xff] 0.0
    %29 = vst [vmem:[#allocation2 + $0x58] sm:$0xff] 0.0
    %30 = vst [vmem:[#allocation2 + $0x60] sm:$0xff] 0.0
    %31 = vst [vmem:[#allocation2 + $0x68] sm:$0xff] 0.0
    %32 = vst [vmem:[#allocation2 + $0x70] sm:$0xff] 0.0
    %33 = vst [vmem:[#allocation2 + $0x78] sm:$0xff] 0.0
  $region17: #{_lambda_.64} parent=0 // pred_fallthru
    _
  %v34 = vld [vmem:[#allocation2] sm:$0xff]
  %v35 = vld [vmem:[#allocation2 + $0x8] sm:$0xff]
  %v36 = vld [vmem:[#allocation2 + $0x10] sm:$0xff]
  %v37 = vld [vmem:[#allocation2 + $0x18] sm:$0xff]
  %v38 = vld [vmem:[#allocation2 + $0x20] sm:$0xff]
  %v39 = vld [vmem:[#allocation2 + $0x28] sm:$0xff]
  %v40 = vld [vmem:[#allocation2 + $0x30] sm:$0xff]
  %v41 = vld [vmem:[#allocation2 + $0x38] sm:$0xff]
  %v42 = vld [vmem:[#allocation2 + $0x40] sm:$0xff]
  %v43 = vld [vmem:[#allocation2 + $0x48] sm:$0xff]
  %v44 = vld [vmem:[#allocation2 + $0x50] sm:$0xff]
  %v45 = vld [vmem:[#allocation2 + $0x58] sm:$0xff]
  %v46 = vld [vmem:[#allocation2 + $0x60] sm:$0xff]
  %v47 = vld [vmem:[#allocation2 + $0x68] sm:$0xff]
  %v48 = vld [vmem:[#allocation2 + $0x70] sm:$0xff]
  %v49 = vld [vmem:[#allocation2 + $0x78] sm:$0xff]
  %v50 = vld [vmem:[%s0] sm:$0xf]
  %v51 = vld [vmem:[%s0 + $0x4] sm:$0xf]
  %v52 = vld [vmem:[%s0 + $0x8] sm:$0xf]
  %v53 = vld [vmem:[%s0 + $0xc] sm:$0xf]
  %v54 = vld [vmem:[%s0 + $0x10] sm:$0xf]
  %v55 = vld [vmem:[%s0 + $0x14] sm:$0xf]
  %v56 = vld [vmem:[%s0 + $0x18] sm:$0xf]
  %v57 = vld [vmem:[%s0 + $0x1c] sm:$0xf]
  %v58 = vld [vmem:[%s0 + $0x20] sm:$0xf]
  %v59 = vld [vmem:[%s0 + $0x24] sm:$0xf]
  %v60 = vld [vmem:[%s0 + $0x28] sm:$0xf]
  %v61 = vld [vmem:[%s0 + $0x2c] sm:$0xf]
  %v62 = vld [vmem:[%s0 + $0x30] sm:$0xf]
  %v63 = vld [vmem:[%s0 + $0x34] sm:$0xf]
  %v64 = vld [vmem:[%s0 + $0x38] sm:$0xf]
  %v65 = vld [vmem:[%s0 + $0x3c] sm:$0xf]
  %v66 = vld [vmem:[%s1] sm:$0xf]
  %v67 = vld [vmem:[%s1 + $0x4] sm:$0xf]
  %v68 = vld [vmem:[%s1 + $0x8] sm:$0xf]
  %v69 = vld [vmem:[%s1 + $0xc] sm:$0xf]
  %v70 = vld [vmem:[%s1 + $0x10] sm:$0xf]
  %v71 = vld [vmem:[%s1 + $0x14] sm:$0xf]
  %v72 = vld [vmem:[%s1 + $0x18] sm:$0xf]
  %v73 = vld [vmem:[%s1 + $0x1c] sm:$0xf]
  %v74 = vld [vmem:[%s1 + $0x20] sm:$0xf]
  %v75 = vld [vmem:[%s1 + $0x24] sm:$0xf]
  %v76 = vld [vmem:[%s1 + $0x28] sm:$0xf]
  %v77 = vld [vmem:[%s1 + $0x2c] sm:$0xf]
  %v78 = vld [vmem:[%s1 + $0x30] sm:$0xf]
  %v79 = vld [vmem:[%s1 + $0x34] sm:$0xf]
  %v80 = vld [vmem:[%s1 + $0x38] sm:$0xf]
  %v81 = vld [vmem:[%s1 + $0x3c] sm:$0xf]
  %v98 = vunpack.c.l.b16 %v50
  %v99 = vunpack.c.l.b16 %v51
  %v100 = vunpack.c.l.b16 %v52
  %v101 = vunpack.c.l.b16 %v53
  %v102 = vunpack.c.l.b16 %v54
  %v103 = vunpack.c.l.b16 %v55
  %v104 = vunpack.c.l.b16 %v56
  %v105 = vunpack.c.l.b16 %v57
  %v106 = vunpack.c.l.b16 %v58
  %v107 = vunpack.c.l.b16 %v59
  %v108 = vunpack.c.l.b16 %v60
  %v109 = vunpack.c.l.b16 %v61
  %v110 = vunpack.c.l.b16 %v62
  %v111 = vunpack.c.l.b16 %v63
  %v112 = vunpack.c.l.b16 %v64
  %v113 = vunpack.c.l.b16 %v65
  %v114 = vpack.c.b16 %v99, %v98
  %v115 = vpack.c.b16 %v101, %v100
  %v116 = vpack.c.b16 %v103, %v102
  %v117 = vpack.c.b16 %v105, %v104
  %v118 = vpack.c.b16 %v107, %v106
  %v119 = vpack.c.b16 %v109, %v108
  %v120 = vpack.c.b16 %v111, %v110
  %v121 = vpack.c.b16 %v113, %v112
  %v146 = vunpack.c.l.b16 %v66
  %v147 = vunpack.c.l.b16 %v67
  %v148 = vunpack.c.l.b16 %v68
  %v149 = vunpack.c.l.b16 %v69
  %v150 = vunpack.c.l.b16 %v70
  %v151 = vunpack.c.l.b16 %v71
  %v152 = vunpack.c.l.b16 %v72
  %v153 = vunpack.c.l.b16 %v73
  %v154 = vunpack.c.l.b16 %v74
  %v155 = vunpack.c.l.b16 %v75
  %v156 = vunpack.c.l.b16 %v76
  %v157 = vunpack.c.l.b16 %v77
  %v158 = vunpack.c.l.b16 %v78
  %v159 = vunpack.c.l.b16 %v79
  %v160 = vunpack.c.l.b16 %v80
  %v161 = vunpack.c.l.b16 %v81
  %v162 = vpack.c.b16 %v147, %v146
  %v163 = vpack.c.b16 %v149, %v148
  %v164 = vpack.c.b16 %v151, %v150
  %v165 = vpack.c.b16 %v153, %v152
  %v166 = vpack.c.b16 %v155, %v154
  %v167 = vpack.c.b16 %v157, %v156
  %v168 = vpack.c.b16 %v159, %v158
  %v169 = vpack.c.b16 %v161, %v160
  %178 = vmatpush.bf16.msra.mxu0 %v169
  %179 = vmatpush.bf16.msra.mxu0 %v168
  %180 = vmatpush.bf16.msra.mxu0 %v167
  %181 = vmatpush.bf16.msra.mxu0 %v166
  %182 = vmatpush.bf16.msra.mxu0 %v165
  %183 = vmatpush.bf16.msra.mxu0 %v164
  %184 = vmatpush.bf16.msra.mxu0 %v163
  %185 = vmatpush.bf16.msra.mxu0 %v162
  %186 = vmatmul.bf16.gmra.mxu0 %v114
  %v187 = vpop.f32.mrf.mxu0
  %v188 = vadd.f32 0.0, %v187
  %v189 = vpop.f32.mrf.mxu0
  %v190 = vadd.f32 0.0, %v189
  %191 = vmatmul.bf16.gmra.mxu0 %v115
  %v192 = vpop.f32.mrf.mxu0
  %v193 = vadd.f32 0.0, %v192
  %v194 = vpop.f32.mrf.mxu0
  %v195 = vadd.f32 0.0, %v194
  %196 = vmatmul.bf16.gmra.mxu0 %v116
  %v197 = vpop.f32.mrf.mxu0
  %v198 = vadd.f32 0.0, %v197
  %v199 = vpop.f32.mrf.mxu0
  %v200 = vadd.f32 0.0, %v199
  %201 = vmatmul.bf16.gmra.mxu0 %v117
  %v202 = vpop.f32.mrf.mxu0
  %v203 = vadd.f32 0.0, %v202
  %v204 = vpop.f32.mrf.mxu0
  %v205 = vadd.f32 0.0, %v204
  %206 = vmatmul.bf16.gmra.mxu0 %v118
  %v207 = vpop.f32.mrf.mxu0
  %v208 = vadd.f32 0.0, %v207
  %v209 = vpop.f32.mrf.mxu0
  %v210 = vadd.f32 0.0, %v209
  %211 = vmatmul.bf16.gmra.mxu0 %v119
  %v212 = vpop.f32.mrf.mxu0
  %v213 = vadd.f32 0.0, %v212
  %v214 = vpop.f32.mrf.mxu0
  %v215 = vadd.f32 0.0, %v214
  %216 = vmatmul.bf16.gmra.mxu0 %v120
  %v217 = vpop.f32.mrf.mxu0
  %v218 = vadd.f32 0.0, %v217
  %v219 = vpop.f32.mrf.mxu0
  %v220 = vadd.f32 0.0, %v219
  %221 = vmatmul.bf16.gmra.mxu0 %v121
  %v222 = vpop.f32.mrf.mxu0
  %v223 = vadd.f32 0.0, %v222
  %v224 = vpop.f32.mrf.mxu0
  %v225 = vadd.f32 0.0, %v224
  %226 = vdwg.mxu0
  %v227 = vadd.f32 %v34, %v188
  %v228 = vadd.f32 %v35, %v190
  %v229 = vadd.f32 %v36, %v193
  %v230 = vadd.f32 %v37, %v195
  %v231 = vadd.f32 %v38, %v198
  %v232 = vadd.f32 %v39, %v200
  %v233 = vadd.f32 %v40, %v203
  %v234 = vadd.f32 %v41, %v205
  %v235 = vadd.f32 %v42, %v208
  %v236 = vadd.f32 %v43, %v210
  %v237 = vadd.f32 %v44, %v213
  %v238 = vadd.f32 %v45, %v215
  %v239 = vadd.f32 %v46, %v218
  %v240 = vadd.f32 %v47, %v220
  %v241 = vadd.f32 %v48, %v223
  %v242 = vadd.f32 %v49, %v225
  %243 = vst [vmem:[#allocation2] sm:$0xff] %v227
  %244 = vst [vmem:[#allocation2 + $0x8] sm:$0xff] %v228
  %245 = vst [vmem:[#allocation2 + $0x10] sm:$0xff] %v229
  %246 = vst [vmem:[#allocation2 + $0x18] sm:$0xff] %v230
  %247 = vst [vmem:[#allocation2 + $0x20] sm:$0xff] %v231
  %248 = vst [vmem:[#allocation2 + $0x28] sm:$0xff] %v232
  %249 = vst [vmem:[#allocation2 + $0x30] sm:$0xff] %v233
  %250 = vst [vmem:[#allocation2 + $0x38] sm:$0xff] %v234
  %251 = vst [vmem:[#allocation2 + $0x40] sm:$0xff] %v235
  %252 = vst [vmem:[#allocation2 + $0x48] sm:$0xff] %v236
  %253 = vst [vmem:[#allocation2 + $0x50] sm:$0xff] %v237
  %254 = vst [vmem:[#allocation2 + $0x58] sm:$0xff] %v238
  %255 = vst [vmem:[#allocation2 + $0x60] sm:$0xff] %v239
  %256 = vst [vmem:[#allocation2 + $0x68] sm:$0xff] %v240
  %257 = vst [vmem:[#allocation2 + $0x70] sm:$0xff] %v241
  %258 = vst [vmem:[#allocation2 + $0x78] sm:$0xff] %v242
  // Predicated region
  $region18: #{_lambda_.64} parent=0 // pred_check
    %p259 = pneg %p14
  $region19: #{_lambda_.64} parent=0 // pred_check_branch
    %261 = sbr.rel (%p259) target = $region21
  $region20: #{_lambda_.64} parent=0 // pred_region
    %v262 = vld [vmem:[#allocation2] sm:$0xff]
    %v263 = vld [vmem:[#allocation2 + $0x8] sm:$0xff]
    %v264 = vld [vmem:[#allocation2 + $0x10] sm:$0xff]
    %v265 = vld [vmem:[#allocation2 + $0x18] sm:$0xff]
    %v266 = vld [vmem:[#allocation2 + $0x20] sm:$0xff]
    %v267 = vld [vmem:[#allocation2 + $0x28] sm:$0xff]
    %v268 = vld [vmem:[#allocation2 + $0x30] sm:$0xff]
    %v269 = vld [vmem:[#allocation2 + $0x38] sm:$0xff]
    %v270 = vld [vmem:[#allocation2 + $0x40] sm:$0xff]
    %v271 = vld [vmem:[#allocation2 + $0x48] sm:$0xff]
    %v272 = vld [vmem:[#allocation2 + $0x50] sm:$0xff]
    %v273 = vld [vmem:[#allocation2 + $0x58] sm:$0xff]
    %v274 = vld [vmem:[#allocation2 + $0x60] sm:$0xff]
    %v275 = vld [vmem:[#allocation2 + $0x68] sm:$0xff]
    %v276 = vld [vmem:[#allocation2 + $0x70] sm:$0xff]
    %v277 = vld [vmem:[#allocation2 + $0x78] sm:$0xff]
    %v278 = vld [vmem:[%s2] sm:$0x1]
    %v280 = vperm.slane %v278, 0
    %v282 = vadd.f32 %v262, %v280
    %v283 = vadd.f32 %v263, %v280
    %v284 = vadd.f32 %v264, %v280
    %v285 = vadd.f32 %v265, %v280
    %v286 = vadd.f32 %v266, %v280
    %v287 = vadd.f32 %v267, %v280
    %v288 = vadd.f32 %v268, %v280
    %v289 = vadd.f32 %v269, %v280
    %v290 = vadd.f32 %v270, %v280
    %v291 = vadd.f32 %v271, %v280
    %v292 = vadd.f32 %v272, %v280
    %v293 = vadd.f32 %v273, %v280
    %v294 = vadd.f32 %v274, %v280
    %v295 = vadd.f32 %v275, %v280
    %v296 = vadd.f32 %v276, %v280
    %v297 = vadd.f32 %v277, %v280
    %298 = vst [vmem:[%s3] sm:$0xff] %v282
    %299 = vst [vmem:[%s3 + $0x8] sm:$0xff] %v283
    %300 = vst [vmem:[%s3 + $0x10] sm:$0xff] %v284
    %301 = vst [vmem:[%s3 + $0x18] sm:$0xff] %v285
    %302 = vst [vmem:[%s3 + $0x20] sm:$0xff] %v286
    %303 = vst [vmem:[%s3 + $0x28] sm:$0xff] %v287
    %304 = vst [vmem:[%s3 + $0x30] sm:$0xff] %v288
    %305 = vst [vmem:[%s3 + $0x38] sm:$0xff] %v289
    %306 = vst [vmem:[%s3 + $0x40] sm:$0xff] %v290
    %307 = vst [vmem:[%s3 + $0x48] sm:$0xff] %v291
    %308 = vst [vmem:[%s3 + $0x50] sm:$0xff] %v292
    %309 = vst [vmem:[%s3 + $0x58] sm:$0xff] %v293
    %310 = vst [vmem:[%s3 + $0x60] sm:$0xff] %v294
    %311 = vst [vmem:[%s3 + $0x68] sm:$0xff] %v295
    %312 = vst [vmem:[%s3 + $0x70] sm:$0xff] %v296
    %313 = vst [vmem:[%s3 + $0x78] sm:$0xff] %v297
  $region21: #{_lambda_.64} parent=0 // pred_fallthru
    _
  // Predicated region
  $region22: #{_lambda_.64} parent=0 // pred_check
    _
  $region23: #{_lambda_.64} parent=0 // pred_check_branch
    %315 = sbr.rel (0) target = $region25
  $region24: #{_lambda_.64} parent=0 // pred_region
    _
  $region25: #{_lambda_.64} parent=0 // pred_fallthru
    _
  // Predicated region
  $region26: #{_lambda_.64} parent=0 // pred_check
    _
  $region27: #{_lambda_.64} parent=0 // pred_check_branch
    %317 = sbr.rel (0) target = $region29
  $region28: #{_lambda_.64} parent=0 // pred_region
    _
  $region29: #{_lambda_.64} parent=0 // pred_fallthru
    _

// kernel: _lambda_.65
$region0: #{_lambda_.65}
  #allocation0 [shape = 'u32[]', space=smem, size = 0x4, offset = 0x4, fixed_abs, tag = 'smem constant byte address 0x4 - core index']
  #allocation1 [shape = 'u32[72,128]{1,0:T(1,128)}', space=vmem, size = 0x9000, scoped, tag = 'internal scratch']
  %s0 = inlined_call_operand.vmem [shape: f32[128,128], index: 0, kind: input, shape index: {}]
  %s1 = inlined_call_operand.vmem [shape: f32[8,128], index: 1, kind: output, shape index: {0}]
  %s2 = inlined_call_operand.vmem [shape: f32[8,128], index: 2, kind: output, shape index: {1}]
  %3 = xla_tuple %s1, %s2
  %s4 = sld [smem:[#allocation0]]
  $region26: #{_lambda_.65} parent=0
    _
  %s6 = ssub.s32 1, %s4
  %s7 = scalar_select 0, %s6, %s4
  // Predicated region
  $region2: #{_lambda_.65} parent=0 // pred_check
    _
  $region3: #{_lambda_.65} parent=0 // pred_check_branch
    %9 = sbr.rel (0) target = $region5
  $region4: #{_lambda_.65} parent=0 // pred_region
    _
  $region5: #{_lambda_.65} parent=0 // pred_fallthru
    _
  %p10 = scmp.eq.s32.totalorder 0, 0
  // Predicated region
  $region6: #{_lambda_.65} parent=0 // pred_check
    %p11 = pneg %p10
  $region7: #{_lambda_.65} parent=0 // pred_check_branch
    %13 = sbr.rel (%p11) target = $region9
  $region8: #{_lambda_.65} parent=0 // pred_region
    %14 = vst [vmem:[%s1] sm:$0xff] 0.0
    %15 = vst [vmem:[%s2] sm:$0xff] 0.0
  $region9: #{_lambda_.65} parent=0 // pred_fallthru
    _
  %v16 = vld [vmem:[%s0] sm:$0xff]
  %v17 = vld [vmem:[%s0 + $0x8] sm:$0xff]
  %v18 = vld [vmem:[%s0 + $0x10] sm:$0xff]
  %v19 = vld [vmem:[%s0 + $0x18] sm:$0xff]
  %v20 = vld [vmem:[%s0 + $0x20] sm:$0xff]
  %v21 = vld [vmem:[%s0 + $0x28] sm:$0xff]
  %v22 = vld [vmem:[%s0 + $0x30] sm:$0xff]
  %v23 = vld [vmem:[%s0 + $0x38] sm:$0xff]
  %v24 = vld [vmem:[%s0 + $0x40] sm:$0xff]
  %v25 = vld [vmem:[%s0 + $0x48] sm:$0xff]
  %v26 = vld [vmem:[%s0 + $0x50] sm:$0xff]
  %v27 = vld [vmem:[%s0 + $0x58] sm:$0xff]
  %v28 = vld [vmem:[%s0 + $0x60] sm:$0xff]
  %v29 = vld [vmem:[%s0 + $0x68] sm:$0xff]
  %v30 = vld [vmem:[%s0 + $0x70] sm:$0xff]
  %v31 = vld [vmem:[%s0 + $0x78] sm:$0xff]
  %v32 = vld [vmem:[%s1] sm:$0xff]
  %v33 = vadd.f32 %v16, %v17
  %v34 = vadd.f32 %v33, %v18
  %v35 = vadd.f32 %v34, %v19
  %v36 = vadd.f32 %v35, %v20
  %v37 = vadd.f32 %v36, %v21
  %v38 = vadd.f32 %v37, %v22
  %v39 = vadd.f32 %v38, %v23
  %v40 = vadd.f32 %v39, %v24
  %v41 = vadd.f32 %v40, %v25
  %v42 = vadd.f32 %v41, %v26
  %v43 = vadd.f32 %v42, %v27
  %v44 = vadd.f32 %v43, %v28
  %v45 = vadd.f32 %v44, %v29
  %v46 = vadd.f32 %v45, %v30
  %v47 = vadd.f32 %v46, %v31
  %v48 = vrot.slane %v47, 4
  %v49 = vadd.f32 %v47, %v48
  %v50 = vrot.slane %v49, 2
  %v51 = vadd.f32 %v49, %v50
  %v52 = vrot.slane %v51, 1
  %v53 = vadd.f32 %v51, %v52
  %v54 = vadd.f32 %v32, %v53
  %55 = vst [vmem:[%s1] sm:$0xff] %v54
  %v56 = vld [vmem:[%s2] sm:$0xff]
  %v57 = vmul.f32 %v16, %v16
  %v58 = vmul.f32 %v17, %v17
  %v59 = vmul.f32 %v18, %v18
  %v60 = vmul.f32 %v19, %v19
  %v61 = vmul.f32 %v20, %v20
  %v62 = vmul.f32 %v21, %v21
  %v63 = vmul.f32 %v22, %v22
  %v64 = vmul.f32 %v23, %v23
  %v65 = vmul.f32 %v24, %v24
  %v66 = vmul.f32 %v25, %v25
  %v67 = vmul.f32 %v26, %v26
  %v68 = vmul.f32 %v27, %v27
  %v69 = vmul.f32 %v28, %v28
  %v70 = vmul.f32 %v29, %v29
  %v71 = vmul.f32 %v30, %v30
  %v72 = vmul.f32 %v31, %v31
  %v73 = vadd.f32 %v57, %v58
  %v74 = vadd.f32 %v73, %v59
  %v75 = vadd.f32 %v74, %v60
  %v76 = vadd.f32 %v75, %v61
  %v77 = vadd.f32 %v76, %v62
  %v78 = vadd.f32 %v77, %v63
  %v79 = vadd.f32 %v78, %v64
  %v80 = vadd.f32 %v79, %v65
  %v81 = vadd.f32 %v80, %v66
  %v82 = vadd.f32 %v81, %v67
  %v83 = vadd.f32 %v82, %v68
  %v84 = vadd.f32 %v83, %v69
  %v85 = vadd.f32 %v84, %v70
  %v86 = vadd.f32 %v85, %v71
  %v87 = vadd.f32 %v86, %v72
  %v88 = vrot.slane %v87, 4
  %v89 = vadd.f32 %v87, %v88
  %v90 = vrot.slane %v89, 2
  %v91 = vadd.f32 %v89, %v90
  %v92 = vrot.slane %v91, 1
  %v93 = vadd.f32 %v91, %v92
  %v94 = vadd.f32 %v56, %v93
  %95 = vst [vmem:[%s2] sm:$0xff] %v94
  // Predicated region
  $region10: #{_lambda_.65} parent=0 // pred_check
    _
  $region11: #{_lambda_.65} parent=0 // pred_check_branch
    %97 = sbr.rel (0) target = $region13
  $region12: #{_lambda_.65} parent=0 // pred_region
    _
  $region13: #{_lambda_.65} parent=0 // pred_fallthru
    _
  // Predicated region
  $region14: #{_lambda_.65} parent=0 // pred_check
    _
  $region15: #{_lambda_.65} parent=0 // pred_check_branch
    %99 = sbr.rel (0) target = $region17
  $region16: #{_lambda_.65} parent=0 // pred_region
    _
  $region17: #{_lambda_.65} parent=0 // pred_fallthru
    _
  // Predicated region
  $region18: #{_lambda_.65} parent=0 // pred_check
    _
  $region19: #{_lambda_.65} parent=0 // pred_check_branch
    %101 = sbr.rel (0) target = $region21
  $region20: #{_lambda_.65} parent=0 // pred_region
    _
  $region21: #{_lambda_.65} parent=0 // pred_fallthru
    _
  // Predicated region
  $region22: #{_lambda_.65} parent=0 // pred_check
    _
  $region23: #{_lambda_.65} parent=0 // pred_check_branch
    %103 = sbr.rel (0) target = $region25
  $region24: #{_lambda_.65} parent=0 // pred_region
    _
  $region25: #{_lambda_.65} parent=0 // pred_fallthru
    _

// kernel: _lambda_.66
$region0: #{_lambda_.66}
  #allocation0 [shape = 'u32[]', space=smem, size = 0x4, offset = 0x4, fixed_abs, tag = 'smem constant byte address 0x4 - core index']
  #allocation1 [shape = 'u32[72,128]{1,0:T(1,128)}', space=vmem, size = 0x9000, scoped, tag = 'internal scratch']
  %s0 = inlined_call_operand.vmem [shape: f32[128,128], index: 0, kind: input, shape index: {}]
  %s1 = inlined_call_operand.vmem [shape: f32[1,128], index: 1, kind: input, shape index: {}]
  %s2 = inlined_call_operand.vmem [shape: f32[1,128], index: 2, kind: input, shape index: {}]
  %s3 = inlined_call_operand.vmem [shape: f32[128,128], index: 3, kind: output, shape index: {}]
  %s4 = sld [smem:[#allocation0]]
  $region22: #{_lambda_.66} parent=0
    _
  %s6 = ssub.s32 1, %s4
  %s7 = scalar_select 0, %s6, %s4
  // Predicated region
  $region2: #{_lambda_.66} parent=0 // pred_check
    _
  $region3: #{_lambda_.66} parent=0 // pred_check_branch
    %9 = sbr.rel (0) target = $region5
  $region4: #{_lambda_.66} parent=0 // pred_region
    _
  $region5: #{_lambda_.66} parent=0 // pred_fallthru
    _
  // Predicated region
  $region6: #{_lambda_.66} parent=0 // pred_check
    _
  $region7: #{_lambda_.66} parent=0 // pred_check_branch
    %11 = sbr.rel (0) target = $region9
  $region8: #{_lambda_.66} parent=0 // pred_region
    _
  $region9: #{_lambda_.66} parent=0 // pred_fallthru
    _
  // Predicated region
  $region10: #{_lambda_.66} parent=0 // pred_check
    _
  $region11: #{_lambda_.66} parent=0 // pred_check_branch
    %13 = sbr.rel (0) target = $region13
  $region12: #{_lambda_.66} parent=0 // pred_region
    _
  $region13: #{_lambda_.66} parent=0 // pred_fallthru
    _
  %v14 = vld [vmem:[%s0] sm:$0xff]
  %v15 = vld [vmem:[%s0 + $0x8] sm:$0xff]
  %v16 = vld [vmem:[%s0 + $0x10] sm:$0xff]
  %v17 = vld [vmem:[%s0 + $0x18] sm:$0xff]
  %v18 = vld [vmem:[%s0 + $0x20] sm:$0xff]
  %v19 = vld [vmem:[%s0 + $0x28] sm:$0xff]
  %v20 = vld [vmem:[%s0 + $0x30] sm:$0xff]
  %v21 = vld [vmem:[%s0 + $0x38] sm:$0xff]
  %v22 = vld [vmem:[%s0 + $0x40] sm:$0xff]
  %v23 = vld [vmem:[%s0 + $0x48] sm:$0xff]
  %v24 = vld [vmem:[%s0 + $0x50] sm:$0xff]
  %v25 = vld [vmem:[%s0 + $0x58] sm:$0xff]
  %v26 = vld [vmem:[%s0 + $0x60] sm:$0xff]
  %v27 = vld [vmem:[%s0 + $0x68] sm:$0xff]
  %v28 = vld [vmem:[%s0 + $0x70] sm:$0xff]
  %v29 = vld [vmem:[%s0 + $0x78] sm:$0xff]
  %v30 = vld [vmem:[%s1] sm:$0x1]
  %v32 = vperm.slane %v30, 0
  %v34 = vmul.f32 %v14, %v32
  %v35 = vmul.f32 %v15, %v32
  %v36 = vmul.f32 %v16, %v32
  %v37 = vmul.f32 %v17, %v32
  %v38 = vmul.f32 %v18, %v32
  %v39 = vmul.f32 %v19, %v32
  %v40 = vmul.f32 %v20, %v32
  %v41 = vmul.f32 %v21, %v32
  %v42 = vmul.f32 %v22, %v32
  %v43 = vmul.f32 %v23, %v32
  %v44 = vmul.f32 %v24, %v32
  %v45 = vmul.f32 %v25, %v32
  %v46 = vmul.f32 %v26, %v32
  %v47 = vmul.f32 %v27, %v32
  %v48 = vmul.f32 %v28, %v32
  %v49 = vmul.f32 %v29, %v32
  %v50 = vld [vmem:[%s2] sm:$0x1]
  %v52 = vperm.slane %v50, 0
  %v54 = vadd.f32 %v34, %v52
  %v55 = vadd.f32 %v35, %v52
  %v56 = vadd.f32 %v36, %v52
  %v57 = vadd.f32 %v37, %v52
  %v58 = vadd.f32 %v38, %v52
  %v59 = vadd.f32 %v39, %v52
  %v60 = vadd.f32 %v40, %v52
  %v61 = vadd.f32 %v41, %v52
  %v62 = vadd.f32 %v42, %v52
  %v63 = vadd.f32 %v43, %v52
  %v64 = vadd.f32 %v44, %v52
  %v65 = vadd.f32 %v45, %v52
  %v66 = vadd.f32 %v46, %v52
  %v67 = vadd.f32 %v47, %v52
  %v68 = vadd.f32 %v48, %v52
  %v69 = vadd.f32 %v49, %v52
  %70 = vst [vmem:[%s3] sm:$0xff] %v54
  %71 = vst [vmem:[%s3 + $0x8] sm:$0xff] %v55
  %72 = vst [vmem:[%s3 + $0x10] sm:$0xff] %v56
  %73 = vst [vmem:[%s3 + $0x18] sm:$0xff] %v57
  %74 = vst [vmem:[%s3 + $0x20] sm:$0xff] %v58
  %75 = vst [vmem:[%s3 + $0x28] sm:$0xff] %v59
  %76 = vst [vmem:[%s3 + $0x30] sm:$0xff] %v60
  %77 = vst [vmem:[%s3 + $0x38] sm:$0xff] %v61
  %78 = vst [vmem:[%s3 + $0x40] sm:$0xff] %v62
  %79 = vst [vmem:[%s3 + $0x48] sm:$0xff] %v63
  %80 = vst [vmem:[%s3 + $0x50] sm:$0xff] %v64
  %81 = vst [vmem:[%s3 + $0x58] sm:$0xff] %v65
  %82 = vst [vmem:[%s3 + $0x60] sm:$0xff] %v66
  %83 = vst [vmem:[%s3 + $0x68] sm:$0xff] %v67
  %84 = vst [vmem:[%s3 + $0x70] sm:$0xff] %v68
  %85 = vst [vmem:[%s3 + $0x78] sm:$0xff] %v69
  // Predicated region
  $region14: #{_lambda_.66} parent=0 // pred_check
    _
  $region15: #{_lambda_.66} parent=0 // pred_check_branch
    %87 = sbr.rel (0) target = $region17
  $region16: #{_lambda_.66} parent=0 // pred_region
    _
  $region17: #{_lambda_.66} parent=0 // pred_fallthru
    _
  // Predicated region
  $region18: #{_lambda_.66} parent=0 // pred_check
    _
  $region19: #{_lambda_.66} parent=0 // pred_check_branch
    %89 = sbr.rel (0) target = $region21
  $region20: #{_lambda_.66} parent=0 // pred_region
    _
  $region21: #{_lambda_.66} parent=0 // pred_fallthru
    _

// kernel: _lambda_.68
$region0: #{_lambda_.68}
  #allocation0 [shape = 'u32[]', space=smem, size = 0x4, offset = 0x4, fixed_abs, tag = 'smem constant byte address 0x4 - core index']
  #allocation1 [shape = 'u32[72,128]{1,0:T(1,128)}', space=vmem, size = 0x9000, scoped, tag = 'internal scratch']
  %s0 = inlined_call_operand.vmem [shape: f32[32,128], index: 0, kind: input, shape index: {}]
  %s1 = inlined_call_operand.vmem [shape: f32[8,128], index: 1, kind: output, shape index: {0}]
  %s2 = inlined_call_operand.vmem [shape: f32[8,128], index: 2, kind: output, shape index: {1}]
  %3 = xla_tuple %s1, %s2
  %s4 = sld [smem:[#allocation0]]
  $region26: #{_lambda_.68} parent=0
    _
  %s6 = ssub.s32 1, %s4
  %s7 = scalar_select 0, %s6, %s4
  // Predicated region
  $region2: #{_lambda_.68} parent=0 // pred_check
    _
  $region3: #{_lambda_.68} parent=0 // pred_check_branch
    %9 = sbr.rel (0) target = $region5
  $region4: #{_lambda_.68} parent=0 // pred_region
    _
  $region5: #{_lambda_.68} parent=0 // pred_fallthru
    _
  %p10 = scmp.eq.s32.totalorder 0, 0
  // Predicated region
  $region6: #{_lambda_.68} parent=0 // pred_check
    %p11 = pneg %p10
  $region7: #{_lambda_.68} parent=0 // pred_check_branch
    %13 = sbr.rel (%p11) target = $region9
  $region8: #{_lambda_.68} parent=0 // pred_region
    %14 = vst [vmem:[%s1] sm:$0xff] 0.0
    %15 = vst [vmem:[%s2] sm:$0xff] 0.0
  $region9: #{_lambda_.68} parent=0 // pred_fallthru
    _
  %v16 = vld [vmem:[%s0] sm:$0xff]
  %v17 = vld [vmem:[%s0 + $0x8] sm:$0xff]
  %v18 = vld [vmem:[%s0 + $0x10] sm:$0xff]
  %v19 = vld [vmem:[%s0 + $0x18] sm:$0xff]
  %v20 = vld [vmem:[%s1] sm:$0xff]
  %v21 = vadd.f32 %v16, %v17
  %v22 = vadd.f32 %v21, %v18
  %v23 = vadd.f32 %v22, %v19
  %v24 = vrot.slane %v23, 4
  %v25 = vadd.f32 %v23, %v24
  %v26 = vrot.slane %v25, 2
  %v27 = vadd.f32 %v25, %v26
  %v28 = vrot.slane %v27, 1
  %v29 = vadd.f32 %v27, %v28
  %v30 = vadd.f32 %v20, %v29
  %31 = vst [vmem:[%s1] sm:$0xff] %v30
  %v32 = vld [vmem:[%s2] sm:$0xff]
  %v33 = vmul.f32 %v16, %v16
  %v34 = vmul.f32 %v17, %v17
  %v35 = vmul.f32 %v18, %v18
  %v36 = vmul.f32 %v19, %v19
  %v37 = vadd.f32 %v33, %v34
  %v38 = vadd.f32 %v37, %v35
  %v39 = vadd.f32 %v38, %v36
  %v40 = vrot.slane %v39, 4
  %v41 = vadd.f32 %v39, %v40
  %v42 = vrot.slane %v41, 2
  %v43 = vadd.f32 %v41, %v42
  %v44 = vrot.slane %v43, 1
  %v45 = vadd.f32 %v43, %v44
  %v46 = vadd.f32 %v32, %v45
  %47 = vst [vmem:[%s2] sm:$0xff] %v46
  // Predicated region
  $region10: #{_lambda_.68} parent=0 // pred_check
    _
  $region11: #{_lambda_.68} parent=0 // pred_check_branch
    %49 = sbr.rel (0) target = $region13
  $region12: #{_lambda_.68} parent=0 // pred_region
    _
  $region13: #{_lambda_.68} parent=0 // pred_fallthru
    _
  // Predicated region
  $region14: #{_lambda_.68} parent=0 // pred_check
    _
  $region15: #{_lambda_.68} parent=0 // pred_check_branch
    %51 = sbr.rel (0) target = $region17
  $region16: #{_lambda_.68} parent=0 // pred_region
    _
  $region17: #{_lambda_.68} parent=0 // pred_fallthru
    _
  // Predicated region
  $region18: #{_lambda_.68} parent=0 // pred_check
    _
  $region19: #{_lambda_.68} parent=0 // pred_check_branch
    %53 = sbr.rel (0) target = $region21
  $region20: #{_lambda_.68} parent=0 // pred_region
    _
  $region21: #{_lambda_.68} parent=0 // pred_fallthru
    _
  // Predicated region
  $region22: #{_lambda_.68} parent=0 // pred_check
    _
  $region23: #{_lambda_.68} parent=0 // pred_check_branch
    %55 = sbr.rel (0) target = $region25
  $region24: #{_lambda_.68} parent=0 // pred_region
    _
  $region25: #{_lambda_.68} parent=0 // pred_fallthru
    _

// kernel: _lambda_.69
$region0: #{_lambda_.69}
  #allocation0 [shape = 'u32[]', space=smem, size = 0x4, offset = 0x4, fixed_abs, tag = 'smem constant byte address 0x4 - core index']
  #allocation1 [shape = 'u32[72,128]{1,0:T(1,128)}', space=vmem, size = 0x9000, scoped, tag = 'internal scratch']
  %s0 = inlined_call_operand.vmem [shape: f32[32,128], index: 0, kind: input, shape index: {}]
  %s1 = inlined_call_operand.vmem [shape: f32[1,128], index: 1, kind: input, shape index: {}]
  %s2 = inlined_call_operand.vmem [shape: f32[1,128], index: 2, kind: input, shape index: {}]
  %s3 = inlined_call_operand.vmem [shape: f32[32,128], index: 3, kind: output, shape index: {}]
  %s4 = sld [smem:[#allocation0]]
  $region22: #{_lambda_.69} parent=0
    _
  %s6 = ssub.s32 1, %s4
  %s7 = scalar_select 0, %s6, %s4
  // Predicated region
  $region2: #{_lambda_.69} parent=0 // pred_check
    _
  $region3: #{_lambda_.69} parent=0 // pred_check_branch
    %9 = sbr.rel (0) target = $region5
  $region4: #{_lambda_.69} parent=0 // pred_region
    _
  $region5: #{_lambda_.69} parent=0 // pred_fallthru
    _
  // Predicated region
  $region6: #{_lambda_.69} parent=0 // pred_check
    _
  $region7: #{_lambda_.69} parent=0 // pred_check_branch
    %11 = sbr.rel (0) target = $region9
  $region8: #{_lambda_.69} parent=0 // pred_region
    _
  $region9: #{_lambda_.69} parent=0 // pred_fallthru
    _
  // Predicated region
  $region10: #{_lambda_.69} parent=0 // pred_check
    _
  $region11: #{_lambda_.69} parent=0 // pred_check_branch
    %13 = sbr.rel (0) target = $region13
  $region12: #{_lambda_.69} parent=0 // pred_region
    _
  $region13: #{_lambda_.69} parent=0 // pred_fallthru
    _
  %v14 = vld [vmem:[%s0] sm:$0xff]
  %v15 = vld [vmem:[%s0 + $0x8] sm:$0xff]
  %v16 = vld [vmem:[%s0 + $0x10] sm:$0xff]
  %v17 = vld [vmem:[%s0 + $0x18] sm:$0xff]
  %v18 = vld [vmem:[%s1] sm:$0x1]
  %v20 = vperm.slane %v18, 0
  %v22 = vmul.f32 %v14, %v20
  %v23 = vmul.f32 %v15, %v20
  %v24 = vmul.f32 %v16, %v20
  %v25 = vmul.f32 %v17, %v20
  %v26 = vld [vmem:[%s2] sm:$0x1]
  %v28 = vperm.slane %v26, 0
  %v30 = vadd.f32 %v22, %v28
  %v31 = vadd.f32 %v23, %v28
  %v32 = vadd.f32 %v24, %v28
  %v33 = vadd.f32 %v25, %v28
  %34 = vst [vmem:[%s3] sm:$0xff] %v30
  %35 = vst [vmem:[%s3 + $0x8] sm:$0xff] %v31
  %36 = vst [vmem:[%s3 + $0x10] sm:$0xff] %v32
  %37 = vst [vmem:[%s3 + $0x18] sm:$0xff] %v33
  // Predicated region
  $region14: #{_lambda_.69} parent=0 // pred_check
    _
  $region15: #{_lambda_.69} parent=0 // pred_check_branch
    %39 = sbr.rel (0) target = $region17
  $region16: #{_lambda_.69} parent=0 // pred_region
    _
  $region17: #{_lambda_.69} parent=0 // pred_fallthru
    _
  // Predicated region
  $region18: #{_lambda_.69} parent=0 // pred_check
    _
  $region19: #{_lambda_.69} parent=0 // pred_check_branch
    %41 = sbr.rel (0) target = $region21
  $region20: #{_lambda_.69} parent=0 // pred_region
    _
  $region21: #{_lambda_.69} parent=0 // pred_fallthru
    _

// kernel: _lambda_.67
$region0: #{_lambda_.67}
  #allocation0 [shape = 'u32[]', space=smem, size = 0x4, offset = 0x4, fixed_abs, tag = 'smem constant byte address 0x4 - core index']
  #allocation1 [shape = 'u32[72,128]{1,0:T(1,128)}', space=vmem, size = 0x9000, scoped, tag = 'internal scratch']
  #allocation2 [shape = 'f32[32,128]{1,0:T(8,128)}', space=vmem, size = 0x4000, scoped, tag = 'scratch operand']
  %s0 = inlined_call_operand.vmem [shape: bf16[32,256], index: 0, kind: input, shape index: {}]
  %s1 = inlined_call_operand.vmem [shape: bf16[256,128], index: 1, kind: input, shape index: {}]
  %s2 = inlined_call_operand.vmem [shape: f32[1,128], index: 2, kind: input, shape index: {}]
  %s3 = inlined_call_operand.vmem [shape: f32[32,128], index: 3, kind: output, shape index: {}]
  %s4 = sld [smem:[#allocation0]]
  $region30: #{_lambda_.67} parent=0
    _
  %s6 = ssub.s32 1, %s4
  %s7 = scalar_select 0, %s6, %s4
  // Predicated region
  $region2: #{_lambda_.67} parent=0 // pred_check
    _
  $region3: #{_lambda_.67} parent=0 // pred_check_branch
    %9 = sbr.rel (0) target = $region5
  $region4: #{_lambda_.67} parent=0 // pred_region
    _
  $region5: #{_lambda_.67} parent=0 // pred_fallthru
    _
  // Predicated region
  $region6: #{_lambda_.67} parent=0 // pred_check
    _
  $region7: #{_lambda_.67} parent=0 // pred_check_branch
    %11 = sbr.rel (0) target = $region9
  $region8: #{_lambda_.67} parent=0 // pred_region
    _
  $region9: #{_lambda_.67} parent=0 // pred_fallthru
    _
  // Predicated region
  $region10: #{_lambda_.67} parent=0 // pred_check
    _
  $region11: #{_lambda_.67} parent=0 // pred_check_branch
    %13 = sbr.rel (0) target = $region13
  $region12: #{_lambda_.67} parent=0 // pred_region
    _
  $region13: #{_lambda_.67} parent=0 // pred_fallthru
    _
  %p14 = scmp.eq.s32.totalorder 0, 0
  // Predicated region
  $region14: #{_lambda_.67} parent=0 // pred_check
    %p15 = pneg %p14
  $region15: #{_lambda_.67} parent=0 // pred_check_branch
    %17 = sbr.rel (%p15) target = $region17
  $region16: #{_lambda_.67} parent=0 // pred_region
    %18 = vst [vmem:[#allocation2] sm:$0xff] 0.0
    %19 = vst [vmem:[#allocation2 + $0x8] sm:$0xff] 0.0
    %20 = vst [vmem:[#allocation2 + $0x10] sm:$0xff] 0.0
    %21 = vst [vmem:[#allocation2 + $0x18] sm:$0xff] 0.0
  $region17: #{_lambda_.67} parent=0 // pred_fallthru
    _
  %v22 = vld [vmem:[#allocation2] sm:$0xff]
  %v23 = vld [vmem:[#allocation2 + $0x8] sm:$0xff]
  %v24 = vld [vmem:[#allocation2 + $0x10] sm:$0xff]
  %v25 = vld [vmem:[#allocation2 + $0x18] sm:$0xff]
  %v26 = vld [vmem:[%s0] sm:$0xff]
  %v27 = vld [vmem:[%s0 + $0x8] sm:$0xff]
  %v28 = vld [vmem:[%s0 + $0x10] sm:$0xff]
  %v29 = vld [vmem:[%s0 + $0x18] sm:$0xff]
  %v30 = vld [vmem:[%s1] sm:$0xf]
  %v31 = vld [vmem:[%s1 + $0x4] sm:$0xf]
  %v32 = vld [vmem:[%s1 + $0x8] sm:$0xf]
  %v33 = vld [vmem:[%s1 + $0xc] sm:$0xf]
  %v34 = vld [vmem:[%s1 + $0x10] sm:$0xf]
  %v35 = vld [vmem:[%s1 + $0x14] sm:$0xf]
  %v36 = vld [vmem:[%s1 + $0x18] sm:$0xf]
  %v37 = vld [vmem:[%s1 + $0x1c] sm:$0xf]
  %v38 = vld [vmem:[%s1 + $0x20] sm:$0xf]
  %v39 = vld [vmem:[%s1 + $0x24] sm:$0xf]
  %v40 = vld [vmem:[%s1 + $0x28] sm:$0xf]
  %v41 = vld [vmem:[%s1 + $0x2c] sm:$0xf]
  %v42 = vld [vmem:[%s1 + $0x30] sm:$0xf]
  %v43 = vld [vmem:[%s1 + $0x34] sm:$0xf]
  %v44 = vld [vmem:[%s1 + $0x38] sm:$0xf]
  %v45 = vld [vmem:[%s1 + $0x3c] sm:$0xf]
  %v46 = vld [vmem:[%s1 + $0x40] sm:$0xf]
  %v47 = vld [vmem:[%s1 + $0x44] sm:$0xf]
  %v48 = vld [vmem:[%s1 + $0x48] sm:$0xf]
  %v49 = vld [vmem:[%s1 + $0x4c] sm:$0xf]
  %v50 = vld [vmem:[%s1 + $0x50] sm:$0xf]
  %v51 = vld [vmem:[%s1 + $0x54] sm:$0xf]
  %v52 = vld [vmem:[%s1 + $0x58] sm:$0xf]
  %v53 = vld [vmem:[%s1 + $0x5c] sm:$0xf]
  %v54 = vld [vmem:[%s1 + $0x60] sm:$0xf]
  %v55 = vld [vmem:[%s1 + $0x64] sm:$0xf]
  %v56 = vld [vmem:[%s1 + $0x68] sm:$0xf]
  %v57 = vld [vmem:[%s1 + $0x6c] sm:$0xf]
  %v58 = vld [vmem:[%s1 + $0x70] sm:$0xf]
  %v59 = vld [vmem:[%s1 + $0x74] sm:$0xf]
  %v60 = vld [vmem:[%s1 + $0x78] sm:$0xf]
  %v61 = vld [vmem:[%s1 + $0x7c] sm:$0xf]
  %v66 = vunpack.c.l.b16 %v26
  %v67 = vunpack.c.h.b16 %v26
  %v68 = vunpack.c.l.b16 %v27
  %v69 = vunpack.c.h.b16 %v27
  %v70 = vunpack.c.l.b16 %v28
  %v71 = vunpack.c.h.b16 %v28
  %v72 = vunpack.c.l.b16 %v29
  %v73 = vunpack.c.h.b16 %v29
  %v74 = vpack.c.b16 %v68, %v66
  %v75 = vpack.c.b16 %v69, %v67
  %v76 = vpack.c.b16 %v72, %v70
  %v77 = vpack.c.b16 %v73, %v71
  %v114 = vunpack.c.l.b16 %v30
  %v115 = vunpack.c.l.b16 %v31
  %v116 = vunpack.c.l.b16 %v32
  %v117 = vunpack.c.l.b16 %v33
  %v118 = vunpack.c.l.b16 %v34
  %v119 = vunpack.c.l.b16 %v35
  %v120 = vunpack.c.l.b16 %v36
  %v121 = vunpack.c.l.b16 %v37
  %v122 = vunpack.c.l.b16 %v38
  %v123 = vunpack.c.l.b16 %v39
  %v124 = vunpack.c.l.b16 %v40
  %v125 = vunpack.c.l.b16 %v41
  %v126 = vunpack.c.l.b16 %v42
  %v127 = vunpack.c.l.b16 %v43
  %v128 = vunpack.c.l.b16 %v44
  %v129 = vunpack.c.l.b16 %v45
  %v130 = vunpack.c.l.b16 %v46
  %v131 = vunpack.c.l.b16 %v47
  %v132 = vunpack.c.l.b16 %v48
  %v133 = vunpack.c.l.b16 %v49
  %v134 = vunpack.c.l.b16 %v50
  %v135 = vunpack.c.l.b16 %v51
  %v136 = vunpack.c.l.b16 %v52
  %v137 = vunpack.c.l.b16 %v53
  %v138 = vunpack.c.l.b16 %v54
  %v139 = vunpack.c.l.b16 %v55
  %v140 = vunpack.c.l.b16 %v56
  %v141 = vunpack.c.l.b16 %v57
  %v142 = vunpack.c.l.b16 %v58
  %v143 = vunpack.c.l.b16 %v59
  %v144 = vunpack.c.l.b16 %v60
  %v145 = vunpack.c.l.b16 %v61
  %v146 = vpack.c.b16 %v115, %v114
  %v147 = vpack.c.b16 %v117, %v116
  %v148 = vpack.c.b16 %v119, %v118
  %v149 = vpack.c.b16 %v121, %v120
  %v150 = vpack.c.b16 %v123, %v122
  %v151 = vpack.c.b16 %v125, %v124
  %v152 = vpack.c.b16 %v127, %v126
  %v153 = vpack.c.b16 %v129, %v128
  %v154 = vpack.c.b16 %v131, %v130
  %v155 = vpack.c.b16 %v133, %v132
  %v156 = vpack.c.b16 %v135, %v134
  %v157 = vpack.c.b16 %v137, %v136
  %v158 = vpack.c.b16 %v139, %v138
  %v159 = vpack.c.b16 %v141, %v140
  %v160 = vpack.c.b16 %v143, %v142
  %v161 = vpack.c.b16 %v145, %v144
  %178 = vmatpush.bf16.msra.mxu0 %v153
  %179 = vmatpush.bf16.msra.mxu0 %v152
  %180 = vmatpush.bf16.msra.mxu0 %v151
  %181 = vmatpush.bf16.msra.mxu0 %v150
  %182 = vmatpush.bf16.msra.mxu0 %v149
  %183 = vmatpush.bf16.msra.mxu0 %v148
  %184 = vmatpush.bf16.msra.mxu0 %v147
  %185 = vmatpush.bf16.msra.mxu0 %v146
  %186 = vmatmul.bf16.gmra.mxu0 %v74
  %v187 = vpop.f32.mrf.mxu0
  %v188 = vadd.f32 0.0, %v187
  %v189 = vpop.f32.mrf.mxu0
  %v190 = vadd.f32 0.0, %v189
  %191 = vmatmul.bf16.gmra.mxu0 %v76
  %v192 = vpop.f32.mrf.mxu0
  %v193 = vadd.f32 0.0, %v192
  %v194 = vpop.f32.mrf.mxu0
  %v195 = vadd.f32 0.0, %v194
  %196 = vdwg.mxu0
  %197 = vmatpush.bf16.msra.mxu0 %v161
  %198 = vmatpush.bf16.msra.mxu0 %v160
  %199 = vmatpush.bf16.msra.mxu0 %v159
  %200 = vmatpush.bf16.msra.mxu0 %v158
  %201 = vmatpush.bf16.msra.mxu0 %v157
  %202 = vmatpush.bf16.msra.mxu0 %v156
  %203 = vmatpush.bf16.msra.mxu0 %v155
  %204 = vmatpush.bf16.msra.mxu0 %v154
  %205 = vmatmul.bf16.gmra.mxu0 %v75
  %v206 = vpop.f32.mrf.mxu0
  %v207 = vadd.f32 %v188, %v206
  %v208 = vpop.f32.mrf.mxu0
  %v209 = vadd.f32 %v190, %v208
  %210 = vmatmul.bf16.gmra.mxu0 %v77
  %v211 = vpop.f32.mrf.mxu0
  %v212 = vadd.f32 %v193, %v211
  %v213 = vpop.f32.mrf.mxu0
  %v214 = vadd.f32 %v195, %v213
  %215 = vdwg.mxu0
  %v216 = vadd.f32 %v22, %v207
  %v217 = vadd.f32 %v23, %v209
  %v218 = vadd.f32 %v24, %v212
  %v219 = vadd.f32 %v25, %v214
  %220 = vst [vmem:[#allocation2] sm:$0xff] %v216
  %221 = vst [vmem:[#allocation2 + $0x8] sm:$0xff] %v217
  %222 = vst [vmem:[#allocation2 + $0x10] sm:$0xff] %v218
  %223 = vst [vmem:[#allocation2 + $0x18] sm:$0xff] %v219
  // Predicated region
  $region18: #{_lambda_.67} parent=0 // pred_check
    %p224 = pneg %p14
  $region19: #{_lambda_.67} parent=0 // pred_check_branch
    %226 = sbr.rel (%p224) target = $region21
  $region20: #{_lambda_.67} parent=0 // pred_region
    %v227 = vld [vmem:[#allocation2] sm:$0xff]
    %v228 = vld [vmem:[#allocation2 + $0x8] sm:$0xff]
    %v229 = vld [vmem:[#allocation2 + $0x10] sm:$0xff]
    %v230 = vld [vmem:[#allocation2 + $0x18] sm:$0xff]
    %v231 = vld [vmem:[%s2] sm:$0x1]
    %v233 = vperm.slane %v231, 0
    %v235 = vadd.f32 %v227, %v233
    %v236 = vadd.f32 %v228, %v233
    %v237 = vadd.f32 %v229, %v233
    %v238 = vadd.f32 %v230, %v233
    %239 = vst [vmem:[%s3] sm:$0xff] %v235
    %240 = vst [vmem:[%s3 + $0x8] sm:$0xff] %v236
    %241 = vst [vmem:[%s3 + $0x10] sm:$0xff] %v237
    %242 = vst [vmem:[%s3 + $0x18] sm:$0xff] %v238
  $region21: #{_lambda_.67} parent=0 // pred_fallthru
    _
  // Predicated region
  $region22: #{_lambda_.67} parent=0 // pred_check
    _
  $region23: #{_lambda_.67} parent=0 // pred_check_branch
    %244 = sbr.rel (0) target = $region25
  $region24: #{_lambda_.67} parent=0 // pred_region
    _
  $region25: #{_lambda_.67} parent=0 // pred_fallthru
    _
  // Predicated region
  $region26: #{_lambda_.67} parent=0 // pred_check
    _
  $region27: #{_lambda_.67} parent=0 // pred_check_branch
    %246 = sbr.rel (0) target = $region29
  $region28: #{_lambda_.67} parent=0 // pred_region
    _
  $region29: #{_lambda_.67} parent=0 // pred_fallthru
    _

// kernel: _lambda_.71
$region0: #{_lambda_.71}
  #allocation0 [shape = 'u32[]', space=smem, size = 0x4, offset = 0x4, fixed_abs, tag = 'smem constant byte address 0x4 - core index']
  #allocation1 [shape = 'u32[72,128]{1,0:T(1,128)}', space=vmem, size = 0x9000, scoped, tag = 'internal scratch']
  %s0 = inlined_call_operand.vmem [shape: f32[8,128], index: 0, kind: input, shape index: {}]
  %s1 = inlined_call_operand.vmem [shape: f32[8,128], index: 1, kind: output, shape index: {0}]
  %s2 = inlined_call_operand.vmem [shape: f32[8,128], index: 2, kind: output, shape index: {1}]
  %3 = xla_tuple %s1, %s2
  %s4 = sld [smem:[#allocation0]]
  $region26: #{_lambda_.71} parent=0
    _
  %s6 = ssub.s32 1, %s4
  %s7 = scalar_select 0, %s6, %s4
  // Predicated region
  $region2: #{_lambda_.71} parent=0 // pred_check
    _
  $region3: #{_lambda_.71} parent=0 // pred_check_branch
    %9 = sbr.rel (0) target = $region5
  $region4: #{_lambda_.71} parent=0 // pred_region
    _
  $region5: #{_lambda_.71} parent=0 // pred_fallthru
    _
  %p10 = scmp.eq.s32.totalorder 0, 0
  // Predicated region
  $region6: #{_lambda_.71} parent=0 // pred_check
    %p11 = pneg %p10
  $region7: #{_lambda_.71} parent=0 // pred_check_branch
    %13 = sbr.rel (%p11) target = $region9
  $region8: #{_lambda_.71} parent=0 // pred_region
    %14 = vst [vmem:[%s1] sm:$0xff] 0.0
    %15 = vst [vmem:[%s2] sm:$0xff] 0.0
  $region9: #{_lambda_.71} parent=0 // pred_fallthru
    _
  %v16 = vld [vmem:[%s0] sm:$0xff]
  %v17 = vld [vmem:[%s1] sm:$0xff]
  %v18 = vrot.slane %v16, 4
  %v19 = vadd.f32 %v16, %v18
  %v20 = vrot.slane %v19, 2
  %v21 = vadd.f32 %v19, %v20
  %v22 = vrot.slane %v21, 1
  %v23 = vadd.f32 %v21, %v22
  %v24 = vadd.f32 %v17, %v23
  %25 = vst [vmem:[%s1] sm:$0xff] %v24
  %v26 = vld [vmem:[%s2] sm:$0xff]
  %v27 = vmul.f32 %v16, %v16
  %v28 = vrot.slane %v27, 4
  %v29 = vadd.f32 %v27, %v28
  %v30 = vrot.slane %v29, 2
  %v31 = vadd.f32 %v29, %v30
  %v32 = vrot.slane %v31, 1
  %v33 = vadd.f32 %v31, %v32
  %v34 = vadd.f32 %v26, %v33
  %35 = vst [vmem:[%s2] sm:$0xff] %v34
  // Predicated region
  $region10: #{_lambda_.71} parent=0 // pred_check
    _
  $region11: #{_lambda_.71} parent=0 // pred_check_branch
    %37 = sbr.rel (0) target = $region13
  $region12: #{_lambda_.71} parent=0 // pred_region
    _
  $region13: #{_lambda_.71} parent=0 // pred_fallthru
    _
  // Predicated region
  $region14: #{_lambda_.71} parent=0 // pred_check
    _
  $region15: #{_lambda_.71} parent=0 // pred_check_branch
    %39 = sbr.rel (0) target = $region17
  $region16: #{_lambda_.71} parent=0 // pred_region
    _
  $region17: #{_lambda_.71} parent=0 // pred_fallthru
    _
  // Predicated region
  $region18: #{_lambda_.71} parent=0 // pred_check
    _
  $region19: #{_lambda_.71} parent=0 // pred_check_branch
    %41 = sbr.rel (0) target = $region21
  $region20: #{_lambda_.71} parent=0 // pred_region
    _
  $region21: #{_lambda_.71} parent=0 // pred_fallthru
    _
  // Predicated region
  $region22: #{_lambda_.71} parent=0 // pred_check
    _
  $region23: #{_lambda_.71} parent=0 // pred_check_branch
    %43 = sbr.rel (0) target = $region25
  $region24: #{_lambda_.71} parent=0 // pred_region
    _
  $region25: #{_lambda_.71} parent=0 // pred_fallthru
    _

// kernel: _lambda_.70
$region0: #{_lambda_.70}
  #allocation0 [shape = 'u32[]', space=smem, size = 0x4, offset = 0x4, fixed_abs, tag = 'smem constant byte address 0x4 - core index']
  #allocation1 [shape = 'u32[72,128]{1,0:T(1,128)}', space=vmem, size = 0x9000, scoped, tag = 'internal scratch']
  #allocation2 [shape = 'f32[8,128]{1,0:T(8,128)}', space=vmem, size = 0x1000, scoped, tag = 'scratch operand']
  %s0 = inlined_call_operand.vmem [shape: bf16[8,512], index: 0, kind: input, shape index: {}]
  %s1 = inlined_call_operand.vmem [shape: bf16[512,128], index: 1, kind: input, shape index: {}]
  %s2 = inlined_call_operand.vmem [shape: f32[1,128], index: 2, kind: input, shape index: {}]
  %s3 = inlined_call_operand.vmem [shape: f32[8,128], index: 3, kind: output, shape index: {}]
  %s4 = sld [smem:[#allocation0]]
  $region30: #{_lambda_.70} parent=0
    _
  %s6 = ssub.s32 1, %s4
  %s7 = scalar_select 0, %s6, %s4
  // Predicated region
  $region2: #{_lambda_.70} parent=0 // pred_check
    _
  $region3: #{_lambda_.70} parent=0 // pred_check_branch
    %9 = sbr.rel (0) target = $region5
  $region4: #{_lambda_.70} parent=0 // pred_region
    _
  $region5: #{_lambda_.70} parent=0 // pred_fallthru
    _
  // Predicated region
  $region6: #{_lambda_.70} parent=0 // pred_check
    _
  $region7: #{_lambda_.70} parent=0 // pred_check_branch
    %11 = sbr.rel (0) target = $region9
  $region8: #{_lambda_.70} parent=0 // pred_region
    _
  $region9: #{_lambda_.70} parent=0 // pred_fallthru
    _
  // Predicated region
  $region10: #{_lambda_.70} parent=0 // pred_check
    _
  $region11: #{_lambda_.70} parent=0 // pred_check_branch
    %13 = sbr.rel (0) target = $region13
  $region12: #{_lambda_.70} parent=0 // pred_region
    _
  $region13: #{_lambda_.70} parent=0 // pred_fallthru
    _
  %p14 = scmp.eq.s32.totalorder 0, 0
  // Predicated region
  $region14: #{_lambda_.70} parent=0 // pred_check
    %p15 = pneg %p14
  $region15: #{_lambda_.70} parent=0 // pred_check_branch
    %17 = sbr.rel (%p15) target = $region17
  $region16: #{_lambda_.70} parent=0 // pred_region
    %18 = vst [vmem:[#allocation2] sm:$0xff] 0.0
  $region17: #{_lambda_.70} parent=0 // pred_fallthru
    _
  %v19 = vld [vmem:[#allocation2] sm:$0xff]
  %v20 = vld [vmem:[%s0] sm:$0xff]
  %v21 = vld [vmem:[%s0 + $0x8] sm:$0xff]
  %v22 = vld [vmem:[%s1] sm:$0xf]
  %v23 = vld [vmem:[%s1 + $0x4] sm:$0xf]
  %v24 = vld [vmem:[%s1 + $0x8] sm:$0xf]
  %v25 = vld [vmem:[%s1 + $0xc] sm:$0xf]
  %v26 = vld [vmem:[%s1 + $0x10] sm:$0xf]
  %v27 = vld [vmem:[%s1 + $0x14] sm:$0xf]
  %v28 = vld [vmem:[%s1 + $0x18] sm:$0xf]
  %v29 = vld [vmem:[%s1 + $0x1c] sm:$0xf]
  %v30 = vld [vmem:[%s1 + $0x20] sm:$0xf]
  %v31 = vld [vmem:[%s1 + $0x24] sm:$0xf]
  %v32 = vld [vmem:[%s1 + $0x28] sm:$0xf]
  %v33 = vld [vmem:[%s1 + $0x2c] sm:$0xf]
  %v34 = vld [vmem:[%s1 + $0x30] sm:$0xf]
  %v35 = vld [vmem:[%s1 + $0x34] sm:$0xf]
  %v36 = vld [vmem:[%s1 + $0x38] sm:$0xf]
  %v37 = vld [vmem:[%s1 + $0x3c] sm:$0xf]
  %v38 = vld [vmem:[%s1 + $0x40] sm:$0xf]
  %v39 = vld [vmem:[%s1 + $0x44] sm:$0xf]
  %v40 = vld [vmem:[%s1 + $0x48] sm:$0xf]
  %v41 = vld [vmem:[%s1 + $0x4c] sm:$0xf]
  %v42 = vld [vmem:[%s1 + $0x50] sm:$0xf]
  %v43 = vld [vmem:[%s1 + $0x54] sm:$0xf]
  %v44 = vld [vmem:[%s1 + $0x58] sm:$0xf]
  %v45 = vld [vmem:[%s1 + $0x5c] sm:$0xf]
  %v46 = vld [vmem:[%s1 + $0x60] sm:$0xf]
  %v47 = vld [vmem:[%s1 + $0x64] sm:$0xf]
  %v48 = vld [vmem:[%s1 + $0x68] sm:$0xf]
  %v49 = vld [vmem:[%s1 + $0x6c] sm:$0xf]
  %v50 = vld [vmem:[%s1 + $0x70] sm:$0xf]
  %v51 = vld [vmem:[%s1 + $0x74] sm:$0xf]
  %v52 = vld [vmem:[%s1 + $0x78] sm:$0xf]
  %v53 = vld [vmem:[%s1 + $0x7c] sm:$0xf]
  %v54 = vld [vmem:[%s1 + $0x80] sm:$0xf]
  %v55 = vld [vmem:[%s1 + $0x84] sm:$0xf]
  %v56 = vld [vmem:[%s1 + $0x88] sm:$0xf]
  %v57 = vld [vmem:[%s1 + $0x8c] sm:$0xf]
  %v58 = vld [vmem:[%s1 + $0x90] sm:$0xf]
  %v59 = vld [vmem:[%s1 + $0x94] sm:$0xf]
  %v60 = vld [vmem:[%s1 + $0x98] sm:$0xf]
  %v61 = vld [vmem:[%s1 + $0x9c] sm:$0xf]
  %v62 = vld [vmem:[%s1 + $0xa0] sm:$0xf]
  %v63 = vld [vmem:[%s1 + $0xa4] sm:$0xf]
  %v64 = vld [vmem:[%s1 + $0xa8] sm:$0xf]
  %v65 = vld [vmem:[%s1 + $0xac] sm:$0xf]
  %v66 = vld [vmem:[%s1 + $0xb0] sm:$0xf]
  %v67 = vld [vmem:[%s1 + $0xb4] sm:$0xf]
  %v68 = vld [vmem:[%s1 + $0xb8] sm:$0xf]
  %v69 = vld [vmem:[%s1 + $0xbc] sm:$0xf]
  %v70 = vld [vmem:[%s1 + $0xc0] sm:$0xf]
  %v71 = vld [vmem:[%s1 + $0xc4] sm:$0xf]
  %v72 = vld [vmem:[%s1 + $0xc8] sm:$0xf]
  %v73 = vld [vmem:[%s1 + $0xcc] sm:$0xf]
  %v74 = vld [vmem:[%s1 + $0xd0] sm:$0xf]
  %v75 = vld [vmem:[%s1 + $0xd4] sm:$0xf]
  %v76 = vld [vmem:[%s1 + $0xd8] sm:$0xf]
  %v77 = vld [vmem:[%s1 + $0xdc] sm:$0xf]
  %v78 = vld [vmem:[%s1 + $0xe0] sm:$0xf]
  %v79 = vld [vmem:[%s1 + $0xe4] sm:$0xf]
  %v80 = vld [vmem:[%s1 + $0xe8] sm:$0xf]
  %v81 = vld [vmem:[%s1 + $0xec] sm:$0xf]
  %v82 = vld [vmem:[%s1 + $0xf0] sm:$0xf]
  %v83 = vld [vmem:[%s1 + $0xf4] sm:$0xf]
  %v84 = vld [vmem:[%s1 + $0xf8] sm:$0xf]
  %v85 = vld [vmem:[%s1 + $0xfc] sm:$0xf]
  %v88 = vunpack.c.l.b16 %v20
  %v89 = vunpack.c.h.b16 %v20
  %v90 = vunpack.c.l.b16 %v21
  %v91 = vunpack.c.h.b16 %v21
  %v92 = vpack.c.b16 %v88, %v88
  %v93 = vpack.c.b16 %v89, %v89
  %v94 = vpack.c.b16 %v90, %v90
  %v95 = vpack.c.b16 %v91, %v91
  %v164 = vunpack.c.l.b16 %v22
  %v165 = vunpack.c.l.b16 %v23
  %v166 = vunpack.c.l.b16 %v24
  %v167 = vunpack.c.l.b16 %v25
  %v168 = vunpack.c.l.b16 %v26
  %v169 = vunpack.c.l.b16 %v27
  %v170 = vunpack.c.l.b16 %v28
  %v171 = vunpack.c.l.b16 %v29
  %v172 = vunpack.c.l.b16 %v30
  %v173 = vunpack.c.l.b16 %v31
  %v174 = vunpack.c.l.b16 %v32
  %v175 = vunpack.c.l.b16 %v33
  %v176 = vunpack.c.l.b16 %v34
  %v177 = vunpack.c.l.b16 %v35
  %v178 = vunpack.c.l.b16 %v36
  %v179 = vunpack.c.l.b16 %v37
  %v180 = vunpack.c.l.b16 %v38
  %v181 = vunpack.c.l.b16 %v39
  %v182 = vunpack.c.l.b16 %v40
  %v183 = vunpack.c.l.b16 %v41
  %v184 = vunpack.c.l.b16 %v42
  %v185 = vunpack.c.l.b16 %v43
  %v186 = vunpack.c.l.b16 %v44
  %v187 = vunpack.c.l.b16 %v45
  %v188 = vunpack.c.l.b16 %v46
  %v189 = vunpack.c.l.b16 %v47
  %v190 = vunpack.c.l.b16 %v48
  %v191 = vunpack.c.l.b16 %v49
  %v192 = vunpack.c.l.b16 %v50
  %v193 = vunpack.c.l.b16 %v51
  %v194 = vunpack.c.l.b16 %v52
  %v195 = vunpack.c.l.b16 %v53
  %v196 = vunpack.c.l.b16 %v54
  %v197 = vunpack.c.l.b16 %v55
  %v198 = vunpack.c.l.b16 %v56
  %v199 = vunpack.c.l.b16 %v57
  %v200 = vunpack.c.l.b16 %v58
  %v201 = vunpack.c.l.b16 %v59
  %v202 = vunpack.c.l.b16 %v60
  %v203 = vunpack.c.l.b16 %v61
  %v204 = vunpack.c.l.b16 %v62
  %v205 = vunpack.c.l.b16 %v63
  %v206 = vunpack.c.l.b16 %v64
  %v207 = vunpack.c.l.b16 %v65
  %v208 = vunpack.c.l.b16 %v66
  %v209 = vunpack.c.l.b16 %v67
  %v210 = vunpack.c.l.b16 %v68
  %v211 = vunpack.c.l.b16 %v69
  %v212 = vunpack.c.l.b16 %v70
  %v213 = vunpack.c.l.b16 %v71
  %v214 = vunpack.c.l.b16 %v72
  %v215 = vunpack.c.l.b16 %v73
  %v216 = vunpack.c.l.b16 %v74
  %v217 = vunpack.c.l.b16 %v75
  %v218 = vunpack.c.l.b16 %v76
  %v219 = vunpack.c.l.b16 %v77
  %v220 = vunpack.c.l.b16 %v78
  %v221 = vunpack.c.l.b16 %v79
  %v222 = vunpack.c.l.b16 %v80
  %v223 = vunpack.c.l.b16 %v81
  %v224 = vunpack.c.l.b16 %v82
  %v225 = vunpack.c.l.b16 %v83
  %v226 = vunpack.c.l.b16 %v84
  %v227 = vunpack.c.l.b16 %v85
  %v228 = vpack.c.b16 %v165, %v164
  %v229 = vpack.c.b16 %v167, %v166
  %v230 = vpack.c.b16 %v169, %v168
  %v231 = vpack.c.b16 %v171, %v170
  %v232 = vpack.c.b16 %v173, %v172
  %v233 = vpack.c.b16 %v175, %v174
  %v234 = vpack.c.b16 %v177, %v176
  %v235 = vpack.c.b16 %v179, %v178
  %v236 = vpack.c.b16 %v181, %v180
  %v237 = vpack.c.b16 %v183, %v182
  %v238 = vpack.c.b16 %v185, %v184
  %v239 = vpack.c.b16 %v187, %v186
  %v240 = vpack.c.b16 %v189, %v188
  %v241 = vpack.c.b16 %v191, %v190
  %v242 = vpack.c.b16 %v193, %v192
  %v243 = vpack.c.b16 %v195, %v194
  %v244 = vpack.c.b16 %v197, %v196
  %v245 = vpack.c.b16 %v199, %v198
  %v246 = vpack.c.b16 %v201, %v200
  %v247 = vpack.c.b16 %v203, %v202
  %v248 = vpack.c.b16 %v205, %v204
  %v249 = vpack.c.b16 %v207, %v206
  %v250 = vpack.c.b16 %v209, %v208
  %v251 = vpack.c.b16 %v211, %v210
  %v252 = vpack.c.b16 %v213, %v212
  %v253 = vpack.c.b16 %v215, %v214
  %v254 = vpack.c.b16 %v217, %v216
  %v255 = vpack.c.b16 %v219, %v218
  %v256 = vpack.c.b16 %v221, %v220
  %v257 = vpack.c.b16 %v223, %v222
  %v258 = vpack.c.b16 %v225, %v224
  %v259 = vpack.c.b16 %v227, %v226
  %292 = vmatpush.bf16.msra.mxu0 %v235
  %293 = vmatpush.bf16.msra.mxu0 %v234
  %294 = vmatpush.bf16.msra.mxu0 %v233
  %295 = vmatpush.bf16.msra.mxu0 %v232
  %296 = vmatpush.bf16.msra.mxu0 %v231
  %297 = vmatpush.bf16.msra.mxu0 %v230
  %298 = vmatpush.bf16.msra.mxu0 %v229
  %299 = vmatpush.bf16.msra.mxu0 %v228
  %300 = vmatmul.bf16.gmra.mxu0 %v92
  %v301 = vpop.f32.mrf.mxu0
  %v302 = vadd.f32 0.0, %v301
  %v303 = vpop.f32.mrf.mxu0
  %304 = vdwg.mxu0
  %305 = vmatpush.bf16.msra.mxu0 %v243
  %306 = vmatpush.bf16.msra.mxu0 %v242
  %307 = vmatpush.bf16.msra.mxu0 %v241
  %308 = vmatpush.bf16.msra.mxu0 %v240
  %309 = vmatpush.bf16.msra.mxu0 %v239
  %310 = vmatpush.bf16.msra.mxu0 %v238
  %311 = vmatpush.bf16.msra.mxu0 %v237
  %312 = vmatpush.bf16.msra.mxu0 %v236
  %313 = vmatmul.bf16.gmra.mxu0 %v93
  %v314 = vpop.f32.mrf.mxu0
  %v315 = vadd.f32 %v302, %v314
  %v316 = vpop.f32.mrf.mxu0
  %317 = vdwg.mxu0
  %318 = vmatpush.bf16.msra.mxu0 %v251
  %319 = vmatpush.bf16.msra.mxu0 %v250
  %320 = vmatpush.bf16.msra.mxu0 %v249
  %321 = vmatpush.bf16.msra.mxu0 %v248
  %322 = vmatpush.bf16.msra.mxu0 %v247
  %323 = vmatpush.bf16.msra.mxu0 %v246
  %324 = vmatpush.bf16.msra.mxu0 %v245
  %325 = vmatpush.bf16.msra.mxu0 %v244
  %326 = vmatmul.bf16.gmra.mxu0 %v94
  %v327 = vpop.f32.mrf.mxu0
  %v328 = vadd.f32 %v315, %v327
  %v329 = vpop.f32.mrf.mxu0
  %330 = vdwg.mxu0
  %331 = vmatpush.bf16.msra.mxu0 %v259
  %332 = vmatpush.bf16.msra.mxu0 %v258
  %333 = vmatpush.bf16.msra.mxu0 %v257
  %334 = vmatpush.bf16.msra.mxu0 %v256
  %335 = vmatpush.bf16.msra.mxu0 %v255
  %336 = vmatpush.bf16.msra.mxu0 %v254
  %337 = vmatpush.bf16.msra.mxu0 %v253
  %338 = vmatpush.bf16.msra.mxu0 %v252
  %339 = vmatmul.bf16.gmra.mxu0 %v95
  %v340 = vpop.f32.mrf.mxu0
  %v341 = vadd.f32 %v328, %v340
  %v342 = vpop.f32.mrf.mxu0
  %343 = vdwg.mxu0
  %v344 = vadd.f32 %v19, %v341
  %345 = vst [vmem:[#allocation2] sm:$0xff] %v344
  // Predicated region
  $region18: #{_lambda_.70} parent=0 // pred_check
    %p346 = pneg %p14
  $region19: #{_lambda_.70} parent=0 // pred_check_branch
    %348 = sbr.rel (%p346) target = $region21
  $region20: #{_lambda_.70} parent=0 // pred_region
    %v349 = vld [vmem:[#allocation2] sm:$0xff]
    %v350 = vld [vmem:[%s2] sm:$0x1]
    %v352 = vperm.slane %v350, 0
    %v354 = vadd.f32 %v349, %v352
    %355 = vst [vmem:[%s3] sm:$0xff] %v354
  $region21: #{_lambda_.70} parent=0 // pred_fallthru
    _
  // Predicated region
  $region22: #{_lambda_.70} parent=0 // pred_check
    _
  $region23: #{_lambda_.70} parent=0 // pred_check_branch
    %357 = sbr.rel (0) target = $region25
  $region24: #{_lambda_.70} parent=0 // pred_region
    _
  $region25: #{_lambda_.70} parent=0 // pred_fallthru
    _
  // Predicated region
  $region26: #{_lambda_.70} parent=0 // pred_check
    _
  $region27: #{_lambda_.70} parent=0 // pred_check_branch
    %359 = sbr.rel (0) target = $region29
  $region28: #{_lambda_.70} parent=0 // pred_region
    _
  $region29: #{_lambda_.70} parent=0 // pred_fallthru
    _

// kernel: _lambda_.72
$region0: #{_lambda_.72}
  #allocation0 [shape = 'u32[]', space=smem, size = 0x4, offset = 0x4, fixed_abs, tag = 'smem constant byte address 0x4 - core index']
  #allocation1 [shape = 'u32[72,128]{1,0:T(1,128)}', space=vmem, size = 0x9000, scoped, tag = 'internal scratch']
  %s0 = inlined_call_operand.vmem [shape: f32[8,128], index: 0, kind: input, shape index: {}]
  %s1 = inlined_call_operand.vmem [shape: f32[1,128], index: 1, kind: input, shape index: {}]
  %s2 = inlined_call_operand.vmem [shape: f32[1,128], index: 2, kind: input, shape index: {}]
  %s3 = inlined_call_operand.vmem [shape: f32[8,128], index: 3, kind: output, shape index: {}]
  %s4 = sld [smem:[#allocation0]]
  $region22: #{_lambda_.72} parent=0
    _
  %s6 = ssub.s32 1, %s4
  %s7 = scalar_select 0, %s6, %s4
  // Predicated region
  $region2: #{_lambda_.72} parent=0 // pred_check
    _
  $region3: #{_lambda_.72} parent=0 // pred_check_branch
    %9 = sbr.rel (0) target = $region5
  $region4: #{_lambda_.72} parent=0 // pred_region
    _
  $region5: #{_lambda_.72} parent=0 // pred_fallthru
    _
  // Predicated region
  $region6: #{_lambda_.72} parent=0 // pred_check
    _
  $region7: #{_lambda_.72} parent=0 // pred_check_branch
    %11 = sbr.rel (0) target = $region9
  $region8: #{_lambda_.72} parent=0 // pred_region
    _
  $region9: #{_lambda_.72} parent=0 // pred_fallthru
    _
  // Predicated region
  $region10: #{_lambda_.72} parent=0 // pred_check
    _
  $region11: #{_lambda_.72} parent=0 // pred_check_branch
    %13 = sbr.rel (0) target = $region13
  $region12: #{_lambda_.72} parent=0 // pred_region
    _
  $region13: #{_lambda_.72} parent=0 // pred_fallthru
    _
  %v14 = vld [vmem:[%s0] sm:$0xff]
  %v15 = vld [vmem:[%s1] sm:$0x1]
  %v17 = vperm.slane %v15, 0
  %v19 = vmul.f32 %v14, %v17
  %v20 = vld [vmem:[%s2] sm:$0x1]
  %v22 = vperm.slane %v20, 0
  %v24 = vadd.f32 %v19, %v22
  %25 = vst [vmem:[%s3] sm:$0xff] %v24
  // Predicated region
  $region14: #{_lambda_.72} parent=0 // pred_check
    _
  $region15: #{_lambda_.72} parent=0 // pred_check_branch
    %27 = sbr.rel (0) target = $region17
  $region16: #{_lambda_.72} parent=0 // pred_region
    _
  $region17: #{_lambda_.72} parent=0 // pred_fallthru
    _
  // Predicated region
  $region18: #{_lambda_.72} parent=0 // pred_check
    _
  $region19: #{_lambda_.72} parent=0 // pred_check_branch
    %29 = sbr.rel (0) target = $region21
  $region20: #{_lambda_.72} parent=0 // pred_region
    _
  $region21: #{_lambda_.72} parent=0 // pred_fallthru
    _

// kernel: _lambda_.85
$region0: #{_lambda_.85}
  #allocation0 [shape = 'u32[]', space=smem, size = 0x4, offset = 0x4, fixed_abs, tag = 'smem constant byte address 0x4 - core index']
  #allocation1 [shape = 'u32[72,128]{1,0:T(1,128)}', space=vmem, size = 0x9000, scoped, tag = 'internal scratch']
  %s0 = inlined_call_operand.vmem [shape: f32[2,128], index: 0, kind: input, shape index: {}]
  %s1 = inlined_call_operand.vmem [shape: f32[1,128], index: 1, kind: input, shape index: {}]
  %s2 = inlined_call_operand.vmem [shape: f32[1,128], index: 2, kind: input, shape index: {}]
  %s3 = inlined_call_operand.vmem [shape: f32[2,128], index: 3, kind: output, shape index: {}]
  %s4 = sld [smem:[#allocation0]]
  $region22: #{_lambda_.85} parent=0
    _
  %s6 = ssub.s32 1, %s4
  %s7 = scalar_select 0, %s6, %s4
  // Predicated region
  $region2: #{_lambda_.85} parent=0 // pred_check
    _
  $region3: #{_lambda_.85} parent=0 // pred_check_branch
    %9 = sbr.rel (0) target = $region5
  $region4: #{_lambda_.85} parent=0 // pred_region
    _
  $region5: #{_lambda_.85} parent=0 // pred_fallthru
    _
  // Predicated region
  $region6: #{_lambda_.85} parent=0 // pred_check
    _
  $region7: #{_lambda_.85} parent=0 // pred_check_branch
    %11 = sbr.rel (0) target = $region9
  $region8: #{_lambda_.85} parent=0 // pred_region
    _
  $region9: #{_lambda_.85} parent=0 // pred_fallthru
    _
  // Predicated region
  $region10: #{_lambda_.85} parent=0 // pred_check
    _
  $region11: #{_lambda_.85} parent=0 // pred_check_branch
    %13 = sbr.rel (0) target = $region13
  $region12: #{_lambda_.85} parent=0 // pred_region
    _
  $region13: #{_lambda_.85} parent=0 // pred_fallthru
    _
  %v14 = vld [vmem:[%s0] sm:$0x3]
  %v15 = vld [vmem:[%s1] sm:$0x1]
  %v17 = vperm.slane %v15, 0
  %v19 = vmul.f32 %v14, %v17
  %v20 = vld [vmem:[%s2] sm:$0x1]
  %v22 = vperm.slane %v20, 0
  %v24 = vadd.f32 %v19, %v22
  %25 = vst [vmem:[%s3] sm:$0x3] %v24
  // Predicated region
  $region14: #{_lambda_.85} parent=0 // pred_check
    _
  $region15: #{_lambda_.85} parent=0 // pred_check_branch
    %27 = sbr.rel (0) target = $region17
  $region16: #{_lambda_.85} parent=0 // pred_region
    _
  $region17: #{_lambda_.85} parent=0 // pred_fallthru
    _
  // Predicated region
  $region18: #{_lambda_.85} parent=0 // pred_check
    _
  $region19: #{_lambda_.85} parent=0 // pred_check_branch
    %29 = sbr.rel (0) target = $region21
  $region20: #{_lambda_.85} parent=0 // pred_region
    _
  $region21: #{_lambda_.85} parent=0 // pred_fallthru
    _

// kernel: _lambda_.81
$region0: #{_lambda_.81}
  #allocation0 [shape = 'u32[]', space=smem, size = 0x4, offset = 0x4, fixed_abs, tag = 'smem constant byte address 0x4 - core index']
  #allocation1 [shape = 'u32[72,128]{1,0:T(1,128)}', space=vmem, size = 0x9000, scoped, tag = 'internal scratch']
  %s0 = inlined_call_operand.vmem [shape: f32[2,128], index: 0, kind: input, shape index: {}]
  %s1 = inlined_call_operand.vmem [shape: f32[8,128], index: 1, kind: output, shape index: {0}]
  %s2 = inlined_call_operand.vmem [shape: f32[8,128], index: 2, kind: output, shape index: {1}]
  %3 = xla_tuple %s1, %s2
  %s4 = sld [smem:[#allocation0]]
  $region26: #{_lambda_.81} parent=0
    _
  %s6 = ssub.s32 1, %s4
  %s7 = scalar_select 0, %s6, %s4
  // Predicated region
  $region2: #{_lambda_.81} parent=0 // pred_check
    _
  $region3: #{_lambda_.81} parent=0 // pred_check_branch
    %9 = sbr.rel (0) target = $region5
  $region4: #{_lambda_.81} parent=0 // pred_region
    _
  $region5: #{_lambda_.81} parent=0 // pred_fallthru
    _
  %p10 = scmp.eq.s32.totalorder 0, 0
  // Predicated region
  $region6: #{_lambda_.81} parent=0 // pred_check
    %p11 = pneg %p10
  $region7: #{_lambda_.81} parent=0 // pred_check_branch
    %13 = sbr.rel (%p11) target = $region9
  $region8: #{_lambda_.81} parent=0 // pred_region
    %14 = vst [vmem:[%s1] sm:$0xff] 0.0
    %15 = vst [vmem:[%s2] sm:$0xff] 0.0
  $region9: #{_lambda_.81} parent=0 // pred_fallthru
    _
  %v16 = vld [vmem:[%s0] sm:$0x3]
  %v17 = vld [vmem:[%s1] sm:$0xff]
  %vm18 = vcmask 1041408
  %v19 = vsel %vm18, %v16, 0.0
  %v20 = vrot.slane %v19, 4
  %v21 = vadd.f32 %v19, %v20
  %v22 = vrot.slane %v21, 2
  %v23 = vadd.f32 %v21, %v22
  %v24 = vrot.slane %v23, 1
  %v25 = vadd.f32 %v23, %v24
  %v26 = vadd.f32 %v17, %v25
  %27 = vst [vmem:[%s1] sm:$0xff] %v26
  %v28 = vld [vmem:[%s2] sm:$0xff]
  %v29 = vmul.f32 %v16, %v16
  %v30 = vsel %vm18, %v29, 0.0
  %v31 = vrot.slane %v30, 4
  %v32 = vadd.f32 %v30, %v31
  %v33 = vrot.slane %v32, 2
  %v34 = vadd.f32 %v32, %v33
  %v35 = vrot.slane %v34, 1
  %v36 = vadd.f32 %v34, %v35
  %v37 = vadd.f32 %v28, %v36
  %38 = vst [vmem:[%s2] sm:$0xff] %v37
  // Predicated region
  $region10: #{_lambda_.81} parent=0 // pred_check
    _
  $region11: #{_lambda_.81} parent=0 // pred_check_branch
    %40 = sbr.rel (0) target = $region13
  $region12: #{_lambda_.81} parent=0 // pred_region
    _
  $region13: #{_lambda_.81} parent=0 // pred_fallthru
    _
  // Predicated region
  $region14: #{_lambda_.81} parent=0 // pred_check
    _
  $region15: #{_lambda_.81} parent=0 // pred_check_branch
    %42 = sbr.rel (0) target = $region17
  $region16: #{_lambda_.81} parent=0 // pred_region
    _
  $region17: #{_lambda_.81} parent=0 // pred_fallthru
    _
  // Predicated region
  $region18: #{_lambda_.81} parent=0 // pred_check
    _
  $region19: #{_lambda_.81} parent=0 // pred_check_branch
    %44 = sbr.rel (0) target = $region21
  $region20: #{_lambda_.81} parent=0 // pred_region
    _
  $region21: #{_lambda_.81} parent=0 // pred_fallthru
    _
  // Predicated region
  $region22: #{_lambda_.81} parent=0 // pred_check
    _
  $region23: #{_lambda_.81} parent=0 // pred_check_branch
    %46 = sbr.rel (0) target = $region25
  $region24: #{_lambda_.81} parent=0 // pred_region
    _
  $region25: #{_lambda_.81} parent=0 // pred_fallthru
    _

// kernel: _lambda_.74
$region0: #{_lambda_.74}
  #allocation0 [shape = 'u32[]', space=smem, size = 0x4, offset = 0x4, fixed_abs, tag = 'smem constant byte address 0x4 - core index']
  #allocation1 [shape = 'u32[72,128]{1,0:T(1,128)}', space=vmem, size = 0x9000, scoped, tag = 'internal scratch']
  #allocation2 [shape = 'f32[2,128]{1,0:T(2,128)}', space=vmem, size = 0x400, scoped, tag = 'scratch operand']
  %s0 = inlined_call_operand.vmem [shape: bf16[2,256], index: 0, kind: input, shape index: {}]
  %s1 = inlined_call_operand.vmem [shape: bf16[256,128], index: 1, kind: input, shape index: {}]
  %s2 = inlined_call_operand.vmem [shape: f32[1,128], index: 2, kind: input, shape index: {}]
  %s3 = inlined_call_operand.vmem [shape: f32[2,128], index: 3, kind: output, shape index: {}]
  %s4 = sld [smem:[#allocation0]]
  $region30: #{_lambda_.74} parent=0
    _
  %s6 = ssub.s32 1, %s4
  %s7 = scalar_select 0, %s6, %s4
  // Predicated region
  $region2: #{_lambda_.74} parent=0 // pred_check
    _
  $region3: #{_lambda_.74} parent=0 // pred_check_branch
    %9 = sbr.rel (0) target = $region5
  $region4: #{_lambda_.74} parent=0 // pred_region
    _
  $region5: #{_lambda_.74} parent=0 // pred_fallthru
    _
  // Predicated region
  $region6: #{_lambda_.74} parent=0 // pred_check
    _
  $region7: #{_lambda_.74} parent=0 // pred_check_branch
    %11 = sbr.rel (0) target = $region9
  $region8: #{_lambda_.74} parent=0 // pred_region
    _
  $region9: #{_lambda_.74} parent=0 // pred_fallthru
    _
  // Predicated region
  $region10: #{_lambda_.74} parent=0 // pred_check
    _
  $region11: #{_lambda_.74} parent=0 // pred_check_branch
    %13 = sbr.rel (0) target = $region13
  $region12: #{_lambda_.74} parent=0 // pred_region
    _
  $region13: #{_lambda_.74} parent=0 // pred_fallthru
    _
  %p14 = scmp.eq.s32.totalorder 0, 0
  // Predicated region
  $region14: #{_lambda_.74} parent=0 // pred_check
    %p15 = pneg %p14
  $region15: #{_lambda_.74} parent=0 // pred_check_branch
    %17 = sbr.rel (%p15) target = $region17
  $region16: #{_lambda_.74} parent=0 // pred_region
    %18 = vst [vmem:[#allocation2] sm:$0x3] 0.0
  $region17: #{_lambda_.74} parent=0 // pred_fallthru
    _
  %v19 = vld [vmem:[#allocation2] sm:$0x3]
  %v20 = vld [vmem:[%s0] sm:$0x3]
  %v21 = vld [vmem:[%s1] sm:$0xf]
  %v22 = vld [vmem:[%s1 + $0x4] sm:$0xf]
  %v23 = vld [vmem:[%s1 + $0x8] sm:$0xf]
  %v24 = vld [vmem:[%s1 + $0xc] sm:$0xf]
  %v25 = vld [vmem:[%s1 + $0x10] sm:$0xf]
  %v26 = vld [vmem:[%s1 + $0x14] sm:$0xf]
  %v27 = vld [vmem:[%s1 + $0x18] sm:$0xf]
  %v28 = vld [vmem:[%s1 + $0x1c] sm:$0xf]
  %v29 = vld [vmem:[%s1 + $0x20] sm:$0xf]
  %v30 = vld [vmem:[%s1 + $0x24] sm:$0xf]
  %v31 = vld [vmem:[%s1 + $0x28] sm:$0xf]
  %v32 = vld [vmem:[%s1 + $0x2c] sm:$0xf]
  %v33 = vld [vmem:[%s1 + $0x30] sm:$0xf]
  %v34 = vld [vmem:[%s1 + $0x34] sm:$0xf]
  %v35 = vld [vmem:[%s1 + $0x38] sm:$0xf]
  %v36 = vld [vmem:[%s1 + $0x3c] sm:$0xf]
  %v37 = vld [vmem:[%s1 + $0x40] sm:$0xf]
  %v38 = vld [vmem:[%s1 + $0x44] sm:$0xf]
  %v39 = vld [vmem:[%s1 + $0x48] sm:$0xf]
  %v40 = vld [vmem:[%s1 + $0x4c] sm:$0xf]
  %v41 = vld [vmem:[%s1 + $0x50] sm:$0xf]
  %v42 = vld [vmem:[%s1 + $0x54] sm:$0xf]
  %v43 = vld [vmem:[%s1 + $0x58] sm:$0xf]
  %v44 = vld [vmem:[%s1 + $0x5c] sm:$0xf]
  %v45 = vld [vmem:[%s1 + $0x60] sm:$0xf]
  %v46 = vld [vmem:[%s1 + $0x64] sm:$0xf]
  %v47 = vld [vmem:[%s1 + $0x68] sm:$0xf]
  %v48 = vld [vmem:[%s1 + $0x6c] sm:$0xf]
  %v49 = vld [vmem:[%s1 + $0x70] sm:$0xf]
  %v50 = vld [vmem:[%s1 + $0x74] sm:$0xf]
  %v51 = vld [vmem:[%s1 + $0x78] sm:$0xf]
  %v52 = vld [vmem:[%s1 + $0x7c] sm:$0xf]
  %54 = vst [vmem:[#allocation1] ss:$9 sm:$0xff] %v20
  %v55 = vld [vmem:[#allocation1] sm:$0xff]
  %v56 = vld [vmem:[#allocation1 + $0x9] sm:$0xff]
  %v91 = vunpack.c.l.b16 %v21
  %v92 = vunpack.c.l.b16 %v22
  %v93 = vunpack.c.l.b16 %v23
  %v94 = vunpack.c.l.b16 %v24
  %v95 = vunpack.c.l.b16 %v25
  %v96 = vunpack.c.l.b16 %v26
  %v97 = vunpack.c.l.b16 %v27
  %v98 = vunpack.c.l.b16 %v28
  %v99 = vunpack.c.l.b16 %v29
  %v100 = vunpack.c.l.b16 %v30
  %v101 = vunpack.c.l.b16 %v31
  %v102 = vunpack.c.l.b16 %v32
  %v103 = vunpack.c.l.b16 %v33
  %v104 = vunpack.c.l.b16 %v34
  %v105 = vunpack.c.l.b16 %v35
  %v106 = vunpack.c.l.b16 %v36
  %v107 = vunpack.c.l.b16 %v37
  %v108 = vunpack.c.l.b16 %v38
  %v109 = vunpack.c.l.b16 %v39
  %v110 = vunpack.c.l.b16 %v40
  %v111 = vunpack.c.l.b16 %v41
  %v112 = vunpack.c.l.b16 %v42
  %v113 = vunpack.c.l.b16 %v43
  %v114 = vunpack.c.l.b16 %v44
  %v115 = vunpack.c.l.b16 %v45
  %v116 = vunpack.c.l.b16 %v46
  %v117 = vunpack.c.l.b16 %v47
  %v118 = vunpack.c.l.b16 %v48
  %v119 = vunpack.c.l.b16 %v49
  %v120 = vunpack.c.l.b16 %v50
  %v121 = vunpack.c.l.b16 %v51
  %v122 = vunpack.c.l.b16 %v52
  %v123 = vpack.c.b16 %v92, %v91
  %v124 = vpack.c.b16 %v94, %v93
  %v125 = vpack.c.b16 %v96, %v95
  %v126 = vpack.c.b16 %v98, %v97
  %v127 = vpack.c.b16 %v100, %v99
  %v128 = vpack.c.b16 %v102, %v101
  %v129 = vpack.c.b16 %v104, %v103
  %v130 = vpack.c.b16 %v106, %v105
  %v131 = vpack.c.b16 %v108, %v107
  %v132 = vpack.c.b16 %v110, %v109
  %v133 = vpack.c.b16 %v112, %v111
  %v134 = vpack.c.b16 %v114, %v113
  %v135 = vpack.c.b16 %v116, %v115
  %v136 = vpack.c.b16 %v118, %v117
  %v137 = vpack.c.b16 %v120, %v119
  %v138 = vpack.c.b16 %v122, %v121
  %155 = vmatpush.bf16.msra.mxu0 %v130
  %156 = vmatpush.bf16.msra.mxu0 %v129
  %157 = vmatpush.bf16.msra.mxu0 %v128
  %158 = vmatpush.bf16.msra.mxu0 %v127
  %159 = vmatpush.bf16.msra.mxu0 %v126
  %160 = vmatpush.bf16.msra.mxu0 %v125
  %161 = vmatpush.bf16.msra.mxu0 %v124
  %162 = vmatpush.bf16.msra.mxu0 %v123
  %163 = vmatmul.bf16.gmra.mxu0 %v55
  %v164 = vpop.f32.mrf.mxu0
  %v165 = vadd.f32 0.0, %v164
  %v166 = vpop.f32.mrf.mxu0
  %167 = vdwg.mxu0
  %168 = vmatpush.bf16.msra.mxu0 %v138
  %169 = vmatpush.bf16.msra.mxu0 %v137
  %170 = vmatpush.bf16.msra.mxu0 %v136
  %171 = vmatpush.bf16.msra.mxu0 %v135
  %172 = vmatpush.bf16.msra.mxu0 %v134
  %173 = vmatpush.bf16.msra.mxu0 %v133
  %174 = vmatpush.bf16.msra.mxu0 %v132
  %175 = vmatpush.bf16.msra.mxu0 %v131
  %176 = vmatmul.bf16.gmra.mxu0 %v56
  %v177 = vpop.f32.mrf.mxu0
  %v178 = vadd.f32 %v165, %v177
  %v179 = vpop.f32.mrf.mxu0
  %180 = vdwg.mxu0
  %v181 = vadd.f32 %v19, %v178
  %182 = vst [vmem:[#allocation2] sm:$0x3] %v181
  // Predicated region
  $region18: #{_lambda_.74} parent=0 // pred_check
    %p183 = pneg %p14
  $region19: #{_lambda_.74} parent=0 // pred_check_branch
    %185 = sbr.rel (%p183) target = $region21
  $region20: #{_lambda_.74} parent=0 // pred_region
    %v186 = vld [vmem:[#allocation2] sm:$0x3]
    %v187 = vld [vmem:[%s2] sm:$0x1]
    %v189 = vperm.slane %v187, 0
    %v191 = vadd.f32 %v186, %v189
    %192 = vst [vmem:[%s3] sm:$0x3] %v191
  $region21: #{_lambda_.74} parent=0 // pred_fallthru
    _
  // Predicated region
  $region22: #{_lambda_.74} parent=0 // pred_check
    _
  $region23: #{_lambda_.74} parent=0 // pred_check_branch
    %194 = sbr.rel (0) target = $region25
  $region24: #{_lambda_.74} parent=0 // pred_region
    _
  $region25: #{_lambda_.74} parent=0 // pred_fallthru
    _
  // Predicated region
  $region26: #{_lambda_.74} parent=0 // pred_check
    _
  $region27: #{_lambda_.74} parent=0 // pred_check_branch
    %196 = sbr.rel (0) target = $region29
  $region28: #{_lambda_.74} parent=0 // pred_region
    _
  $region29: #{_lambda_.74} parent=0 // pred_fallthru
    _

// kernel: _lambda_.73
$region0: #{_lambda_.73}
  #allocation0 [shape = 'u32[]', space=smem, size = 0x4, offset = 0x4, fixed_abs, tag = 'smem constant byte address 0x4 - core index']
  #allocation1 [shape = 'u32[72,128]{1,0:T(1,128)}', space=vmem, size = 0x9000, scoped, tag = 'internal scratch']
  #allocation2 [shape = 'f32[2,128]{1,0:T(2,128)}', space=vmem, size = 0x400, scoped, tag = 'scratch operand']
  %s0 = inlined_call_operand.vmem [shape: bf16[2,1024], index: 0, kind: input, shape index: {}]
  %s1 = inlined_call_operand.vmem [shape: bf16[1024,128], index: 1, kind: input, shape index: {}]
  %s2 = inlined_call_operand.vmem [shape: f32[1,128], index: 2, kind: input, shape index: {}]
  %s3 = inlined_call_operand.vmem [shape: f32[2,128], index: 3, kind: output, shape index: {}]
  %s4 = sld [smem:[#allocation0]]
  $region53: #{_lambda_.73} parent=0
    _
  %s6 = ssub.s32 1, %s4
  %s7 = scalar_select 0, %s6, %s4
  loop: start=0, step=1, limit=4
  $region2: #{_lambda_.73} parent=0 // loop_pre_header
    _
  $region3: #{_lambda_.73} parent=0 // loop_header
    %s9 = sphi 0, %s13
    %p10 = scmp.ge.s32.totalorder %s9, 4
    %s16 = sphi 0, %s35
    %s17 = sphi 0, %s31
    %s18 = sphi 0, %s27
    %s19 = sphi 0, %s16
    %s20 = sphi 0, %s17
    %s21 = sphi 0, %s18
    %s22 = sphi 0, %s19
    %s23 = sphi 0, %s20
    %s24 = sphi 0, %s21
    %s40 = sphi 0, %s42
    %s43 = sphi 0, %s40
    %s44 = sphi 0, %s43
    %s60 = sphi 0, %s44
    %s68 = sphi 0, %s70
    %s71 = sphi 0, %s68
    %s72 = sphi 0, %s71
    %s88 = sphi 0, %s72
    %s94 = sphi 0, %s96
    %s97 = sphi 0, %s94
    %s98 = sphi 0, %s97
    %s114 = sphi 0, %s98
    %s122 = sphi 0, %s124
    %s125 = sphi 0, %s122
    %s126 = sphi 0, %s125
    %s142 = sphi 0, %s126
  $region4: #{_lambda_.73} parent=0 // loop_header_branch
    %12 = sbr.rel (%p10) target = $region8
  $region5: #{_lambda_.73} parent=0 // loop_body
    %s14 = ssub.s32 %s9, 1
    %s15 = ssub.s32 %s9, 2
    %s25 = sadd.s32 1, %s18
    %p26 = scmp.ge.s32.totalorder %s25, 2
    %s27 = scalar_select %p26, 0, %s25
    %s28 = sadd.s32 1, %s17
    %s29 = scalar_select %p26, %s28, %s17
    %p30 = scmp.ge.s32.totalorder %s29, 1
    %s31 = scalar_select %p30, 0, %s29
    %s32 = sadd.s32 1, %s16
    %s33 = scalar_select %p30, %s32, %s16
    %p34 = scmp.ge.s32.totalorder %s33, 1
    %s35 = scalar_select %p34, 0, %s33
    %s36 = ssub.s32 %s16, %s35
    %s37 = ssub.s32 %s18, %s27
    %s38 = sor.u32 %s36, %s37
    %p39 = scmp.eq.s32.totalorder %s38, 0
    %s41 = sadd.s32 %s40, 1
    %s42 = scalar_select %p39, %s40, %s41
    %p45 = pneg %p39
    %p46 = scmp.eq.s32.totalorder %s9, 1
    %p47 = por %p45, %p46
    %p48 = scmp.ne.s32.totalorder %s40, %s43
    %p49 = scmp.eq.s32.totalorder %s9, 0
    %p50 = por %p48, %p49
    %p51 = scmp.ne.s32.totalorder %s40, %s43
    %p52 = scmp.eq.s32.totalorder %s14, 1
    %p53 = por %p51, %p52
    %p54 = scmp.ne.s32.totalorder %s43, %s44
    %p55 = scmp.eq.s32.totalorder %s14, 0
    %p56 = por %p54, %p55
    %p57 = scmp.ne.s32.totalorder %s43, %s44
    %p58 = scmp.eq.s32.totalorder %s15, 1
    %p59 = por %p57, %p58
    %p61 = scmp.ne.s32.totalorder %s44, %s60
    %p62 = scmp.eq.s32.totalorder %s15, 0
    %p63 = por %p61, %p62
    %s64 = ssub.s32 %s18, %s27
    %s65 = ssub.s32 %s17, %s31
    %s66 = sor.u32 %s64, %s65
    %p67 = scmp.eq.s32.totalorder %s66, 0
    %s69 = sadd.s32 %s68, 1
    %s70 = scalar_select %p67, %s68, %s69
    %p73 = pneg %p67
    %p74 = scmp.eq.s32.totalorder %s9, 1
    %p75 = por %p73, %p74
    %p76 = scmp.ne.s32.totalorder %s68, %s71
    %p77 = scmp.eq.s32.totalorder %s9, 0
    %p78 = por %p76, %p77
    %p79 = scmp.ne.s32.totalorder %s68, %s71
    %p80 = scmp.eq.s32.totalorder %s14, 1
    %p81 = por %p79, %p80
    %p82 = scmp.ne.s32.totalorder %s71, %s72
    %p83 = scmp.eq.s32.totalorder %s14, 0
    %p84 = por %p82, %p83
    %p85 = scmp.ne.s32.totalorder %s71, %s72
    %p86 = scmp.eq.s32.totalorder %s15, 1
    %p87 = por %p85, %p86
    %p89 = scmp.ne.s32.totalorder %s72, %s88
    %p90 = scmp.eq.s32.totalorder %s15, 0
    %p91 = por %p89, %p90
    %s92 = ssub.s32 %s17, %s31
    %p93 = scmp.eq.s32.totalorder %s92, 0
    %s95 = sadd.s32 %s94, 1
    %s96 = scalar_select %p93, %s94, %s95
    %p99 = pneg %p93
    %p100 = scmp.eq.s32.totalorder %s9, 1
    %p101 = por %p99, %p100
    %p102 = scmp.ne.s32.totalorder %s94, %s97
    %p103 = scmp.eq.s32.totalorder %s9, 0
    %p104 = por %p102, %p103
    %p105 = scmp.ne.s32.totalorder %s94, %s97
    %p106 = scmp.eq.s32.totalorder %s14, 1
    %p107 = por %p105, %p106
    %p108 = scmp.ne.s32.totalorder %s97, %s98
    %p109 = scmp.eq.s32.totalorder %s14, 0
    %p110 = por %p108, %p109
    %p111 = scmp.ne.s32.totalorder %s97, %s98
    %p112 = scmp.eq.s32.totalorder %s15, 1
    %p113 = por %p111, %p112
    %p115 = scmp.ne.s32.totalorder %s98, %s114
    %p116 = scmp.eq.s32.totalorder %s15, 0
    %p117 = por %p115, %p116
    %s118 = ssub.s32 %s16, %s35
    %s119 = ssub.s32 %s17, %s31
    %s120 = sor.u32 %s118, %s119
    %p121 = scmp.eq.s32.totalorder %s120, 0
    %s123 = sadd.s32 %s122, 1
    %s124 = scalar_select %p121, %s122, %s123
    %p127 = pneg %p121
    %p128 = scmp.eq.s32.totalorder %s9, 1
    %p129 = por %p127, %p128
    %p130 = scmp.ne.s32.totalorder %s122, %s125
    %p131 = scmp.eq.s32.totalorder %s9, 0
    %p132 = por %p130, %p131
    %p133 = scmp.ne.s32.totalorder %s122, %s125
    %p134 = scmp.eq.s32.totalorder %s14, 1
    %p135 = por %p133, %p134
    %p136 = scmp.ne.s32.totalorder %s125, %s126
    %p137 = scmp.eq.s32.totalorder %s14, 0
    %p138 = por %p136, %p137
    %p139 = scmp.ne.s32.totalorder %s125, %s126
    %p140 = scmp.eq.s32.totalorder %s15, 1
    %p141 = por %p139, %p140
    %p143 = scmp.ne.s32.totalorder %s126, %s142
    %p144 = scmp.eq.s32.totalorder %s15, 0
    %p145 = por %p143, %p144
    %p146 = scmp.le.s32.totalorder 1, %s9
    %p147 = scmp.lt.s32.totalorder %s9, 3
    %p148 = pnand %p146, %p147
    %p149 = pneg %p148
    // Predicated region
    $region9: #{_lambda_.73} parent=5 // pred_check
      _
    $region10: #{_lambda_.73} parent=5 // pred_check_branch
      %151 = sbr.rel (%p148) target = $region12
    $region11: #{_lambda_.73} parent=5 // pred_region
      %s152 = ssub.s32 %s9, 1
      // Predicated region
      $region13: #{_lambda_.73} parent=11 // pred_check
        %p153 = pneg %p110
      $region14: #{_lambda_.73} parent=11 // pred_check_branch
        %155 = sbr.rel (%p153) target = $region16
      $region15: #{_lambda_.73} parent=11 // pred_region
        %p156 = scmp.lt.s32.totalorder %s20, 0
        %s157 = scalar_select %p156, %s20, 0
        %s158 = scalar_lea.vmem %s2, %s157
      $region16: #{_lambda_.73} parent=11 // pred_fallthru
        _
    $region12: #{_lambda_.73} parent=5 // pred_fallthru
      _
    %p159 = scmp.lt.s32.totalorder %s9, 2
    // Predicated region
    $region17: #{_lambda_.73} parent=5 // pred_check
      %p160 = pneg %p159
    $region18: #{_lambda_.73} parent=5 // pred_check_branch
      %162 = sbr.rel (%p160) target = $region20
    $region19: #{_lambda_.73} parent=5 // pred_region
      // Predicated region
      $region21: #{_lambda_.73} parent=19 // pred_check
        %p163 = pneg %p50
      $region22: #{_lambda_.73} parent=19 // pred_check_branch
        %165 = sbr.rel (%p163) target = $region24
      $region23: #{_lambda_.73} parent=19 // pred_region
        %s166 = smul.u32 4, %s18
        %p167 = scmp.lt.s32.totalorder %s16, 0
        %s168 = scalar_select %p167, %s16, 0
        %p169 = scmp.lt.s32.totalorder %s166, 7
        %s170 = scalar_select %p169, %s166, 7
        %s171 = smul.addr %s168, 8
        %s172 = sadd.s32 %s170, %s171
        %s173 = scalar_lea.vmem %s0, %s172
        %s174 = smul.u32 4, %s18
      $region24: #{_lambda_.73} parent=19 // pred_fallthru
        _
      // Predicated region
      $region25: #{_lambda_.73} parent=19 // pred_check
        %p175 = pneg %p78
      $region26: #{_lambda_.73} parent=19 // pred_check_branch
        %177 = sbr.rel (%p175) target = $region28
      $region27: #{_lambda_.73} parent=19 // pred_region
        %s178 = smul.u32 64, %s18
        %p179 = scmp.lt.s32.totalorder %s178, 127
        %s180 = scalar_select %p179, %s178, 127
        %p181 = scmp.lt.s32.totalorder %s17, 0
        %s182 = scalar_select %p181, %s17, 0
        %s183 = sadd.s32 %s182, %s180
        %s184 = smul.addr %s183, 4
        %s185 = scalar_lea.vmem %s1, %s184
        %s186 = smul.u32 64, %s18
      $region28: #{_lambda_.73} parent=19 // pred_fallthru
        _
    $region20: #{_lambda_.73} parent=5 // pred_fallthru
      _
    %p187 = scmp.le.s32.totalorder 1, %s9
    %p188 = scmp.lt.s32.totalorder %s9, 3
    %p189 = pnand %p187, %p188
    %p190 = pneg %p189
    // Predicated region
    $region29: #{_lambda_.73} parent=5 // pred_check
      _
    $region30: #{_lambda_.73} parent=5 // pred_check_branch
      %192 = sbr.rel (%p189) target = $region32
    $region31: #{_lambda_.73} parent=5 // pred_region
      %s193 = ssub.s32 %s9, 1
      %s194 = smul.u32 4, %s21
      %p195 = scmp.lt.s32.totalorder %s19, 0
      %s196 = scalar_select %p195, %s19, 0
      %p197 = scmp.lt.s32.totalorder %s194, 7
      %s198 = scalar_select %p197, %s194, 7
      %s199 = smul.addr %s196, 8
      %s200 = sadd.s32 %s198, %s199
      %s201 = scalar_lea.vmem %s0, %s200
      %p202 = pneg %p56
      %p203 = pneg %p53
      %s204 = smul.u32 64, %s21
      %p205 = scmp.lt.s32.totalorder %s204, 127
      %s206 = scalar_select %p205, %s204, 127
      %p207 = scmp.lt.s32.totalorder %s20, 0
      %s208 = scalar_select %p207, %s20, 0
      %s209 = sadd.s32 %s208, %s206
      %s210 = smul.addr %s209, 4
      %s211 = scalar_lea.vmem %s1, %s210
      %p212 = pneg %p84
      %p213 = pneg %p81
      %p214 = scmp.lt.s32.totalorder %s20, 0
      %s215 = scalar_select %p214, %s20, 0
      %s216 = scalar_lea.vmem %s2, %s215
      %p217 = pneg %p110
      %p218 = pneg %p107
      %p219 = pneg %p138
      %p220 = pneg %p135
      %p221 = scmp.lt.s32.totalorder %s19, 0
      %s222 = scalar_select %p221, %s19, 0
      %p223 = scmp.lt.s32.totalorder %s20, 0
      %s224 = scalar_select %p223, %s20, 0
      %s225 = sadd.s32 %s224, %s222
      %s226 = smul.addr %s225, 2
      %s227 = scalar_lea.vmem %s3, %s226
      %s228 = smul.u32 4, %s21
      %p229 = scmp.lt.s32.totalorder %s19, 0
      %s230 = scalar_select %p229, %s19, 0
      %p231 = scmp.lt.s32.totalorder %s228, 7
      %s232 = scalar_select %p231, %s228, 7
      %s233 = smul.addr %s230, 8
      %s234 = sadd.s32 %s232, %s233
      %s235 = scalar_lea.vmem %s0, %s234
      %s236 = smul.u32 4, %s21
      %s237 = smul.u32 64, %s21
      %p238 = scmp.lt.s32.totalorder %s237, 127
      %s239 = scalar_select %p238, %s237, 127
      %p240 = scmp.lt.s32.totalorder %s20, 0
      %s241 = scalar_select %p240, %s20, 0
      %s242 = sadd.s32 %s241, %s239
      %s243 = smul.addr %s242, 4
      %s244 = scalar_lea.vmem %s1, %s243
      %s245 = smul.u32 64, %s21
      %p246 = scmp.lt.s32.totalorder %s20, 0
      %s247 = scalar_select %p246, %s20, 0
      %s248 = scalar_lea.vmem %s2, %s247
      %p249 = scmp.lt.s32.totalorder %s19, 0
      %s250 = scalar_select %p249, %s19, 0
      %p251 = scmp.lt.s32.totalorder %s20, 0
      %s252 = scalar_select %p251, %s20, 0
      %s253 = sadd.s32 %s252, %s250
      %s254 = smul.addr %s253, 2
      %s255 = scalar_lea.vmem %s3, %s254
      %p256 = scmp.eq.s32.totalorder %s21, 0
      // Predicated region
      $region33: #{_lambda_.73} parent=31 // pred_check
        %p257 = pneg %p256
      $region34: #{_lambda_.73} parent=31 // pred_check_branch
        %259 = sbr.rel (%p257) target = $region36
      $region35: #{_lambda_.73} parent=31 // pred_region
        %260 = vst [vmem:[#allocation2] sm:$0x3] 0.0
      $region36: #{_lambda_.73} parent=31 // pred_fallthru
        _
      %v261 = vld [vmem:[#allocation2] sm:$0x3]
      %v262 = vld [vmem:[%s235] sm:$0xf]
      %v263 = vld [vmem:[%s244] sm:$0xf]
      %v264 = vld [vmem:[%s244 + $0x4] sm:$0xf]
      %v265 = vld [vmem:[%s244 + $0x8] sm:$0xf]
      %v266 = vld [vmem:[%s244 + $0xc] sm:$0xf]
      %v267 = vld [vmem:[%s244 + $0x10] sm:$0xf]
      %v268 = vld [vmem:[%s244 + $0x14] sm:$0xf]
      %v269 = vld [vmem:[%s244 + $0x18] sm:$0xf]
      %v270 = vld [vmem:[%s244 + $0x1c] sm:$0xf]
      %v271 = vld [vmem:[%s244 + $0x20] sm:$0xf]
      %v272 = vld [vmem:[%s244 + $0x24] sm:$0xf]
      %v273 = vld [vmem:[%s244 + $0x28] sm:$0xf]
      %v274 = vld [vmem:[%s244 + $0x2c] sm:$0xf]
      %v275 = vld [vmem:[%s244 + $0x30] sm:$0xf]
      %v276 = vld [vmem:[%s244 + $0x34] sm:$0xf]
      %v277 = vld [vmem:[%s244 + $0x38] sm:$0xf]
      %v278 = vld [vmem:[%s244 + $0x3c] sm:$0xf]
      %v279 = vld [vmem:[%s244 + $0x40] sm:$0xf]
      %v280 = vld [vmem:[%s244 + $0x44] sm:$0xf]
      %v281 = vld [vmem:[%s244 + $0x48] sm:$0xf]
      %v282 = vld [vmem:[%s244 + $0x4c] sm:$0xf]
      %v283 = vld [vmem:[%s244 + $0x50] sm:$0xf]
      %v284 = vld [vmem:[%s244 + $0x54] sm:$0xf]
      %v285 = vld [vmem:[%s244 + $0x58] sm:$0xf]
      %v286 = vld [vmem:[%s244 + $0x5c] sm:$0xf]
      %v287 = vld [vmem:[%s244 + $0x60] sm:$0xf]
      %v288 = vld [vmem:[%s244 + $0x64] sm:$0xf]
      %v289 = vld [vmem:[%s244 + $0x68] sm:$0xf]
      %v290 = vld [vmem:[%s244 + $0x6c] sm:$0xf]
      %v291 = vld [vmem:[%s244 + $0x70] sm:$0xf]
      %v292 = vld [vmem:[%s244 + $0x74] sm:$0xf]
      %v293 = vld [vmem:[%s244 + $0x78] sm:$0xf]
      %v294 = vld [vmem:[%s244 + $0x7c] sm:$0xf]
      %v295 = vld [vmem:[%s244 + $0x80] sm:$0xf]
      %v296 = vld [vmem:[%s244 + $0x84] sm:$0xf]
      %v297 = vld [vmem:[%s244 + $0x88] sm:$0xf]
      %v298 = vld [vmem:[%s244 + $0x8c] sm:$0xf]
      %v299 = vld [vmem:[%s244 + $0x90] sm:$0xf]
      %v300 = vld [vmem:[%s244 + $0x94] sm:$0xf]
      %v301 = vld [vmem:[%s244 + $0x98] sm:$0xf]
      %v302 = vld [vmem:[%s244 + $0x9c] sm:$0xf]
      %v303 = vld [vmem:[%s244 + $0xa0] sm:$0xf]
      %v304 = vld [vmem:[%s244 + $0xa4] sm:$0xf]
      %v305 = vld [vmem:[%s244 + $0xa8] sm:$0xf]
      %v306 = vld [vmem:[%s244 + $0xac] sm:$0xf]
      %v307 = vld [vmem:[%s244 + $0xb0] sm:$0xf]
      %v308 = vld [vmem:[%s244 + $0xb4] sm:$0xf]
      %v309 = vld [vmem:[%s244 + $0xb8] sm:$0xf]
      %v310 = vld [vmem:[%s244 + $0xbc] sm:$0xf]
      %v311 = vld [vmem:[%s244 + $0xc0] sm:$0xf]
      %v312 = vld [vmem:[%s244 + $0xc4] sm:$0xf]
      %v313 = vld [vmem:[%s244 + $0xc8] sm:$0xf]
      %v314 = vld [vmem:[%s244 + $0xcc] sm:$0xf]
      %v315 = vld [vmem:[%s244 + $0xd0] sm:$0xf]
      %v316 = vld [vmem:[%s244 + $0xd4] sm:$0xf]
      %v317 = vld [vmem:[%s244 + $0xd8] sm:$0xf]
      %v318 = vld [vmem:[%s244 + $0xdc] sm:$0xf]
      %v319 = vld [vmem:[%s244 + $0xe0] sm:$0xf]
      %v320 = vld [vmem:[%s244 + $0xe4] sm:$0xf]
      %v321 = vld [vmem:[%s244 + $0xe8] sm:$0xf]
      %v322 = vld [vmem:[%s244 + $0xec] sm:$0xf]
      %v323 = vld [vmem:[%s244 + $0xf0] sm:$0xf]
      %v324 = vld [vmem:[%s244 + $0xf4] sm:$0xf]
      %v325 = vld [vmem:[%s244 + $0xf8] sm:$0xf]
      %v326 = vld [vmem:[%s244 + $0xfc] sm:$0xf]
      %328 = vst [vmem:[#allocation1] ss:$9 sm:$0xff] %v262
      %v329 = vld [vmem:[#allocation1] sm:$0xff]
      %v330 = vld [vmem:[#allocation1 + $0x9] sm:$0xff]
      %v331 = vld [vmem:[#allocation1 + $0x12] sm:$0xff]
      %v332 = vld [vmem:[#allocation1 + $0x1b] sm:$0xff]
      %v401 = vunpack.c.l.b16 %v263
      %v402 = vunpack.c.l.b16 %v264
      %v403 = vunpack.c.l.b16 %v265
      %v404 = vunpack.c.l.b16 %v266
      %v405 = vunpack.c.l.b16 %v267
      %v406 = vunpack.c.l.b16 %v268
      %v407 = vunpack.c.l.b16 %v269
      %v408 = vunpack.c.l.b16 %v270
      %v409 = vunpack.c.l.b16 %v271
      %v410 = vunpack.c.l.b16 %v272
      %v411 = vunpack.c.l.b16 %v273
      %v412 = vunpack.c.l.b16 %v274
      %v413 = vunpack.c.l.b16 %v275
      %v414 = vunpack.c.l.b16 %v276
      %v415 = vunpack.c.l.b16 %v277
      %v416 = vunpack.c.l.b16 %v278
      %v417 = vunpack.c.l.b16 %v279
      %v418 = vunpack.c.l.b16 %v280
      %v419 = vunpack.c.l.b16 %v281
      %v420 = vunpack.c.l.b16 %v282
      %v421 = vunpack.c.l.b16 %v283
      %v422 = vunpack.c.l.b16 %v284
      %v423 = vunpack.c.l.b16 %v285
      %v424 = vunpack.c.l.b16 %v286
      %v425 = vunpack.c.l.b16 %v287
      %v426 = vunpack.c.l.b16 %v288
      %v427 = vunpack.c.l.b16 %v289
      %v428 = vunpack.c.l.b16 %v290
      %v429 = vunpack.c.l.b16 %v291
      %v430 = vunpack.c.l.b16 %v292
      %v431 = vunpack.c.l.b16 %v293
      %v432 = vunpack.c.l.b16 %v294
      %v433 = vunpack.c.l.b16 %v295
      %v434 = vunpack.c.l.b16 %v296
      %v435 = vunpack.c.l.b16 %v297
      %v436 = vunpack.c.l.b16 %v298
      %v437 = vunpack.c.l.b16 %v299
      %v438 = vunpack.c.l.b16 %v300
      %v439 = vunpack.c.l.b16 %v301
      %v440 = vunpack.c.l.b16 %v302
      %v441 = vunpack.c.l.b16 %v303
      %v442 = vunpack.c.l.b16 %v304
      %v443 = vunpack.c.l.b16 %v305
      %v444 = vunpack.c.l.b16 %v306
      %v445 = vunpack.c.l.b16 %v307
      %v446 = vunpack.c.l.b16 %v308
      %v447 = vunpack.c.l.b16 %v309
      %v448 = vunpack.c.l.b16 %v310
      %v449 = vunpack.c.l.b16 %v311
      %v450 = vunpack.c.l.b16 %v312
      %v451 = vunpack.c.l.b16 %v313
      %v452 = vunpack.c.l.b16 %v314
      %v453 = vunpack.c.l.b16 %v315
      %v454 = vunpack.c.l.b16 %v316
      %v455 = vunpack.c.l.b16 %v317
      %v456 = vunpack.c.l.b16 %v318
      %v457 = vunpack.c.l.b16 %v319
      %v458 = vunpack.c.l.b16 %v320
      %v459 = vunpack.c.l.b16 %v321
      %v460 = vunpack.c.l.b16 %v322
      %v461 = vunpack.c.l.b16 %v323
      %v462 = vunpack.c.l.b16 %v324
      %v463 = vunpack.c.l.b16 %v325
      %v464 = vunpack.c.l.b16 %v326
      %v465 = vpack.c.b16 %v402, %v401
      %v466 = vpack.c.b16 %v404, %v403
      %v467 = vpack.c.b16 %v406, %v405
      %v468 = vpack.c.b16 %v408, %v407
      %v469 = vpack.c.b16 %v410, %v409
      %v470 = vpack.c.b16 %v412, %v411
      %v471 = vpack.c.b16 %v414, %v413
      %v472 = vpack.c.b16 %v416, %v415
      %v473 = vpack.c.b16 %v418, %v417
      %v474 = vpack.c.b16 %v420, %v419
      %v475 = vpack.c.b16 %v422, %v421
      %v476 = vpack.c.b16 %v424, %v423
      %v477 = vpack.c.b16 %v426, %v425
      %v478 = vpack.c.b16 %v428, %v427
      %v479 = vpack.c.b16 %v430, %v429
      %v480 = vpack.c.b16 %v432, %v431
      %v481 = vpack.c.b16 %v434, %v433
      %v482 = vpack.c.b16 %v436, %v435
      %v483 = vpack.c.b16 %v438, %v437
      %v484 = vpack.c.b16 %v440, %v439
      %v485 = vpack.c.b16 %v442, %v441
      %v486 = vpack.c.b16 %v444, %v443
      %v487 = vpack.c.b16 %v446, %v445
      %v488 = vpack.c.b16 %v448, %v447
      %v489 = vpack.c.b16 %v450, %v449
      %v490 = vpack.c.b16 %v452, %v451
      %v491 = vpack.c.b16 %v454, %v453
      %v492 = vpack.c.b16 %v456, %v455
      %v493 = vpack.c.b16 %v458, %v457
      %v494 = vpack.c.b16 %v460, %v459
      %v495 = vpack.c.b16 %v462, %v461
      %v496 = vpack.c.b16 %v464, %v463
      %529 = vmatpush.bf16.msra.mxu0 %v472
      %530 = vmatpush.bf16.msra.mxu0 %v471
      %531 = vmatpush.bf16.msra.mxu0 %v470
      %532 = vmatpush.bf16.msra.mxu0 %v469
      %533 = vmatpush.bf16.msra.mxu0 %v468
      %534 = vmatpush.bf16.msra.mxu0 %v467
      %535 = vmatpush.bf16.msra.mxu0 %v466
      %536 = vmatpush.bf16.msra.mxu0 %v465
      %537 = vmatmul.bf16.gmra.mxu0 %v329
      %v538 = vpop.f32.mrf.mxu0
      %v539 = vadd.f32 0.0, %v538
      %v540 = vpop.f32.mrf.mxu0
      %541 = vdwg.mxu0
      %542 = vmatpush.bf16.msra.mxu0 %v480
      %543 = vmatpush.bf16.msra.mxu0 %v479
      %544 = vmatpush.bf16.msra.mxu0 %v478
      %545 = vmatpush.bf16.msra.mxu0 %v477
      %546 = vmatpush.bf16.msra.mxu0 %v476
      %547 = vmatpush.bf16.msra.mxu0 %v475
      %548 = vmatpush.bf16.msra.mxu0 %v474
      %549 = vmatpush.bf16.msra.mxu0 %v473
      %550 = vmatmul.bf16.gmra.mxu0 %v330
      %v551 = vpop.f32.mrf.mxu0
      %v552 = vadd.f32 %v539, %v551
      %v553 = vpop.f32.mrf.mxu0
      %554 = vdwg.mxu0
      %555 = vmatpush.bf16.msra.mxu0 %v488
      %556 = vmatpush.bf16.msra.mxu0 %v487
      %557 = vmatpush.bf16.msra.mxu0 %v486
      %558 = vmatpush.bf16.msra.mxu0 %v485
      %559 = vmatpush.bf16.msra.mxu0 %v484
      %560 = vmatpush.bf16.msra.mxu0 %v483
      %561 = vmatpush.bf16.msra.mxu0 %v482
      %562 = vmatpush.bf16.msra.mxu0 %v481
      %563 = vmatmul.bf16.gmra.mxu0 %v331
      %v564 = vpop.f32.mrf.mxu0
      %v565 = vadd.f32 %v552, %v564
      %v566 = vpop.f32.mrf.mxu0
      %567 = vdwg.mxu0
      %568 = vmatpush.bf16.msra.mxu0 %v496
      %569 = vmatpush.bf16.msra.mxu0 %v495
      %570 = vmatpush.bf16.msra.mxu0 %v494
      %571 = vmatpush.bf16.msra.mxu0 %v493
      %572 = vmatpush.bf16.msra.mxu0 %v492
      %573 = vmatpush.bf16.msra.mxu0 %v491
      %574 = vmatpush.bf16.msra.mxu0 %v490
      %575 = vmatpush.bf16.msra.mxu0 %v489
      %576 = vmatmul.bf16.gmra.mxu0 %v332
      %v577 = vpop.f32.mrf.mxu0
      %v578 = vadd.f32 %v565, %v577
      %v579 = vpop.f32.mrf.mxu0
      %580 = vdwg.mxu0
      %v581 = vadd.f32 %v261, %v578
      %582 = vst [vmem:[#allocation2] sm:$0x3] %v581
      %p583 = scmp.eq.s32.totalorder %s21, 1
      // Predicated region
      $region37: #{_lambda_.73} parent=31 // pred_check
        %p584 = pneg %p583
      $region38: #{_lambda_.73} parent=31 // pred_check_branch
        %586 = sbr.rel (%p584) target = $region40
      $region39: #{_lambda_.73} parent=31 // pred_region
        %v587 = vld [vmem:[#allocation2] sm:$0x3]
        %v588 = vld [vmem:[%s248] sm:$0x1]
        %v590 = vperm.slane %v588, 0
        %v592 = vadd.f32 %v587, %v590
        %593 = vst [vmem:[%s255] sm:$0x3] %v592
      $region40: #{_lambda_.73} parent=31 // pred_fallthru
        _
      %p594 = scmp.lt.s32.totalorder %s19, 0
      %s595 = scalar_select %p594, %s19, 0
      %p596 = scmp.lt.s32.totalorder %s20, 0
      %s597 = scalar_select %p596, %s20, 0
      %s598 = sadd.s32 %s597, %s595
      %s599 = smul.addr %s598, 2
      %s600 = scalar_lea.vmem %s3, %s599
      // Predicated region
      $region41: #{_lambda_.73} parent=31 // pred_check
        %p601 = pneg %p135
      $region42: #{_lambda_.73} parent=31 // pred_check_branch
        %603 = sbr.rel (%p601) target = $region44
      $region43: #{_lambda_.73} parent=31 // pred_region
        _
      $region44: #{_lambda_.73} parent=31 // pred_fallthru
        _
      // Predicated region
      $region45: #{_lambda_.73} parent=31 // pred_check
        %p604 = pneg %p135
      $region46: #{_lambda_.73} parent=31 // pred_check_branch
        %606 = sbr.rel (%p604) target = $region48
      $region47: #{_lambda_.73} parent=31 // pred_region
        %p607 = scmp.lt.s32.totalorder %s19, 0
        %s608 = scalar_select %p607, %s19, 0
        %p609 = scmp.lt.s32.totalorder %s20, 0
        %s610 = scalar_select %p609, %s20, 0
        %s611 = sadd.s32 %s610, %s608
        %s612 = smul.addr %s611, 2
        %s613 = scalar_lea.vmem %s3, %s612
      $region48: #{_lambda_.73} parent=31 // pred_fallthru
        _
    $region32: #{_lambda_.73} parent=5 // pred_fallthru
      _
    %p614 = scmp.le.s32.totalorder 2, %s9
    // Predicated region
    $region49: #{_lambda_.73} parent=5 // pred_check
      %p615 = pneg %p614
    $region50: #{_lambda_.73} parent=5 // pred_check_branch
      %617 = sbr.rel (%p615) target = $region52
    $region51: #{_lambda_.73} parent=5 // pred_region
      %s618 = ssub.s32 %s9, 2
    $region52: #{_lambda_.73} parent=5 // pred_fallthru
      _
  $region6: #{_lambda_.73} parent=0 // loop_footer
    %s13 = sadd.s32 1, %s9
  $region7: #{_lambda_.73} parent=0 // loop_footer_branch
    %8 = sbr.rel target = $region3
  $region8: #{_lambda_.73} parent=0 // loop_exit
    _

// kernel: _lambda_.122
$region0: #{_lambda_.122}
  #allocation0 [shape = 'u32[]', space=smem, size = 0x4, offset = 0x4, fixed_abs, tag = 'smem constant byte address 0x4 - core index']
  #allocation1 [shape = 'u32[72,128]{1,0:T(1,128)}', space=vmem, size = 0x9000, scoped, tag = 'internal scratch']
  #allocation2 [shape = 'f32[256,128]{1,0:T(8,128)}', space=vmem, size = 0x20000, scoped, tag = 'scratch operand']
  %s0 = inlined_call_operand.vmem [shape: bf16[512,64], index: 0, kind: input, shape index: {}]
  %s1 = inlined_call_operand.vmem [shape: bf16[64,128], index: 1, kind: input, shape index: {}]
  %s2 = inlined_call_operand.vmem [shape: f32[1,128], index: 2, kind: input, shape index: {}]
  %s3 = inlined_call_operand.vmem [shape: f32[512,128], index: 3, kind: output, shape index: {}]
  %s4 = sld [smem:[#allocation0]]
  $region53: #{_lambda_.122} parent=0
    _
  %s6 = ssub.s32 1, %s4
  %s7 = scalar_select 0, %s6, %s4
  loop: start=0, step=1, limit=4
  $region2: #{_lambda_.122} parent=0 // loop_pre_header
    _
  $region3: #{_lambda_.122} parent=0 // loop_header
    %s9 = sphi 0, %s13
    %p10 = scmp.ge.s32.totalorder %s9, 4
    %s16 = sphi 0, %s35
    %s17 = sphi 0, %s31
    %s18 = sphi 0, %s27
    %s19 = sphi 0, %s16
    %s20 = sphi 0, %s17
    %s21 = sphi 0, %s18
    %s22 = sphi 0, %s19
    %s23 = sphi 0, %s20
    %s24 = sphi 0, %s21
    %s40 = sphi 0, %s42
    %s43 = sphi 0, %s40
    %s44 = sphi 0, %s43
    %s60 = sphi 0, %s44
    %s68 = sphi 0, %s70
    %s71 = sphi 0, %s68
    %s72 = sphi 0, %s71
    %s88 = sphi 0, %s72
    %s94 = sphi 0, %s96
    %s97 = sphi 0, %s94
    %s98 = sphi 0, %s97
    %s114 = sphi 0, %s98
    %s122 = sphi 0, %s124
    %s125 = sphi 0, %s122
    %s126 = sphi 0, %s125
    %s142 = sphi 0, %s126
  $region4: #{_lambda_.122} parent=0 // loop_header_branch
    %12 = sbr.rel (%p10) target = $region8
  $region5: #{_lambda_.122} parent=0 // loop_body
    %s14 = ssub.s32 %s9, 1
    %s15 = ssub.s32 %s9, 2
    %s25 = sadd.s32 1, %s18
    %p26 = scmp.ge.s32.totalorder %s25, 1
    %s27 = scalar_select %p26, 0, %s25
    %s28 = sadd.s32 1, %s17
    %s29 = scalar_select %p26, %s28, %s17
    %p30 = scmp.ge.s32.totalorder %s29, 1
    %s31 = scalar_select %p30, 0, %s29
    %s32 = sadd.s32 1, %s16
    %s33 = scalar_select %p30, %s32, %s16
    %p34 = scmp.ge.s32.totalorder %s33, 2
    %s35 = scalar_select %p34, 0, %s33
    %s36 = ssub.s32 %s16, %s35
    %s37 = ssub.s32 %s18, %s27
    %s38 = sor.u32 %s36, %s37
    %p39 = scmp.eq.s32.totalorder %s38, 0
    %s41 = sadd.s32 %s40, 1
    %s42 = scalar_select %p39, %s40, %s41
    %p45 = pneg %p39
    %p46 = scmp.eq.s32.totalorder %s9, 1
    %p47 = por %p45, %p46
    %p48 = scmp.ne.s32.totalorder %s40, %s43
    %p49 = scmp.eq.s32.totalorder %s9, 0
    %p50 = por %p48, %p49
    %p51 = scmp.ne.s32.totalorder %s40, %s43
    %p52 = scmp.eq.s32.totalorder %s14, 1
    %p53 = por %p51, %p52
    %p54 = scmp.ne.s32.totalorder %s43, %s44
    %p55 = scmp.eq.s32.totalorder %s14, 0
    %p56 = por %p54, %p55
    %p57 = scmp.ne.s32.totalorder %s43, %s44
    %p58 = scmp.eq.s32.totalorder %s15, 1
    %p59 = por %p57, %p58
    %p61 = scmp.ne.s32.totalorder %s44, %s60
    %p62 = scmp.eq.s32.totalorder %s15, 0
    %p63 = por %p61, %p62
    %s64 = ssub.s32 %s18, %s27
    %s65 = ssub.s32 %s17, %s31
    %s66 = sor.u32 %s64, %s65
    %p67 = scmp.eq.s32.totalorder %s66, 0
    %s69 = sadd.s32 %s68, 1
    %s70 = scalar_select %p67, %s68, %s69
    %p73 = pneg %p67
    %p74 = scmp.eq.s32.totalorder %s9, 1
    %p75 = por %p73, %p74
    %p76 = scmp.ne.s32.totalorder %s68, %s71
    %p77 = scmp.eq.s32.totalorder %s9, 0
    %p78 = por %p76, %p77
    %p79 = scmp.ne.s32.totalorder %s68, %s71
    %p80 = scmp.eq.s32.totalorder %s14, 1
    %p81 = por %p79, %p80
    %p82 = scmp.ne.s32.totalorder %s71, %s72
    %p83 = scmp.eq.s32.totalorder %s14, 0
    %p84 = por %p82, %p83
    %p85 = scmp.ne.s32.totalorder %s71, %s72
    %p86 = scmp.eq.s32.totalorder %s15, 1
    %p87 = por %p85, %p86
    %p89 = scmp.ne.s32.totalorder %s72, %s88
    %p90 = scmp.eq.s32.totalorder %s15, 0
    %p91 = por %p89, %p90
    %s92 = ssub.s32 %s17, %s31
    %p93 = scmp.eq.s32.totalorder %s92, 0
    %s95 = sadd.s32 %s94, 1
    %s96 = scalar_select %p93, %s94, %s95
    %p99 = pneg %p93
    %p100 = scmp.eq.s32.totalorder %s9, 1
    %p101 = por %p99, %p100
    %p102 = scmp.ne.s32.totalorder %s94, %s97
    %p103 = scmp.eq.s32.totalorder %s9, 0
    %p104 = por %p102, %p103
    %p105 = scmp.ne.s32.totalorder %s94, %s97
    %p106 = scmp.eq.s32.totalorder %s14, 1
    %p107 = por %p105, %p106
    %p108 = scmp.ne.s32.totalorder %s97, %s98
    %p109 = scmp.eq.s32.totalorder %s14, 0
    %p110 = por %p108, %p109
    %p111 = scmp.ne.s32.totalorder %s97, %s98
    %p112 = scmp.eq.s32.totalorder %s15, 1
    %p113 = por %p111, %p112
    %p115 = scmp.ne.s32.totalorder %s98, %s114
    %p116 = scmp.eq.s32.totalorder %s15, 0
    %p117 = por %p115, %p116
    %s118 = ssub.s32 %s16, %s35
    %s119 = ssub.s32 %s17, %s31
    %s120 = sor.u32 %s118, %s119
    %p121 = scmp.eq.s32.totalorder %s120, 0
    %s123 = sadd.s32 %s122, 1
    %s124 = scalar_select %p121, %s122, %s123
    %p127 = pneg %p121
    %p128 = scmp.eq.s32.totalorder %s9, 1
    %p129 = por %p127, %p128
    %p130 = scmp.ne.s32.totalorder %s122, %s125
    %p131 = scmp.eq.s32.totalorder %s9, 0
    %p132 = por %p130, %p131
    %p133 = scmp.ne.s32.totalorder %s122, %s125
    %p134 = scmp.eq.s32.totalorder %s14, 1
    %p135 = por %p133, %p134
    %p136 = scmp.ne.s32.totalorder %s125, %s126
    %p137 = scmp.eq.s32.totalorder %s14, 0
    %p138 = por %p136, %p137
    %p139 = scmp.ne.s32.totalorder %s125, %s126
    %p140 = scmp.eq.s32.totalorder %s15, 1
    %p141 = por %p139, %p140
    %p143 = scmp.ne.s32.totalorder %s126, %s142
    %p144 = scmp.eq.s32.totalorder %s15, 0
    %p145 = por %p143, %p144
    %p146 = scmp.le.s32.totalorder 1, %s9
    %p147 = scmp.lt.s32.totalorder %s9, 3
    %p148 = pnand %p146, %p147
    %p149 = pneg %p148
    // Predicated region
    $region9: #{_lambda_.122} parent=5 // pred_check
      _
    $region10: #{_lambda_.122} parent=5 // pred_check_branch
      %151 = sbr.rel (%p148) target = $region12
    $region11: #{_lambda_.122} parent=5 // pred_region
      %s152 = ssub.s32 %s9, 1
      // Predicated region
      $region13: #{_lambda_.122} parent=11 // pred_check
        %p153 = pneg %p84
      $region14: #{_lambda_.122} parent=11 // pred_check_branch
        %155 = sbr.rel (%p153) target = $region16
      $region15: #{_lambda_.122} parent=11 // pred_region
        %s156 = smul.u32 8, %s21
        %p157 = scmp.lt.s32.totalorder %s156, 7
        %s158 = scalar_select %p157, %s156, 7
        %p159 = scmp.lt.s32.totalorder %s20, 0
        %s160 = scalar_select %p159, %s20, 0
        %s161 = sadd.s32 %s160, %s158
        %s162 = smul.addr %s161, 4
        %s163 = scalar_lea.vmem %s1, %s162
        %s164 = smul.u32 8, %s21
      $region16: #{_lambda_.122} parent=11 // pred_fallthru
        _
      // Predicated region
      $region17: #{_lambda_.122} parent=11 // pred_check
        %p165 = pneg %p110
      $region18: #{_lambda_.122} parent=11 // pred_check_branch
        %167 = sbr.rel (%p165) target = $region20
      $region19: #{_lambda_.122} parent=11 // pred_region
        %p168 = scmp.lt.s32.totalorder %s20, 0
        %s169 = scalar_select %p168, %s20, 0
        %s170 = scalar_lea.vmem %s2, %s169
      $region20: #{_lambda_.122} parent=11 // pred_fallthru
        _
    $region12: #{_lambda_.122} parent=5 // pred_fallthru
      _
    %p171 = scmp.lt.s32.totalorder %s9, 2
    // Predicated region
    $region21: #{_lambda_.122} parent=5 // pred_check
      %p172 = pneg %p171
    $region22: #{_lambda_.122} parent=5 // pred_check_branch
      %174 = sbr.rel (%p172) target = $region24
    $region23: #{_lambda_.122} parent=5 // pred_region
      // Predicated region
      $region25: #{_lambda_.122} parent=23 // pred_check
        %p175 = pneg %p50
      $region26: #{_lambda_.122} parent=23 // pred_check_branch
        %177 = sbr.rel (%p175) target = $region28
      $region27: #{_lambda_.122} parent=23 // pred_region
        %s178 = smul.u32 32, %s16
        %p179 = scmp.lt.s32.totalorder %s178, 63
        %s180 = scalar_select %p179, %s178, 63
        %p181 = scmp.lt.s32.totalorder %s18, 0
        %s182 = scalar_select %p181, %s18, 0
        %s183 = sadd.s32 %s182, %s180
        %s184 = smul.addr %s183, 4
        %s185 = scalar_lea.vmem %s0, %s184
        %s186 = smul.u32 32, %s16
      $region28: #{_lambda_.122} parent=23 // pred_fallthru
        _
    $region24: #{_lambda_.122} parent=5 // pred_fallthru
      _
    %p187 = scmp.le.s32.totalorder 1, %s9
    %p188 = scmp.lt.s32.totalorder %s9, 3
    %p189 = pnand %p187, %p188
    %p190 = pneg %p189
    // Predicated region
    $region29: #{_lambda_.122} parent=5 // pred_check
      _
    $region30: #{_lambda_.122} parent=5 // pred_check_branch
      %192 = sbr.rel (%p189) target = $region32
    $region31: #{_lambda_.122} parent=5 // pred_region
      %s193 = ssub.s32 %s9, 1
      %s194 = smul.u32 32, %s19
      %p195 = scmp.lt.s32.totalorder %s194, 63
      %s196 = scalar_select %p195, %s194, 63
      %p197 = scmp.lt.s32.totalorder %s21, 0
      %s198 = scalar_select %p197, %s21, 0
      %s199 = sadd.s32 %s198, %s196
      %s200 = smul.addr %s199, 4
      %s201 = scalar_lea.vmem %s0, %s200
      %p202 = pneg %p56
      %p203 = pneg %p53
      %s204 = smul.u32 8, %s21
      %p205 = scmp.lt.s32.totalorder %s204, 7
      %s206 = scalar_select %p205, %s204, 7
      %p207 = scmp.lt.s32.totalorder %s20, 0
      %s208 = scalar_select %p207, %s20, 0
      %s209 = sadd.s32 %s208, %s206
      %s210 = smul.addr %s209, 4
      %s211 = scalar_lea.vmem %s1, %s210
      %p212 = pneg %p84
      %p213 = pneg %p81
      %p214 = scmp.lt.s32.totalorder %s20, 0
      %s215 = scalar_select %p214, %s20, 0
      %s216 = scalar_lea.vmem %s2, %s215
      %p217 = pneg %p110
      %p218 = pneg %p107
      %p219 = pneg %p138
      %p220 = pneg %p135
      %s221 = smul.u32 32, %s19
      %p222 = scmp.lt.s32.totalorder %s221, 63
      %s223 = scalar_select %p222, %s221, 63
      %p224 = scmp.lt.s32.totalorder %s20, 0
      %s225 = scalar_select %p224, %s20, 0
      %s226 = sadd.s32 %s225, %s223
      %s227 = smul.addr %s226, 8
      %s228 = scalar_lea.vmem %s3, %s227
      %s229 = smul.u32 32, %s19
      %p230 = scmp.lt.s32.totalorder %s229, 63
      %s231 = scalar_select %p230, %s229, 63
      %p232 = scmp.lt.s32.totalorder %s21, 0
      %s233 = scalar_select %p232, %s21, 0
      %s234 = sadd.s32 %s233, %s231
      %s235 = smul.addr %s234, 4
      %s236 = scalar_lea.vmem %s0, %s235
      %s237 = smul.u32 32, %s19
      %s238 = smul.u32 8, %s21
      %p239 = scmp.lt.s32.totalorder %s238, 7
      %s240 = scalar_select %p239, %s238, 7
      %p241 = scmp.lt.s32.totalorder %s20, 0
      %s242 = scalar_select %p241, %s20, 0
      %s243 = sadd.s32 %s242, %s240
      %s244 = smul.addr %s243, 4
      %s245 = scalar_lea.vmem %s1, %s244
      %s246 = smul.u32 8, %s21
      %p247 = scmp.lt.s32.totalorder %s20, 0
      %s248 = scalar_select %p247, %s20, 0
      %s249 = scalar_lea.vmem %s2, %s248
      %s250 = smul.u32 32, %s19
      %p251 = scmp.lt.s32.totalorder %s250, 63
      %s252 = scalar_select %p251, %s250, 63
      %p253 = scmp.lt.s32.totalorder %s20, 0
      %s254 = scalar_select %p253, %s20, 0
      %s255 = sadd.s32 %s254, %s252
      %s256 = smul.addr %s255, 8
      %s257 = scalar_lea.vmem %s3, %s256
      %s258 = smul.u32 32, %s19
      %p260 = scmp.eq.s32.totalorder %s21, 0
      // Predicated region
      $region33: #{_lambda_.122} parent=31 // pred_check
        %p261 = pneg %p260
      $region34: #{_lambda_.122} parent=31 // pred_check_branch
        %263 = sbr.rel (%p261) target = $region36
      $region35: #{_lambda_.122} parent=31 // pred_region
        %264 = vst [vmem:[#allocation2] sm:$0xff] 0.0
        %265 = vst [vmem:[#allocation2 + $0x8] sm:$0xff] 0.0
        %266 = vst [vmem:[#allocation2 + $0x10] sm:$0xff] 0.0
        %267 = vst [vmem:[#allocation2 + $0x18] sm:$0xff] 0.0
        %268 = vst [vmem:[#allocation2 + $0x20] sm:$0xff] 0.0
        %269 = vst [vmem:[#allocation2 + $0x28] sm:$0xff] 0.0
        %270 = vst [vmem:[#allocation2 + $0x30] sm:$0xff] 0.0
        %271 = vst [vmem:[#allocation2 + $0x38] sm:$0xff] 0.0
        %272 = vst [vmem:[#allocation2 + $0x40] sm:$0xff] 0.0
        %273 = vst [vmem:[#allocation2 + $0x48] sm:$0xff] 0.0
        %274 = vst [vmem:[#allocation2 + $0x50] sm:$0xff] 0.0
        %275 = vst [vmem:[#allocation2 + $0x58] sm:$0xff] 0.0
        %276 = vst [vmem:[#allocation2 + $0x60] sm:$0xff] 0.0
        %277 = vst [vmem:[#allocation2 + $0x68] sm:$0xff] 0.0
        %278 = vst [vmem:[#allocation2 + $0x70] sm:$0xff] 0.0
        %279 = vst [vmem:[#allocation2 + $0x78] sm:$0xff] 0.0
        %280 = vst [vmem:[#allocation2 + $0x80] sm:$0xff] 0.0
        %281 = vst [vmem:[#allocation2 + $0x88] sm:$0xff] 0.0
        %282 = vst [vmem:[#allocation2 + $0x90] sm:$0xff] 0.0
        %283 = vst [vmem:[#allocation2 + $0x98] sm:$0xff] 0.0
        %284 = vst [vmem:[#allocation2 + $0xa0] sm:$0xff] 0.0
        %285 = vst [vmem:[#allocation2 + $0xa8] sm:$0xff] 0.0
        %286 = vst [vmem:[#allocation2 + $0xb0] sm:$0xff] 0.0
        %287 = vst [vmem:[#allocation2 + $0xb8] sm:$0xff] 0.0
        %288 = vst [vmem:[#allocation2 + $0xc0] sm:$0xff] 0.0
        %289 = vst [vmem:[#allocation2 + $0xc8] sm:$0xff] 0.0
        %290 = vst [vmem:[#allocation2 + $0xd0] sm:$0xff] 0.0
        %291 = vst [vmem:[#allocation2 + $0xd8] sm:$0xff] 0.0
        %292 = vst [vmem:[#allocation2 + $0xe0] sm:$0xff] 0.0
        %293 = vst [vmem:[#allocation2 + $0xe8] sm:$0xff] 0.0
        %294 = vst [vmem:[#allocation2 + $0xf0] sm:$0xff] 0.0
        %295 = vst [vmem:[#allocation2 + $0xf8] sm:$0xff] 0.0
      $region36: #{_lambda_.122} parent=31 // pred_fallthru
        _
      %v296 = vld [vmem:[#allocation2] sm:$0xff]
      %v297 = vld [vmem:[#allocation2 + $0x8] sm:$0xff]
      %v298 = vld [vmem:[#allocation2 + $0x10] sm:$0xff]
      %v299 = vld [vmem:[#allocation2 + $0x18] sm:$0xff]
      %v300 = vld [vmem:[#allocation2 + $0x20] sm:$0xff]
      %v301 = vld [vmem:[#allocation2 + $0x28] sm:$0xff]
      %v302 = vld [vmem:[#allocation2 + $0x30] sm:$0xff]
      %v303 = vld [vmem:[#allocation2 + $0x38] sm:$0xff]
      %v304 = vld [vmem:[#allocation2 + $0x40] sm:$0xff]
      %v305 = vld [vmem:[#allocation2 + $0x48] sm:$0xff]
      %v306 = vld [vmem:[#allocation2 + $0x50] sm:$0xff]
      %v307 = vld [vmem:[#allocation2 + $0x58] sm:$0xff]
      %v308 = vld [vmem:[#allocation2 + $0x60] sm:$0xff]
      %v309 = vld [vmem:[#allocation2 + $0x68] sm:$0xff]
      %v310 = vld [vmem:[#allocation2 + $0x70] sm:$0xff]
      %v311 = vld [vmem:[#allocation2 + $0x78] sm:$0xff]
      %v312 = vld [vmem:[#allocation2 + $0x80] sm:$0xff]
      %v313 = vld [vmem:[#allocation2 + $0x88] sm:$0xff]
      %v314 = vld [vmem:[#allocation2 + $0x90] sm:$0xff]
      %v315 = vld [vmem:[#allocation2 + $0x98] sm:$0xff]
      %v316 = vld [vmem:[#allocation2 + $0xa0] sm:$0xff]
      %v317 = vld [vmem:[#allocation2 + $0xa8] sm:$0xff]
      %v318 = vld [vmem:[#allocation2 + $0xb0] sm:$0xff]
      %v319 = vld [vmem:[#allocation2 + $0xb8] sm:$0xff]
      %v320 = vld [vmem:[#allocation2 + $0xc0] sm:$0xff]
      %v321 = vld [vmem:[#allocation2 + $0xc8] sm:$0xff]
      %v322 = vld [vmem:[#allocation2 + $0xd0] sm:$0xff]
      %v323 = vld [vmem:[#allocation2 + $0xd8] sm:$0xff]
      %v324 = vld [vmem:[#allocation2 + $0xe0] sm:$0xff]
      %v325 = vld [vmem:[#allocation2 + $0xe8] sm:$0xff]
      %v326 = vld [vmem:[#allocation2 + $0xf0] sm:$0xff]
      %v327 = vld [vmem:[#allocation2 + $0xf8] sm:$0xff]
      %v328 = vld [vmem:[%s236] sm:$0xf]
      %v329 = vld [vmem:[%s236 + $0x4] sm:$0xf]
      %v330 = vld [vmem:[%s236 + $0x8] sm:$0xf]
      %v331 = vld [vmem:[%s236 + $0xc] sm:$0xf]
      %v332 = vld [vmem:[%s236 + $0x10] sm:$0xf]
      %v333 = vld [vmem:[%s236 + $0x14] sm:$0xf]
      %v334 = vld [vmem:[%s236 + $0x18] sm:$0xf]
      %v335 = vld [vmem:[%s236 + $0x1c] sm:$0xf]
      %v336 = vld [vmem:[%s236 + $0x20] sm:$0xf]
      %v337 = vld [vmem:[%s236 + $0x24] sm:$0xf]
      %v338 = vld [vmem:[%s236 + $0x28] sm:$0xf]
      %v339 = vld [vmem:[%s236 + $0x2c] sm:$0xf]
      %v340 = vld [vmem:[%s236 + $0x30] sm:$0xf]
      %v341 = vld [vmem:[%s236 + $0x34] sm:$0xf]
      %v342 = vld [vmem:[%s236 + $0x38] sm:$0xf]
      %v343 = vld [vmem:[%s236 + $0x3c] sm:$0xf]
      %v344 = vld [vmem:[%s236 + $0x40] sm:$0xf]
      %v345 = vld [vmem:[%s236 + $0x44] sm:$0xf]
      %v346 = vld [vmem:[%s236 + $0x48] sm:$0xf]
      %v347 = vld [vmem:[%s236 + $0x4c] sm:$0xf]
      %v348 = vld [vmem:[%s236 + $0x50] sm:$0xf]
      %v349 = vld [vmem:[%s236 + $0x54] sm:$0xf]
      %v350 = vld [vmem:[%s236 + $0x58] sm:$0xf]
      %v351 = vld [vmem:[%s236 + $0x5c] sm:$0xf]
      %v352 = vld [vmem:[%s236 + $0x60] sm:$0xf]
      %v353 = vld [vmem:[%s236 + $0x64] sm:$0xf]
      %v354 = vld [vmem:[%s236 + $0x68] sm:$0xf]
      %v355 = vld [vmem:[%s236 + $0x6c] sm:$0xf]
      %v356 = vld [vmem:[%s236 + $0x70] sm:$0xf]
      %v357 = vld [vmem:[%s236 + $0x74] sm:$0xf]
      %v358 = vld [vmem:[%s236 + $0x78] sm:$0xf]
      %v359 = vld [vmem:[%s236 + $0x7c] sm:$0xf]
      %v360 = vld [vmem:[%s245] sm:$0xf]
      %v361 = vld [vmem:[%s245 + $0x4] sm:$0xf]
      %v362 = vld [vmem:[%s245 + $0x8] sm:$0xf]
      %v363 = vld [vmem:[%s245 + $0xc] sm:$0xf]
      %v364 = vld [vmem:[%s245 + $0x10] sm:$0xf]
      %v365 = vld [vmem:[%s245 + $0x14] sm:$0xf]
      %v366 = vld [vmem:[%s245 + $0x18] sm:$0xf]
      %v367 = vld [vmem:[%s245 + $0x1c] sm:$0xf]
      %v400 = vunpack.c.l.b16 %v328
      %v401 = vunpack.c.l.b16 %v329
      %v402 = vunpack.c.l.b16 %v330
      %v403 = vunpack.c.l.b16 %v331
      %v404 = vunpack.c.l.b16 %v332
      %v405 = vunpack.c.l.b16 %v333
      %v406 = vunpack.c.l.b16 %v334
      %v407 = vunpack.c.l.b16 %v335
      %v408 = vunpack.c.l.b16 %v336
      %v409 = vunpack.c.l.b16 %v337
      %v410 = vunpack.c.l.b16 %v338
      %v411 = vunpack.c.l.b16 %v339
      %v412 = vunpack.c.l.b16 %v340
      %v413 = vunpack.c.l.b16 %v341
      %v414 = vunpack.c.l.b16 %v342
      %v415 = vunpack.c.l.b16 %v343
      %v416 = vunpack.c.l.b16 %v344
      %v417 = vunpack.c.l.b16 %v345
      %v418 = vunpack.c.l.b16 %v346
      %v419 = vunpack.c.l.b16 %v347
      %v420 = vunpack.c.l.b16 %v348
      %v421 = vunpack.c.l.b16 %v349
      %v422 = vunpack.c.l.b16 %v350
      %v423 = vunpack.c.l.b16 %v351
      %v424 = vunpack.c.l.b16 %v352
      %v425 = vunpack.c.l.b16 %v353
      %v426 = vunpack.c.l.b16 %v354
      %v427 = vunpack.c.l.b16 %v355
      %v428 = vunpack.c.l.b16 %v356
      %v429 = vunpack.c.l.b16 %v357
      %v430 = vunpack.c.l.b16 %v358
      %v431 = vunpack.c.l.b16 %v359
      %v432 = vpack.c.b16 %v401, %v400
      %v433 = vpack.c.b16 %v403, %v402
      %v434 = vpack.c.b16 %v405, %v404
      %v435 = vpack.c.b16 %v407, %v406
      %v436 = vpack.c.b16 %v409, %v408
      %v437 = vpack.c.b16 %v411, %v410
      %v438 = vpack.c.b16 %v413, %v412
      %v439 = vpack.c.b16 %v415, %v414
      %v440 = vpack.c.b16 %v417, %v416
      %v441 = vpack.c.b16 %v419, %v418
      %v442 = vpack.c.b16 %v421, %v420
      %v443 = vpack.c.b16 %v423, %v422
      %v444 = vpack.c.b16 %v425, %v424
      %v445 = vpack.c.b16 %v427, %v426
      %v446 = vpack.c.b16 %v429, %v428
      %v447 = vpack.c.b16 %v431, %v430
      %v456 = vunpack.c.l.b16 %v360
      %v457 = vunpack.c.l.b16 %v361
      %v458 = vunpack.c.l.b16 %v362
      %v459 = vunpack.c.l.b16 %v363
      %v460 = vunpack.c.l.b16 %v364
      %v461 = vunpack.c.l.b16 %v365
      %v462 = vunpack.c.l.b16 %v366
      %v463 = vunpack.c.l.b16 %v367
      %v464 = vpack.c.b16 %v457, %v456
      %v465 = vpack.c.b16 %v459, %v458
      %v466 = vpack.c.b16 %v461, %v460
      %v467 = vpack.c.b16 %v463, %v462
      %vm472 = vcmask 523264
      %v474 = vsel %vm472, %v432, 0
      %v477 = vsel %vm472, %v433, 0
      %v480 = vsel %vm472, %v434, 0
      %v483 = vsel %vm472, %v435, 0
      %v486 = vsel %vm472, %v436, 0
      %v489 = vsel %vm472, %v437, 0
      %v492 = vsel %vm472, %v438, 0
      %v495 = vsel %vm472, %v439, 0
      %v498 = vsel %vm472, %v440, 0
      %v501 = vsel %vm472, %v441, 0
      %v504 = vsel %vm472, %v442, 0
      %v507 = vsel %vm472, %v443, 0
      %v510 = vsel %vm472, %v444, 0
      %v513 = vsel %vm472, %v445, 0
      %v516 = vsel %vm472, %v446, 0
      %v519 = vsel %vm472, %v447, 0
      %521 = vmatpush.bf16.msra.mxu0 0
      %522 = vmatpush.bf16.msra.mxu0 0
      %523 = vmatpush.bf16.msra.mxu0 0
      %524 = vmatpush.bf16.msra.mxu0 0
      %525 = vmatpush.bf16.msra.mxu0 %v467
      %526 = vmatpush.bf16.msra.mxu0 %v466
      %527 = vmatpush.bf16.msra.mxu0 %v465
      %528 = vmatpush.bf16.msra.mxu0 %v464
      %529 = vmatmul.bf16.gmra.mxu0 %v474
      %v530 = vpop.f32.mrf.mxu0
      %v531 = vadd.f32 0.0, %v530
      %v532 = vpop.f32.mrf.mxu0
      %v533 = vadd.f32 0.0, %v532
      %534 = vmatmul.bf16.gmra.mxu0 %v477
      %v535 = vpop.f32.mrf.mxu0
      %v536 = vadd.f32 0.0, %v535
      %v537 = vpop.f32.mrf.mxu0
      %v538 = vadd.f32 0.0, %v537
      %539 = vmatmul.bf16.gmra.mxu0 %v480
      %v540 = vpop.f32.mrf.mxu0
      %v541 = vadd.f32 0.0, %v540
      %v542 = vpop.f32.mrf.mxu0
      %v543 = vadd.f32 0.0, %v542
      %544 = vmatmul.bf16.gmra.mxu0 %v483
      %v545 = vpop.f32.mrf.mxu0
      %v546 = vadd.f32 0.0, %v545
      %v547 = vpop.f32.mrf.mxu0
      %v548 = vadd.f32 0.0, %v547
      %549 = vmatmul.bf16.gmra.mxu0 %v486
      %v550 = vpop.f32.mrf.mxu0
      %v551 = vadd.f32 0.0, %v550
      %v552 = vpop.f32.mrf.mxu0
      %v553 = vadd.f32 0.0, %v552
      %554 = vmatmul.bf16.gmra.mxu0 %v489
      %v555 = vpop.f32.mrf.mxu0
      %v556 = vadd.f32 0.0, %v555
      %v557 = vpop.f32.mrf.mxu0
      %v558 = vadd.f32 0.0, %v557
      %559 = vmatmul.bf16.gmra.mxu0 %v492
      %v560 = vpop.f32.mrf.mxu0
      %v561 = vadd.f32 0.0, %v560
      %v562 = vpop.f32.mrf.mxu0
      %v563 = vadd.f32 0.0, %v562
      %564 = vmatmul.bf16.gmra.mxu0 %v495
      %v565 = vpop.f32.mrf.mxu0
      %v566 = vadd.f32 0.0, %v565
      %v567 = vpop.f32.mrf.mxu0
      %v568 = vadd.f32 0.0, %v567
      %569 = vmatmul.bf16.gmra.mxu0 %v498
      %v570 = vpop.f32.mrf.mxu0
      %v571 = vadd.f32 0.0, %v570
      %v572 = vpop.f32.mrf.mxu0
      %v573 = vadd.f32 0.0, %v572
      %574 = vmatmul.bf16.gmra.mxu0 %v501
      %v575 = vpop.f32.mrf.mxu0
      %v576 = vadd.f32 0.0, %v575
      %v577 = vpop.f32.mrf.mxu0
      %v578 = vadd.f32 0.0, %v577
      %579 = vmatmul.bf16.gmra.mxu0 %v504
      %v580 = vpop.f32.mrf.mxu0
      %v581 = vadd.f32 0.0, %v580
      %v582 = vpop.f32.mrf.mxu0
      %v583 = vadd.f32 0.0, %v582
      %584 = vmatmul.bf16.gmra.mxu0 %v507
      %v585 = vpop.f32.mrf.mxu0
      %v586 = vadd.f32 0.0, %v585
      %v587 = vpop.f32.mrf.mxu0
      %v588 = vadd.f32 0.0, %v587
      %589 = vmatmul.bf16.gmra.mxu0 %v510
      %v590 = vpop.f32.mrf.mxu0
      %v591 = vadd.f32 0.0, %v590
      %v592 = vpop.f32.mrf.mxu0
      %v593 = vadd.f32 0.0, %v592
      %594 = vmatmul.bf16.gmra.mxu0 %v513
      %v595 = vpop.f32.mrf.mxu0
      %v596 = vadd.f32 0.0, %v595
      %v597 = vpop.f32.mrf.mxu0
      %v598 = vadd.f32 0.0, %v597
      %599 = vmatmul.bf16.gmra.mxu0 %v516
      %v600 = vpop.f32.mrf.mxu0
      %v601 = vadd.f32 0.0, %v600
      %v602 = vpop.f32.mrf.mxu0
      %v603 = vadd.f32 0.0, %v602
      %604 = vmatmul.bf16.gmra.mxu0 %v519
      %v605 = vpop.f32.mrf.mxu0
      %v606 = vadd.f32 0.0, %v605
      %v607 = vpop.f32.mrf.mxu0
      %v608 = vadd.f32 0.0, %v607
      %609 = vdwg.mxu0
      %v610 = vadd.f32 %v296, %v531
      %v611 = vadd.f32 %v297, %v533
      %v612 = vadd.f32 %v298, %v536
      %v613 = vadd.f32 %v299, %v538
      %v614 = vadd.f32 %v300, %v541
      %v615 = vadd.f32 %v301, %v543
      %v616 = vadd.f32 %v302, %v546
      %v617 = vadd.f32 %v303, %v548
      %v618 = vadd.f32 %v304, %v551
      %v619 = vadd.f32 %v305, %v553
      %v620 = vadd.f32 %v306, %v556
      %v621 = vadd.f32 %v307, %v558
      %v622 = vadd.f32 %v308, %v561
      %v623 = vadd.f32 %v309, %v563
      %v624 = vadd.f32 %v310, %v566
      %v625 = vadd.f32 %v311, %v568
      %v626 = vadd.f32 %v312, %v571
      %v627 = vadd.f32 %v313, %v573
      %v628 = vadd.f32 %v314, %v576
      %v629 = vadd.f32 %v315, %v578
      %v630 = vadd.f32 %v316, %v581
      %v631 = vadd.f32 %v317, %v583
      %v632 = vadd.f32 %v318, %v586
      %v633 = vadd.f32 %v319, %v588
      %v634 = vadd.f32 %v320, %v591
      %v635 = vadd.f32 %v321, %v593
      %v636 = vadd.f32 %v322, %v596
      %v637 = vadd.f32 %v323, %v598
      %v638 = vadd.f32 %v324, %v601
      %v639 = vadd.f32 %v325, %v603
      %v640 = vadd.f32 %v326, %v606
      %v641 = vadd.f32 %v327, %v608
      %642 = vst [vmem:[#allocation2] sm:$0xff] %v610
      %643 = vst [vmem:[#allocation2 + $0x8] sm:$0xff] %v611
      %644 = vst [vmem:[#allocation2 + $0x10] sm:$0xff] %v612
      %645 = vst [vmem:[#allocation2 + $0x18] sm:$0xff] %v613
      %646 = vst [vmem:[#allocation2 + $0x20] sm:$0xff] %v614
      %647 = vst [vmem:[#allocation2 + $0x28] sm:$0xff] %v615
      %648 = vst [vmem:[#allocation2 + $0x30] sm:$0xff] %v616
      %649 = vst [vmem:[#allocation2 + $0x38] sm:$0xff] %v617
      %650 = vst [vmem:[#allocation2 + $0x40] sm:$0xff] %v618
      %651 = vst [vmem:[#allocation2 + $0x48] sm:$0xff] %v619
      %652 = vst [vmem:[#allocation2 + $0x50] sm:$0xff] %v620
      %653 = vst [vmem:[#allocation2 + $0x58] sm:$0xff] %v621
      %654 = vst [vmem:[#allocation2 + $0x60] sm:$0xff] %v622
      %655 = vst [vmem:[#allocation2 + $0x68] sm:$0xff] %v623
      %656 = vst [vmem:[#allocation2 + $0x70] sm:$0xff] %v624
      %657 = vst [vmem:[#allocation2 + $0x78] sm:$0xff] %v625
      %658 = vst [vmem:[#allocation2 + $0x80] sm:$0xff] %v626
      %659 = vst [vmem:[#allocation2 + $0x88] sm:$0xff] %v627
      %660 = vst [vmem:[#allocation2 + $0x90] sm:$0xff] %v628
      %661 = vst [vmem:[#allocation2 + $0x98] sm:$0xff] %v629
      %662 = vst [vmem:[#allocation2 + $0xa0] sm:$0xff] %v630
      %663 = vst [vmem:[#allocation2 + $0xa8] sm:$0xff] %v631
      %664 = vst [vmem:[#allocation2 + $0xb0] sm:$0xff] %v632
      %665 = vst [vmem:[#allocation2 + $0xb8] sm:$0xff] %v633
      %666 = vst [vmem:[#allocation2 + $0xc0] sm:$0xff] %v634
      %667 = vst [vmem:[#allocation2 + $0xc8] sm:$0xff] %v635
      %668 = vst [vmem:[#allocation2 + $0xd0] sm:$0xff] %v636
      %669 = vst [vmem:[#allocation2 + $0xd8] sm:$0xff] %v637
      %670 = vst [vmem:[#allocation2 + $0xe0] sm:$0xff] %v638
      %671 = vst [vmem:[#allocation2 + $0xe8] sm:$0xff] %v639
      %672 = vst [vmem:[#allocation2 + $0xf0] sm:$0xff] %v640
      %673 = vst [vmem:[#allocation2 + $0xf8] sm:$0xff] %v641
      // Predicated region
      $region37: #{_lambda_.122} parent=31 // pred_check
        %p674 = pneg %p260
      $region38: #{_lambda_.122} parent=31 // pred_check_branch
        %676 = sbr.rel (%p674) target = $region40
      $region39: #{_lambda_.122} parent=31 // pred_region
        %v677 = vld [vmem:[#allocation2] sm:$0xff]
        %v678 = vld [vmem:[#allocation2 + $0x8] sm:$0xff]
        %v679 = vld [vmem:[#allocation2 + $0x10] sm:$0xff]
        %v680 = vld [vmem:[#allocation2 + $0x18] sm:$0xff]
        %v681 = vld [vmem:[#allocation2 + $0x20] sm:$0xff]
        %v682 = vld [vmem:[#allocation2 + $0x28] sm:$0xff]
        %v683 = vld [vmem:[#allocation2 + $0x30] sm:$0xff]
        %v684 = vld [vmem:[#allocation2 + $0x38] sm:$0xff]
        %v685 = vld [vmem:[#allocation2 + $0x40] sm:$0xff]
        %v686 = vld [vmem:[#allocation2 + $0x48] sm:$0xff]
        %v687 = vld [vmem:[#allocation2 + $0x50] sm:$0xff]
        %v688 = vld [vmem:[#allocation2 + $0x58] sm:$0xff]
        %v689 = vld [vmem:[#allocation2 + $0x60] sm:$0xff]
        %v690 = vld [vmem:[#allocation2 + $0x68] sm:$0xff]
        %v691 = vld [vmem:[#allocation2 + $0x70] sm:$0xff]
        %v692 = vld [vmem:[#allocation2 + $0x78] sm:$0xff]
        %v693 = vld [vmem:[#allocation2 + $0x80] sm:$0xff]
        %v694 = vld [vmem:[#allocation2 + $0x88] sm:$0xff]
        %v695 = vld [vmem:[#allocation2 + $0x90] sm:$0xff]
        %v696 = vld [vmem:[#allocation2 + $0x98] sm:$0xff]
        %v697 = vld [vmem:[#allocation2 + $0xa0] sm:$0xff]
        %v698 = vld [vmem:[#allocation2 + $0xa8] sm:$0xff]
        %v699 = vld [vmem:[#allocation2 + $0xb0] sm:$0xff]
        %v700 = vld [vmem:[#allocation2 + $0xb8] sm:$0xff]
        %v701 = vld [vmem:[#allocation2 + $0xc0] sm:$0xff]
        %v702 = vld [vmem:[#allocation2 + $0xc8] sm:$0xff]
        %v703 = vld [vmem:[#allocation2 + $0xd0] sm:$0xff]
        %v704 = vld [vmem:[#allocation2 + $0xd8] sm:$0xff]
        %v705 = vld [vmem:[#allocation2 + $0xe0] sm:$0xff]
        %v706 = vld [vmem:[#allocation2 + $0xe8] sm:$0xff]
        %v707 = vld [vmem:[#allocation2 + $0xf0] sm:$0xff]
        %v708 = vld [vmem:[#allocation2 + $0xf8] sm:$0xff]
        %v709 = vld [vmem:[%s249] sm:$0x1]
        %v711 = vperm.slane %v709, 0
        %v713 = vadd.f32 %v677, %v711
        %v714 = vadd.f32 %v678, %v711
        %v715 = vadd.f32 %v679, %v711
        %v716 = vadd.f32 %v680, %v711
        %v717 = vadd.f32 %v681, %v711
        %v718 = vadd.f32 %v682, %v711
        %v719 = vadd.f32 %v683, %v711
        %v720 = vadd.f32 %v684, %v711
        %v721 = vadd.f32 %v685, %v711
        %v722 = vadd.f32 %v686, %v711
        %v723 = vadd.f32 %v687, %v711
        %v724 = vadd.f32 %v688, %v711
        %v725 = vadd.f32 %v689, %v711
        %v726 = vadd.f32 %v690, %v711
        %v727 = vadd.f32 %v691, %v711
        %v728 = vadd.f32 %v692, %v711
        %v729 = vadd.f32 %v693, %v711
        %v730 = vadd.f32 %v694, %v711
        %v731 = vadd.f32 %v695, %v711
        %v732 = vadd.f32 %v696, %v711
        %v733 = vadd.f32 %v697, %v711
        %v734 = vadd.f32 %v698, %v711
        %v735 = vadd.f32 %v699, %v711
        %v736 = vadd.f32 %v700, %v711
        %v737 = vadd.f32 %v701, %v711
        %v738 = vadd.f32 %v702, %v711
        %v739 = vadd.f32 %v703, %v711
        %v740 = vadd.f32 %v704, %v711
        %v741 = vadd.f32 %v705, %v711
        %v742 = vadd.f32 %v706, %v711
        %v743 = vadd.f32 %v707, %v711
        %v744 = vadd.f32 %v708, %v711
        %v745 = vtanh.pop %v713
        %v746 = vtanh.pop %v714
        %v747 = vtanh.pop %v715
        %v748 = vtanh.pop %v716
        %v749 = vtanh.pop %v717
        %v750 = vtanh.pop %v718
        %v751 = vtanh.pop %v719
        %v752 = vtanh.pop %v720
        %v753 = vtanh.pop %v721
        %v754 = vtanh.pop %v722
        %v755 = vtanh.pop %v723
        %v756 = vtanh.pop %v724
        %v757 = vtanh.pop %v725
        %v758 = vtanh.pop %v726
        %v759 = vtanh.pop %v727
        %v760 = vtanh.pop %v728
        %v761 = vtanh.pop %v729
        %v762 = vtanh.pop %v730
        %v763 = vtanh.pop %v731
        %v764 = vtanh.pop %v732
        %v765 = vtanh.pop %v733
        %v766 = vtanh.pop %v734
        %v767 = vtanh.pop %v735
        %v768 = vtanh.pop %v736
        %v769 = vtanh.pop %v737
        %v770 = vtanh.pop %v738
        %v771 = vtanh.pop %v739
        %v772 = vtanh.pop %v740
        %v773 = vtanh.pop %v741
        %v774 = vtanh.pop %v742
        %v775 = vtanh.pop %v743
        %v776 = vtanh.pop %v744
        %777 = vst [vmem:[%s257] sm:$0xff] %v745
        %778 = vst [vmem:[%s257 + $0x8] sm:$0xff] %v746
        %779 = vst [vmem:[%s257 + $0x10] sm:$0xff] %v747
        %780 = vst [vmem:[%s257 + $0x18] sm:$0xff] %v748
        %781 = vst [vmem:[%s257 + $0x20] sm:$0xff] %v749
        %782 = vst [vmem:[%s257 + $0x28] sm:$0xff] %v750
        %783 = vst [vmem:[%s257 + $0x30] sm:$0xff] %v751
        %784 = vst [vmem:[%s257 + $0x38] sm:$0xff] %v752
        %785 = vst [vmem:[%s257 + $0x40] sm:$0xff] %v753
        %786 = vst [vmem:[%s257 + $0x48] sm:$0xff] %v754
        %787 = vst [vmem:[%s257 + $0x50] sm:$0xff] %v755
        %788 = vst [vmem:[%s257 + $0x58] sm:$0xff] %v756
        %789 = vst [vmem:[%s257 + $0x60] sm:$0xff] %v757
        %790 = vst [vmem:[%s257 + $0x68] sm:$0xff] %v758
        %791 = vst [vmem:[%s257 + $0x70] sm:$0xff] %v759
        %792 = vst [vmem:[%s257 + $0x78] sm:$0xff] %v760
        %793 = vst [vmem:[%s257 + $0x80] sm:$0xff] %v761
        %794 = vst [vmem:[%s257 + $0x88] sm:$0xff] %v762
        %795 = vst [vmem:[%s257 + $0x90] sm:$0xff] %v763
        %796 = vst [vmem:[%s257 + $0x98] sm:$0xff] %v764
        %797 = vst [vmem:[%s257 + $0xa0] sm:$0xff] %v765
        %798 = vst [vmem:[%s257 + $0xa8] sm:$0xff] %v766
        %799 = vst [vmem:[%s257 + $0xb0] sm:$0xff] %v767
        %800 = vst [vmem:[%s257 + $0xb8] sm:$0xff] %v768
        %801 = vst [vmem:[%s257 + $0xc0] sm:$0xff] %v769
        %802 = vst [vmem:[%s257 + $0xc8] sm:$0xff] %v770
        %803 = vst [vmem:[%s257 + $0xd0] sm:$0xff] %v771
        %804 = vst [vmem:[%s257 + $0xd8] sm:$0xff] %v772
        %805 = vst [vmem:[%s257 + $0xe0] sm:$0xff] %v773
        %806 = vst [vmem:[%s257 + $0xe8] sm:$0xff] %v774
        %807 = vst [vmem:[%s257 + $0xf0] sm:$0xff] %v775
        %808 = vst [vmem:[%s257 + $0xf8] sm:$0xff] %v776
      $region40: #{_lambda_.122} parent=31 // pred_fallthru
        _
      %s809 = smul.u32 32, %s19
      %p810 = scmp.lt.s32.totalorder %s809, 63
      %s811 = scalar_select %p810, %s809, 63
      %p812 = scmp.lt.s32.totalorder %s20, 0
      %s813 = scalar_select %p812, %s20, 0
      %s814 = sadd.s32 %s813, %s811
      %s815 = smul.addr %s814, 8
      %s816 = scalar_lea.vmem %s3, %s815
      // Predicated region
      $region41: #{_lambda_.122} parent=31 // pred_check
        %p817 = pneg %p135
      $region42: #{_lambda_.122} parent=31 // pred_check_branch
        %819 = sbr.rel (%p817) target = $region44
      $region43: #{_lambda_.122} parent=31 // pred_region
        %s820 = smul.u32 32, %s19
      $region44: #{_lambda_.122} parent=31 // pred_fallthru
        _
    $region32: #{_lambda_.122} parent=5 // pred_fallthru
      _
    %p821 = scmp.le.s32.totalorder 2, %s9
    // Predicated region
    $region45: #{_lambda_.122} parent=5 // pred_check
      %p822 = pneg %p821
    $region46: #{_lambda_.122} parent=5 // pred_check_branch
      %824 = sbr.rel (%p822) target = $region48
    $region47: #{_lambda_.122} parent=5 // pred_region
      %s825 = ssub.s32 %s9, 2
      // Predicated region
      $region49: #{_lambda_.122} parent=47 // pred_check
        %p826 = pneg %p141
      $region50: #{_lambda_.122} parent=47 // pred_check_branch
        %828 = sbr.rel (%p826) target = $region52
      $region51: #{_lambda_.122} parent=47 // pred_region
        %s829 = smul.u32 32, %s22
        %p830 = scmp.lt.s32.totalorder %s829, 63
        %s831 = scalar_select %p830, %s829, 63
        %p832 = scmp.lt.s32.totalorder %s23, 0
        %s833 = scalar_select %p832, %s23, 0
        %s834 = sadd.s32 %s833, %s831
        %s835 = smul.addr %s834, 8
        %s836 = scalar_lea.vmem %s3, %s835
      $region52: #{_lambda_.122} parent=47 // pred_fallthru
        _
    $region48: #{_lambda_.122} parent=5 // pred_fallthru
      _
  $region6: #{_lambda_.122} parent=0 // loop_footer
    %s13 = sadd.s32 1, %s9
  $region7: #{_lambda_.122} parent=0 // loop_footer_branch
    %8 = sbr.rel target = $region3
  $region8: #{_lambda_.122} parent=0 // loop_exit
    _

</llo_original>
